<compile_context>
chip_gen: v6e
topology: v6e:2x2x1
jax: 0.10.0
libtpu: 0.0.40
codegen_flags: <defaults>
</compile_context>

<pallas_src>
import numpy as np
import jax
import jax.numpy as jnp
from jax.experimental import pallas as pl
from jax.experimental.pallas import tpu as pltpu

WIND_SHAPE = (1, 11, 13, 13, 3, 1)
N_WIND = int(np.prod(WIND_SHAPE))                  # 5577 elements per wind tensor
LANES = 128
HIDDEN = 128                                       # hooked layer width -> activation (1, HIDDEN)
SEG = ((N_WIND + LANES - 1) // LANES) * LANES      # 5632: padded per-component segment
N_SEG = 3                                          # scaled speed, cos(dir), sin(dir)
K_WIND = N_SEG * SEG                               # 16896 padded wind-feature K
N_TIME = 5
TIME_ROWS = 8                                      # time-feature weight rows, padded to 8
D_FEAT = N_SEG * N_WIND + N_TIME                   # 16736 (original feature length)
TWO_PI = float(2.0 * np.pi)


# ---------------------------------------------------------------------------
# Fused kernel: per-segment feature build + int8-weight matvec accumulate +
# epilogue (dequant scale, time features, bias, hook activation, selection dot).
# ---------------------------------------------------------------------------
def fused_forward_kernel(scal_ref, ws_ref, dir_ref, w_ref, wscale_ref, wt_ref,
                         b_ref, sel_ref, act_ref, res_ref, acc_ref, feat_ref):
    k = pl.program_id(0)

    # Build this step's feature segment (1, SEG) into a bf16 VMEM scratch row.
    # Math stays f32 (v5e has no bf16 VPU/EUP path); only the store narrows.
    @pl.when(k == 0)
    def _seg_scaled_speed():
        acc_ref[...] = jnp.zeros_like(acc_ref)
        # scaled = (wind_speed - mean) * (1/std); mean & 1/std are SMEM scalars.
        feat_ref[...] = ((ws_ref[...] - scal_ref[0]) * scal_ref[1]).astype(jnp.bfloat16)

    @pl.when(k == 1)
    def _seg_cos_dir():
        feat_ref[...] = jnp.cos(dir_ref[...]).astype(jnp.bfloat16)

    @pl.when(k == 2)
    def _seg_sin_dir():
        feat_ref[...] = jnp.sin(dir_ref[...]).astype(jnp.bfloat16)

    # (1, SEG) @ (SEG, HIDDEN) matvec on the MXU.  Weights arrive as int8
    # (integer values in [-127, 127]); the int8 -> bf16 widen is exact and the
    # per-column dequant scale is applied once in the epilogue.  Padded feature
    # lanes hit exactly-zero quantized weight rows, so their values don't matter.
    acc_ref[...] += jnp.dot(feat_ref[...], w_ref[...].astype(jnp.bfloat16),
                            preferred_element_type=jnp.float32)

    @pl.when(k == pl.num_programs(0) - 1)
    def _finish():
        # Time features computed in-kernel from SMEM scalars (vectorized to (1,128)).
        tod = jnp.full((1, HIDDEN), scal_ref[2], dtype=jnp.float32)
        toy = jnp.full((1, HIDDEN), scal_ref[3], dtype=jnp.float32)
        frac = tod * (1.0 / TWO_PI)
        frac = frac - jnp.floor(frac)                       # tod / (2*pi) % 1.0
        time_act = (frac * wt_ref[0:1, :]
                    + jnp.cos(tod) * wt_ref[1:2, :]
                    + jnp.sin(tod) * wt_ref[2:3, :]
                    + jnp.cos(toy) * wt_ref[3:4, :]
                    + jnp.sin(toy) * wt_ref[4:5, :])
        act = acc_ref[...] * wscale_ref[...] + time_act + b_ref[...]
        act_ref[...] = act                                  # hook's captured activation
        r = jnp.sum(act * sel_ref[...], axis=-1, keepdims=True)    # (1, 1)
        res_ref[...] = jnp.broadcast_to(r, (1, HIDDEN))     # lane-dense scalar output


def _fused_call(scal, ws_row, dir_row, w_wind_q, w_scale, w_time, b, sel):
    return pl.pallas_call(
        fused_forward_kernel,
        out_shape=(jax.ShapeDtypeStruct((1, HIDDEN), jnp.float32),   # activation
                   jax.ShapeDtypeStruct((1, HIDDEN), jnp.float32)),  # result (lane 0)
        grid_spec=pltpu.PrefetchScalarGridSpec(
            num_scalar_prefetch=0,
            grid=(N_SEG,),
            in_specs=[
                pl.BlockSpec(memory_space=pltpu.MemorySpace.SMEM),     # [mean, 1/std, tod, toy]
                pl.BlockSpec((1, SEG), lambda k: (0, 0)),              # wind speed row (resident)
                pl.BlockSpec((1, SEG), lambda k: (0, 0)),              # wind dir row (resident)
                pl.BlockSpec((SEG, HIDDEN), lambda k: (k, 0)),         # int8 wind weights (streamed)
                pl.BlockSpec((1, HIDDEN), lambda k: (0, 0)),           # per-column dequant scale
                pl.BlockSpec((TIME_ROWS, HIDDEN), lambda k: (0, 0)),   # time-feature weights
                pl.BlockSpec((1, HIDDEN), lambda k: (0, 0)),           # bias
                pl.BlockSpec((1, HIDDEN), lambda k: (0, 0)),           # layer selection
            ],
            out_specs=[
                pl.BlockSpec((1, HIDDEN), lambda k: (0, 0)),
                pl.BlockSpec((1, HIDDEN), lambda k: (0, 0)),
            ],
            scratch_shapes=[
                pltpu.VMEM((1, HIDDEN), jnp.float32),    # f32 accumulator
                pltpu.VMEM((1, SEG), jnp.bfloat16),      # per-segment bf16 feature row
            ],
        ),
        compiler_params=pltpu.CompilerParams(
            dimension_semantics=("arbitrary",)),         # K reduction: must stay sequential
    )(scal, ws_row, dir_row, w_wind_q, w_scale, w_time, b, sel)


# ---------------------------------------------------------------------------
# Weight preprocessing (once, at init): original interleaved feature order
# [scaled,cos,sin] per location -> component-major padded segments, then
# symmetric per-output-column int8 quantization (pad rows quantize to exact 0).
# ---------------------------------------------------------------------------
def prepare_model_weights(w_orig):
    # w_orig: (D_FEAT, HIDDEN) f32 in the original feature order (3*s + component).
    w_wind = w_orig[:N_SEG * N_WIND].reshape(N_WIND, N_SEG, HIDDEN)      # [s, c, h]
    w_wind = jnp.transpose(w_wind, (1, 0, 2))                            # [c, s, h]
    w_wind = jnp.pad(w_wind, ((0, 0), (0, SEG - N_WIND), (0, 0)))        # zero-pad tail rows
    w_wind = w_wind.reshape(K_WIND, HIDDEN)                              # (16896, 128) f32

    # Per-output-column symmetric int8 quantization.
    col_absmax = jnp.maximum(jnp.max(jnp.abs(w_wind), axis=0), 1e-12)    # (HIDDEN,)
    w_scale = (col_absmax / 127.0).reshape(1, HIDDEN).astype(jnp.float32)
    w_q = jnp.clip(jnp.round(w_wind / w_scale), -127.0, 127.0).astype(jnp.int8)

    w_time = jnp.pad(w_orig[N_SEG * N_WIND:],
                     ((0, TIME_ROWS - N_TIME), (0, 0))).astype(jnp.float32)  # (8, 128) f32
    return w_q, w_scale, w_time


# ---------------------------------------------------------------------------
# Forward: ActivationMaximization.forward with a tensor layer_selection.
# (int selection == one-hot tensor selection.)
# ---------------------------------------------------------------------------
@jax.jit
def activation_maximization_forward(params, layer_selection):
    ws_row = jnp.pad(params["wind_speed_tensor"].astype(jnp.float32).reshape(1, -1),
                     ((0, 0), (0, SEG - N_WIND)))
    dir_row = jnp.pad(params["wind_dir_tensor"].astype(jnp.float32).reshape(1, -1),
                      ((0, 0), (0, SEG - N_WIND)))

    # TODO(synk): array-valued wind_speed_mean/std would need to be streamed as a
    # tensor input; the module's float-constructor path (used here) makes them a
    # single broadcast constant, so pass mean and 1/std as SMEM scalars.
    mean = params["wind_speed_mean"].reshape(-1)[0]
    inv_std = 1.0 / params["wind_speed_std"].reshape(-1)[0]
    scal = jnp.stack([mean, inv_std,
                      params["time_of_day"][0],
                      params["time_of_year"][0]]).astype(jnp.float32)

    sel = layer_selection.astype(jnp.float32).reshape(1, HIDDEN)
    act, res = _fused_call(scal, ws_row, dir_row,
                           params["model_W_wind_q"], params["model_W_scale"],
                           params["model_W_time"], params["model_b"], sel)
    # res is the selection dot product broadcast across lanes; act is the hook output.
    return res[0, 0], act


# ---------------------------------------------------------------------------
# Init (mirrors the PyTorch __init__) and a pure-JAX f32 reference.
# ---------------------------------------------------------------------------
def init_params(key):
    k1, k2, k3, k4, k5, k6, k7 = jax.random.split(key, 7)

    wind_dir = jax.random.uniform(k1, WIND_SHAPE, jnp.float32, 0.0, TWO_PI)
    # TODO(synk): nn.init.trunc_normal_ approximated by a clipped normal.
    base = jax.random.normal(k2, WIND_SHAPE, jnp.float32)
    means = jnp.array([4.2, 7.1, 7.7], jnp.float32).reshape(1, 1, 1, 1, 3, 1)
    stds = jnp.array([4.2, 5.0, 5.3], jnp.float32).reshape(1, 1, 1, 1, 3, 1)
    wind_speed = jnp.clip(base * stds + means, 0.0, 45.0)

    wind_speed_mean = jnp.full(WIND_SHAPE, 6.0, jnp.float32)   # float-constructed buffers
    wind_speed_std = jnp.full(WIND_SHAPE, 4.0, jnp.float32)

    tod = jax.random.uniform(k3, (1,), jnp.float32, 0.0, TWO_PI)
    toy = jax.random.uniform(k4, (1,), jnp.float32, 0.0, TWO_PI)

    w_orig = jax.random.normal(k5, (D_FEAT, HIDDEN), jnp.float32) * 0.02
    model_b = jax.random.normal(k6, (1, HIDDEN), jnp.float32) * 0.01
    layer_selection = jax.random.normal(k7, (HIDDEN,), jnp.float32)

    w_q, w_scale, w_time = prepare_model_weights(w_orig)

    params = dict(
        wind_dir_tensor=wind_dir,
        wind_speed_tensor=wind_speed,
        wind_speed_mean=wind_speed_mean,
        wind_speed_std=wind_speed_std,
        time_of_day=tod,
        time_of_year=toy,
        model_W_wind_q=w_q,      # (16896, 128) int8, component-major, zero-padded
        model_W_scale=w_scale,   # (1, 128) f32 per-column dequant scale
        model_W_time=w_time,     # (8, 128) f32
        model_b=model_b,         # (1, 128) f32
    )
    return params, layer_selection, w_orig


def _reference(params, layer_selection, w_orig):
    """Pure-JAX f32 reference of the same forward (original feature layout)."""
    scaled = (params["wind_speed_tensor"] - params["wind_speed_mean"]) \
        / params["wind_speed_std"]
    wwd = jnp.concatenate(
        [scaled, jnp.cos(params["wind_dir_tensor"]),
         jnp.sin(params["wind_dir_tensor"])], axis=-1)
    tod = params["time_of_day"][0]
    toy = params["time_of_year"][0]
    tf = jnp.stack([(tod / TWO_PI) % 1.0, jnp.cos(tod), jnp.sin(tod),
                    jnp.cos(toy), jnp.sin(toy)])[None, :]
    feat = jnp.concatenate([wwd.reshape(1, -1), tf], axis=-1)
    act = feat @ w_orig + params["model_b"]
    return jnp.dot(act[0], layer_selection), act


if __name__ == "__main__":
    params, layer_selection, w_orig = init_params(jax.random.PRNGKey(0))

    result, activation = activation_maximization_forward(params, layer_selection)
    jax.block_until_ready(result)

    ref_res, ref_act = _reference(params, layer_selection, w_orig)
    # Tolerances account for int8-quantized weights + bf16 features (f32 accumulation).
    np.testing.assert_allclose(np.asarray(activation), np.asarray(ref_act),
                               rtol=5e-2, atol=0.25)
    np.testing.assert_allclose(np.asarray(result), np.asarray(ref_res),
                               rtol=5e-2, atol=1.0)
    print("KERNEL_OK")
</pallas_src>

<mosaic_0001>
module attributes {stable_mosaic.version = 11 : i64} {
  func.func @fused_forward_kernel(%arg0: i32, %arg1: memref<4xf32, #tpu.memory_space<smem>>, %arg2: memref<1x5632xf32, #tpu.memory_space<vmem>>, %arg3: memref<1x5632xf32, #tpu.memory_space<vmem>>, %arg4: memref<5632x128xi8, #tpu.memory_space<vmem>>, %arg5: memref<1x128xf32, #tpu.memory_space<vmem>>, %arg6: memref<8x128xf32, #tpu.memory_space<vmem>>, %arg7: memref<1x128xf32, #tpu.memory_space<vmem>>, %arg8: memref<1x128xf32, #tpu.memory_space<vmem>>, %arg9: memref<1x128xf32, #tpu.memory_space<vmem>>, %arg10: memref<1x128xf32, #tpu.memory_space<vmem>>, %arg11: memref<1x128xf32, #tpu.memory_space<vmem>>, %arg12: memref<1x5632xbf16, #tpu.memory_space<vmem>>) attributes {dimension_semantics = [#tpu.dimension_semantics<arbitrary>], iteration_bounds = array<i64: 3>, scalar_prefetch = 0 : i64, scratch_operands = 2 : i64, tpu.core_type = #tpu.core_type<tc>, window_params = [{transform_indices = @transform_0, window_bounds = array<i64: 4>}, {pipeline_mode = #tpu.pipeline_mode<synchronous>, transform_indices = @transform_1, window_bounds = array<i64: 1, 5632>}, {pipeline_mode = #tpu.pipeline_mode<synchronous>, transform_indices = @transform_2, window_bounds = array<i64: 1, 5632>}, {transform_indices = @transform_3, window_bounds = array<i64: 5632, 128>}, {pipeline_mode = #tpu.pipeline_mode<synchronous>, transform_indices = @transform_4, window_bounds = array<i64: 1, 128>}, {pipeline_mode = #tpu.pipeline_mode<synchronous>, transform_indices = @transform_5, window_bounds = array<i64: 8, 128>}, {pipeline_mode = #tpu.pipeline_mode<synchronous>, transform_indices = @transform_6, window_bounds = array<i64: 1, 128>}, {pipeline_mode = #tpu.pipeline_mode<synchronous>, transform_indices = @transform_7, window_bounds = array<i64: 1, 128>}, {pipeline_mode = #tpu.pipeline_mode<synchronous>, transform_indices = @transform_8, window_bounds = array<i64: 1, 128>}, {pipeline_mode = #tpu.pipeline_mode<synchronous>, transform_indices = @transform_9, window_bounds = array<i64: 1, 128>}]} {
    %c0_i32 = arith.constant 0 : i32
    %0 = arith.cmpi eq, %arg0, %c0_i32 : i32
    %1 = arith.extui %0 : i1 to i32
    %c0_i32_0 = arith.constant 0 : i32
    %2 = arith.cmpi ne, %1, %c0_i32_0 : i32
    scf.if %2 {
      %cst_12 = arith.constant 0.000000e+00 : f32
      %19 = vector.broadcast %cst_12 : f32 to vector<1x128xf32>
      %c0_13 = arith.constant 0 : index
      %c0_14 = arith.constant 0 : index
      %20 = vector.load %arg11[%c0_13, %c0_14] : memref<1x128xf32, #tpu.memory_space<vmem>>, vector<1x128xf32>
      tpu.vector_store %arg11[%c0_13, %c0_14], %19 {strides = array<i32>} : memref<1x128xf32, #tpu.memory_space<vmem>>, vector<1x128xf32>,
      %c0_15 = arith.constant 0 : index
      %c0_16 = arith.constant 0 : index
      %21 = vector.load %arg2[%c0_15, %c0_16] : memref<1x5632xf32, #tpu.memory_space<vmem>>, vector<1x5632xf32>
      %c0_17 = arith.constant 0 : index
      %22 = memref.load %arg1[%c0_17] : memref<4xf32, #tpu.memory_space<smem>>
      %23 = vector.broadcast %22 : f32 to vector<1x5632xf32>
      %24 = arith.subf %21, %23 : vector<1x5632xf32>
      %c1 = arith.constant 1 : index
      %25 = memref.load %arg1[%c1] : memref<4xf32, #tpu.memory_space<smem>>
      %26 = vector.broadcast %25 : f32 to vector<1x5632xf32>
      %27 = arith.mulf %24, %26 : vector<1x5632xf32>
      %28 = arith.truncf %27 : vector<1x5632xf32> to vector<1x5632xbf16>
      %c0_18 = arith.constant 0 : index
      %c0_19 = arith.constant 0 : index
      %29 = vector.load %arg12[%c0_18, %c0_19] : memref<1x5632xbf16, #tpu.memory_space<vmem>>, vector<1x5632xbf16>
      tpu.vector_store %arg12[%c0_18, %c0_19], %28 {strides = array<i32>} : memref<1x5632xbf16, #tpu.memory_space<vmem>>, vector<1x5632xbf16>,
    } else {
    }
    %c1_i32 = arith.constant 1 : i32
    %3 = arith.cmpi eq, %arg0, %c1_i32 : i32
    %4 = arith.extui %3 : i1 to i32
    %c0_i32_1 = arith.constant 0 : i32
    %5 = arith.cmpi ne, %4, %c0_i32_1 : i32
    scf.if %5 {
      %c0_12 = arith.constant 0 : index
      %c0_13 = arith.constant 0 : index
      %19 = vector.load %arg3[%c0_12, %c0_13] : memref<1x5632xf32, #tpu.memory_space<vmem>>, vector<1x5632xf32>
      %20 = math.cos %19 : vector<1x5632xf32>
      %21 = arith.truncf %20 : vector<1x5632xf32> to vector<1x5632xbf16>
      %c0_14 = arith.constant 0 : index
      %c0_15 = arith.constant 0 : index
      %22 = vector.load %arg12[%c0_14, %c0_15] : memref<1x5632xbf16, #tpu.memory_space<vmem>>, vector<1x5632xbf16>
      tpu.vector_store %arg12[%c0_14, %c0_15], %21 {strides = array<i32>} : memref<1x5632xbf16, #tpu.memory_space<vmem>>, vector<1x5632xbf16>,
    } else {
    }
    %c2_i32 = arith.constant 2 : i32
    %6 = arith.cmpi eq, %arg0, %c2_i32 : i32
    %7 = arith.extui %6 : i1 to i32
    %c0_i32_2 = arith.constant 0 : i32
    %8 = arith.cmpi ne, %7, %c0_i32_2 : i32
    scf.if %8 {
      %c0_12 = arith.constant 0 : index
      %c0_13 = arith.constant 0 : index
      %19 = vector.load %arg3[%c0_12, %c0_13] : memref<1x5632xf32, #tpu.memory_space<vmem>>, vector<1x5632xf32>
      %20 = math.sin %19 : vector<1x5632xf32>
      %21 = arith.truncf %20 : vector<1x5632xf32> to vector<1x5632xbf16>
      %c0_14 = arith.constant 0 : index
      %c0_15 = arith.constant 0 : index
      %22 = vector.load %arg12[%c0_14, %c0_15] : memref<1x5632xbf16, #tpu.memory_space<vmem>>, vector<1x5632xbf16>
      tpu.vector_store %arg12[%c0_14, %c0_15], %21 {strides = array<i32>} : memref<1x5632xbf16, #tpu.memory_space<vmem>>, vector<1x5632xbf16>,
    } else {
    }
    %c0 = arith.constant 0 : index
    %c0_3 = arith.constant 0 : index
    %9 = vector.load %arg11[%c0, %c0_3] : memref<1x128xf32, #tpu.memory_space<vmem>>, vector<1x128xf32>
    %c0_4 = arith.constant 0 : index
    %c0_5 = arith.constant 0 : index
    %10 = vector.load %arg12[%c0_4, %c0_5] : memref<1x5632xbf16, #tpu.memory_space<vmem>>, vector<1x5632xbf16>
    %c0_6 = arith.constant 0 : index
    %c0_7 = arith.constant 0 : index
    %11 = vector.load %arg4[%c0_6, %c0_7] : memref<5632x128xi8, #tpu.memory_space<vmem>>, vector<5632x128xi8>
    %12 = arith.sitofp %11 : vector<5632x128xi8> to vector<5632x128xbf16>
    %cst = arith.constant dense<0.000000e+00> : vector<1x128xf32>
    %13 = tpu.matmul %10, %12, %cst {dimension_numbers = #tpu.dot_dimension_numbers<[1], [0], [0], [1], [0, 0, 1, 1], [], []>} : vector<1x5632xbf16>, vector<5632x128xbf16>, vector<1x128xf32> -> vector<1x128xf32>
    %14 = arith.addf %9, %13 : vector<1x128xf32>
    %c0_8 = arith.constant 0 : index
    %c0_9 = arith.constant 0 : index
    %15 = vector.load %arg11[%c0_8, %c0_9] : memref<1x128xf32, #tpu.memory_space<vmem>>, vector<1x128xf32>
    tpu.vector_store %arg11[%c0_8, %c0_9], %14 {strides = array<i32>} : memref<1x128xf32, #tpu.memory_space<vmem>>, vector<1x128xf32>,
    %c2_i32_10 = arith.constant 2 : i32
    %16 = arith.cmpi eq, %arg0, %c2_i32_10 : i32
    %17 = arith.extui %16 : i1 to i32
    %c0_i32_11 = arith.constant 0 : i32
    %18 = arith.cmpi ne, %17, %c0_i32_11 : i32
    scf.if %18 {
      %c2 = arith.constant 2 : index
      %19 = memref.load %arg1[%c2] : memref<4xf32, #tpu.memory_space<smem>>
      %20 = vector.broadcast %19 : f32 to vector<1x128xf32>
      %c3 = arith.constant 3 : index
      %21 = memref.load %arg1[%c3] : memref<4xf32, #tpu.memory_space<smem>>
      %22 = vector.broadcast %21 : f32 to vector<1x128xf32>
      %cst_12 = arith.constant 0.159154937 : f32
      %23 = vector.broadcast %cst_12 : f32 to vector<1x128xf32>
      %24 = arith.mulf %20, %23 : vector<1x128xf32>
      %25 = math.floor %24 : vector<1x128xf32>
      %26 = arith.subf %24, %25 : vector<1x128xf32>
      %c0_13 = arith.constant 0 : index
      %c0_14 = arith.constant 0 : index
      %27 = vector.load %arg6[%c0_13, %c0_14] : memref<8x128xf32, #tpu.memory_space<vmem>>, vector<1x128xf32>
      %28 = arith.mulf %26, %27 : vector<1x128xf32>
      %29 = math.cos %20 : vector<1x128xf32>
      %c1 = arith.constant 1 : index
      %c0_15 = arith.constant 0 : index
      %30 = vector.load %arg6[%c1, %c0_15] : memref<8x128xf32, #tpu.memory_space<vmem>>, vector<1x128xf32>
      %31 = arith.mulf %29, %30 : vector<1x128xf32>
      %32 = arith.addf %28, %31 : vector<1x128xf32>
      %33 = math.sin %20 : vector<1x128xf32>
      %c2_16 = arith.constant 2 : index
      %c0_17 = arith.constant 0 : index
      %34 = vector.load %arg6[%c2_16, %c0_17] : memref<8x128xf32, #tpu.memory_space<vmem>>, vector<1x128xf32>
      %35 = arith.mulf %33, %34 : vector<1x128xf32>
      %36 = arith.addf %32, %35 : vector<1x128xf32>
      %37 = math.cos %22 : vector<1x128xf32>
      %c3_18 = arith.constant 3 : index
      %c0_19 = arith.constant 0 : index
      %38 = vector.load %arg6[%c3_18, %c0_19] : memref<8x128xf32, #tpu.memory_space<vmem>>, vector<1x128xf32>
      %39 = arith.mulf %37, %38 : vector<1x128xf32>
      %40 = arith.addf %36, %39 : vector<1x128xf32>
      %41 = math.sin %22 : vector<1x128xf32>
      %c4 = arith.constant 4 : index
      %c0_20 = arith.constant 0 : index
      %42 = vector.load %arg6[%c4, %c0_20] : memref<8x128xf32, #tpu.memory_space<vmem>>, vector<1x128xf32>
      %43 = arith.mulf %41, %42 : vector<1x128xf32>
      %44 = arith.addf %40, %43 : vector<1x128xf32>
      %c0_21 = arith.constant 0 : index
      %c0_22 = arith.constant 0 : index
      %45 = vector.load %arg11[%c0_21, %c0_22] : memref<1x128xf32, #tpu.memory_space<vmem>>, vector<1x128xf32>
      %c0_23 = arith.constant 0 : index
      %c0_24 = arith.constant 0 : index
      %46 = vector.load %arg5[%c0_23, %c0_24] : memref<1x128xf32, #tpu.memory_space<vmem>>, vector<1x128xf32>
      %47 = arith.mulf %45, %46 : vector<1x128xf32>
      %48 = arith.addf %47, %44 : vector<1x128xf32>
      %c0_25 = arith.constant 0 : index
      %c0_26 = arith.constant 0 : index
      %49 = vector.load %arg7[%c0_25, %c0_26] : memref<1x128xf32, #tpu.memory_space<vmem>>, vector<1x128xf32>
      %50 = arith.addf %48, %49 : vector<1x128xf32>
      %c0_27 = arith.constant 0 : index
      %c0_28 = arith.constant 0 : index
      %51 = vector.load %arg9[%c0_27, %c0_28] : memref<1x128xf32, #tpu.memory_space<vmem>>, vector<1x128xf32>
      tpu.vector_store %arg9[%c0_27, %c0_28], %50 {strides = array<i32>} : memref<1x128xf32, #tpu.memory_space<vmem>>, vector<1x128xf32>,
      %c0_29 = arith.constant 0 : index
      %c0_30 = arith.constant 0 : index
      %52 = vector.load %arg8[%c0_29, %c0_30] : memref<1x128xf32, #tpu.memory_space<vmem>>, vector<1x128xf32>
      %53 = arith.mulf %50, %52 : vector<1x128xf32>
      %cst_31 = arith.constant dense<0.000000e+00> : vector<1xf32>
      %54 = vector.multi_reduction <add>, %53, %cst_31 [1] : vector<1x128xf32> to vector<1xf32>
      %55 = vector.shape_cast %54 : vector<1xf32> to vector<1x1xf32>
      %56 = vector.shape_cast %55 : vector<1x1xf32> to vector<1x1xf32>
      %57 = vector.broadcast %56 : vector<1x1xf32> to vector<1x128xf32>
      %c0_32 = arith.constant 0 : index
      %c0_33 = arith.constant 0 : index
      %58 = vector.load %arg10[%c0_32, %c0_33] : memref<1x128xf32, #tpu.memory_space<vmem>>, vector<1x128xf32>
      tpu.vector_store %arg10[%c0_32, %c0_33], %57 {strides = array<i32>} : memref<1x128xf32, #tpu.memory_space<vmem>>, vector<1x128xf32>,
    } else {
    }
    return
  }
  func.func @transform_0(%arg0: i32) -> i32 {
    %c0_i32 = arith.constant 0 : i32
    %c0_i32_0 = arith.constant 0 : i32
    return %c0_i32 : i32
  }
  func.func @transform_1(%arg0: i32) -> (i32, i32) {
    %c0_i32 = arith.constant 0 : i32
    %c0_i32_0 = arith.constant 0 : i32
    %c0_i32_1 = arith.constant 0 : i32
    return %c0_i32, %c0_i32_0 : i32, i32
  }
  func.func @transform_2(%arg0: i32) -> (i32, i32) {
    %c0_i32 = arith.constant 0 : i32
    %c0_i32_0 = arith.constant 0 : i32
    %c0_i32_1 = arith.constant 0 : i32
    return %c0_i32, %c0_i32_0 : i32, i32
  }
  func.func @transform_3(%arg0: i32) -> (i32, i32) {
    %c0_i32 = arith.constant 0 : i32
    %c0_i32_0 = arith.constant 0 : i32
    return %arg0, %c0_i32 : i32, i32
  }
  func.func @transform_4(%arg0: i32) -> (i32, i32) {
    %c0_i32 = arith.constant 0 : i32
    %c0_i32_0 = arith.constant 0 : i32
    %c0_i32_1 = arith.constant 0 : i32
    return %c0_i32, %c0_i32_0 : i32, i32
  }
  func.func @transform_5(%arg0: i32) -> (i32, i32) {
    %c0_i32 = arith.constant 0 : i32
    %c0_i32_0 = arith.constant 0 : i32
    %c0_i32_1 = arith.constant 0 : i32
    return %c0_i32, %c0_i32_0 : i32, i32
  }
  func.func @transform_6(%arg0: i32) -> (i32, i32) {
    %c0_i32 = arith.constant 0 : i32
    %c0_i32_0 = arith.constant 0 : i32
    %c0_i32_1 = arith.constant 0 : i32
    return %c0_i32, %c0_i32_0 : i32, i32
  }
  func.func @transform_7(%arg0: i32) -> (i32, i32) {
    %c0_i32 = arith.constant 0 : i32
    %c0_i32_0 = arith.constant 0 : i32
    %c0_i32_1 = arith.constant 0 : i32
    return %c0_i32, %c0_i32_0 : i32, i32
  }
  func.func @transform_8(%arg0: i32) -> (i32, i32) {
    %c0_i32 = arith.constant 0 : i32
    %c0_i32_0 = arith.constant 0 : i32
    %c0_i32_1 = arith.constant 0 : i32
    return %c0_i32, %c0_i32_0 : i32, i32
  }
  func.func @transform_9(%arg0: i32) -> (i32, i32) {
    %c0_i32 = arith.constant 0 : i32
    %c0_i32_0 = arith.constant 0 : i32
    %c0_i32_1 = arith.constant 0 : i32
    return %c0_i32, %c0_i32_0 : i32, i32
  }
}

</mosaic_0001>

<llo_original>
// kernel: activation_maximization_forward.1
$region0: #{activation_maximization_forward.1}
  #allocation0 [shape = 'u32[]', space=smem, size = 0x4, offset = 0x4, fixed_abs, tag = 'smem constant byte address 0x4 - core index']
  #allocation1 [shape = 'u32[144,128]{1,0:T(1,128)}', space=vmem, size = 0x12000, scoped, tag = 'internal scratch']
  #allocation2 [shape = 'f32[1,128]{1,0:T(1,128)}', space=vmem, size = 0x200, scoped, tag = 'scratch operand']
  #allocation3 [shape = 'bf16[1,5632]{1,0:T(2,128)(2,1)}', space=vmem, size = 0x5800, scoped, tag = 'scratch operand']
  %s0 = inlined_call_operand.vmem [shape: f32[4], index: 0, kind: input, shape index: {}]
  %s1 = inlined_call_operand.vmem [shape: f32[1,5632], index: 1, kind: input, shape index: {}]
  %s2 = inlined_call_operand.vmem [shape: f32[1,5632], index: 2, kind: input, shape index: {}]
  %s3 = inlined_call_operand.vmem [shape: s8[16896,128], index: 3, kind: input, shape index: {}]
  %s4 = inlined_call_operand.vmem [shape: f32[1,128], index: 4, kind: input, shape index: {}]
  %s5 = inlined_call_operand.vmem [shape: f32[8,128], index: 5, kind: input, shape index: {}]
  %s6 = inlined_call_operand.vmem [shape: f32[1,128], index: 6, kind: input, shape index: {}]
  %s7 = inlined_call_operand.vmem [shape: f32[1,128], index: 7, kind: input, shape index: {}]
  %s8 = inlined_call_operand.hbm [shape: f32[1,128], index: 8, kind: output, shape index: {0}]
  %s9 = inlined_call_operand.hbm [shape: f32[1,128], index: 9, kind: output, shape index: {1}]
  %10 = xla_tuple %s8, %s9
  %s11 = sld [smem:[#allocation0]]
  $region93: #{activation_maximization_forward.1} parent=0
    _
  %s13 = ssub.s32 1, %s11
  %s14 = scalar_select 0, %s13, %s11
  $region1: #{activation_maximization_forward.1} parent=0
    #allocation4 [shape = 'u8[512]{0}', space=smem, size = 0x200, scoped, tag = 'input window, operand 0, single buffered']
    #allocation5 [shape = 's32[2]{0}', space=sflag, size = 0x8, scoped, tag = 'scoped memory for activation_maximization_forward.1']
    #allocation6 [shape = 's32[2]{0}', space=sflag, size = 0x8, scoped, tag = 'scoped memory for activation_maximization_forward.1']
    #allocation7 [shape = 'u8[512]{0}', space=vmem, size = 0x400, scoped, tag = 'output window, operand 0, single buffered']
    #allocation8 [shape = 'u8[512]{0}', space=vmem, size = 0x400, scoped, tag = 'output window, operand 1, single buffered']
    #allocation9 [shape = 's32[1]{0}', space=sflag, size = 0x4, scoped, tag = 'scoped memory for activation_maximization_forward.1']
    %15 = vsyncpa [#allocation6], 0
    %16 = vsyncpa [#allocation5], 0
    %17 = vsyncpa [#allocation9], 0
    loop: start=0, step=1, limit=5
    $region2: #{activation_maximization_forward.1} parent=1 // loop_pre_header
      _
    $region3: #{activation_maximization_forward.1} parent=1 // loop_header
      %s19 = sphi 0, %s23
      %p20 = scmp.ge.s32.totalorder %s19, 5
      %s27 = sphi 0, %s27
      %s29 = sphi 0, %s27
      %s30 = sphi 0, %s29
      %s44 = sphi 0, %s30
      %s48 = sphi 0, %s48
      %s50 = sphi 0, %s48
      %s51 = sphi 0, %s50
      %s65 = sphi 0, %s51
      %s69 = sphi 0, %s69
      %s71 = sphi 0, %s69
      %s72 = sphi 0, %s71
      %s86 = sphi 0, %s72
      %s92 = sphi 0, %s94
      %s95 = sphi 0, %s92
      %s96 = sphi 0, %s95
      %s112 = sphi 0, %s96
      %s116 = sphi 0, %s116
      %s118 = sphi 0, %s116
      %s119 = sphi 0, %s118
      %s133 = sphi 0, %s119
      %s137 = sphi 0, %s137
      %s139 = sphi 0, %s137
      %s140 = sphi 0, %s139
      %s154 = sphi 0, %s140
      %s158 = sphi 0, %s158
      %s160 = sphi 0, %s158
      %s161 = sphi 0, %s160
      %s175 = sphi 0, %s161
      %s179 = sphi 0, %s179
      %s181 = sphi 0, %s179
      %s182 = sphi 0, %s181
      %s196 = sphi 0, %s182
      %s200 = sphi 0, %s200
      %s202 = sphi 0, %s200
      %s203 = sphi 0, %s202
      %s217 = sphi 0, %s203
      %s221 = sphi 0, %s221
      %s223 = sphi 0, %s221
      %s224 = sphi 0, %s223
      %s238 = sphi 0, %s224
    $region4: #{activation_maximization_forward.1} parent=1 // loop_header_branch
      %22 = sbr.rel (%p20) target = $region8
    $region5: #{activation_maximization_forward.1} parent=1 // loop_body
      %s24 = ssub.s32 %s19, 1
      %s25 = ssub.s32 %s19, 2
      %s26 = sadd.s32 %s19, 1
      %s28 = sadd.s32 %s27, 1
      %p31 = scmp.eq.s32.totalorder %s19, 2
      %p32 = scmp.ne.s32.totalorder %s27, %s29
      %p33 = scmp.eq.s32.totalorder %s19, 0
      %p34 = por %p32, %p33
      %p35 = scmp.ne.s32.totalorder %s27, %s29
      %p36 = scmp.eq.s32.totalorder %s24, 2
      %p37 = por %p35, %p36
      %p38 = scmp.ne.s32.totalorder %s29, %s30
      %p39 = scmp.eq.s32.totalorder %s24, 0
      %p40 = por %p38, %p39
      %p41 = scmp.ne.s32.totalorder %s29, %s30
      %p42 = scmp.eq.s32.totalorder %s25, 2
      %p43 = por %p41, %p42
      %p45 = scmp.ne.s32.totalorder %s30, %s44
      %p46 = scmp.eq.s32.totalorder %s25, 0
      %p47 = por %p45, %p46
      %s49 = sadd.s32 %s48, 1
      %p52 = scmp.eq.s32.totalorder %s19, 2
      %p53 = scmp.ne.s32.totalorder %s48, %s50
      %p54 = scmp.eq.s32.totalorder %s19, 0
      %p55 = por %p53, %p54
      %p56 = scmp.ne.s32.totalorder %s48, %s50
      %p57 = scmp.eq.s32.totalorder %s24, 2
      %p58 = por %p56, %p57
      %p59 = scmp.ne.s32.totalorder %s50, %s51
      %p60 = scmp.eq.s32.totalorder %s24, 0
      %p61 = por %p59, %p60
      %p62 = scmp.ne.s32.totalorder %s50, %s51
      %p63 = scmp.eq.s32.totalorder %s25, 2
      %p64 = por %p62, %p63
      %p66 = scmp.ne.s32.totalorder %s51, %s65
      %p67 = scmp.eq.s32.totalorder %s25, 0
      %p68 = por %p66, %p67
      %s70 = sadd.s32 %s69, 1
      %p73 = scmp.eq.s32.totalorder %s19, 2
      %p74 = scmp.ne.s32.totalorder %s69, %s71
      %p75 = scmp.eq.s32.totalorder %s19, 0
      %p76 = por %p74, %p75
      %p77 = scmp.ne.s32.totalorder %s69, %s71
      %p78 = scmp.eq.s32.totalorder %s24, 2
      %p79 = por %p77, %p78
      %p80 = scmp.ne.s32.totalorder %s71, %s72
      %p81 = scmp.eq.s32.totalorder %s24, 0
      %p82 = por %p80, %p81
      %p83 = scmp.ne.s32.totalorder %s71, %s72
      %p84 = scmp.eq.s32.totalorder %s25, 2
      %p85 = por %p83, %p84
      %p87 = scmp.ne.s32.totalorder %s72, %s86
      %p88 = scmp.eq.s32.totalorder %s25, 0
      %p89 = por %p87, %p88
      %s90 = ssub.s32 %s19, %s26
      %p91 = scmp.eq.s32.totalorder %s90, 0
      %s93 = sadd.s32 %s92, 1
      %s94 = scalar_select %p91, %s92, %s93
      %p97 = pneg %p91
      %p98 = scmp.eq.s32.totalorder %s19, 2
      %p99 = por %p97, %p98
      %p100 = scmp.ne.s32.totalorder %s92, %s95
      %p101 = scmp.eq.s32.totalorder %s19, 0
      %p102 = por %p100, %p101
      %p103 = scmp.ne.s32.totalorder %s92, %s95
      %p104 = scmp.eq.s32.totalorder %s24, 2
      %p105 = por %p103, %p104
      %p106 = scmp.ne.s32.totalorder %s95, %s96
      %p107 = scmp.eq.s32.totalorder %s24, 0
      %p108 = por %p106, %p107
      %p109 = scmp.ne.s32.totalorder %s95, %s96
      %p110 = scmp.eq.s32.totalorder %s25, 2
      %p111 = por %p109, %p110
      %p113 = scmp.ne.s32.totalorder %s96, %s112
      %p114 = scmp.eq.s32.totalorder %s25, 0
      %p115 = por %p113, %p114
      %s117 = sadd.s32 %s116, 1
      %p120 = scmp.eq.s32.totalorder %s19, 2
      %p121 = scmp.ne.s32.totalorder %s116, %s118
      %p122 = scmp.eq.s32.totalorder %s19, 0
      %p123 = por %p121, %p122
      %p124 = scmp.ne.s32.totalorder %s116, %s118
      %p125 = scmp.eq.s32.totalorder %s24, 2
      %p126 = por %p124, %p125
      %p127 = scmp.ne.s32.totalorder %s118, %s119
      %p128 = scmp.eq.s32.totalorder %s24, 0
      %p129 = por %p127, %p128
      %p130 = scmp.ne.s32.totalorder %s118, %s119
      %p131 = scmp.eq.s32.totalorder %s25, 2
      %p132 = por %p130, %p131
      %p134 = scmp.ne.s32.totalorder %s119, %s133
      %p135 = scmp.eq.s32.totalorder %s25, 0
      %p136 = por %p134, %p135
      %s138 = sadd.s32 %s137, 1
      %p141 = scmp.eq.s32.totalorder %s19, 2
      %p142 = scmp.ne.s32.totalorder %s137, %s139
      %p143 = scmp.eq.s32.totalorder %s19, 0
      %p144 = por %p142, %p143
      %p145 = scmp.ne.s32.totalorder %s137, %s139
      %p146 = scmp.eq.s32.totalorder %s24, 2
      %p147 = por %p145, %p146
      %p148 = scmp.ne.s32.totalorder %s139, %s140
      %p149 = scmp.eq.s32.totalorder %s24, 0
      %p150 = por %p148, %p149
      %p151 = scmp.ne.s32.totalorder %s139, %s140
      %p152 = scmp.eq.s32.totalorder %s25, 2
      %p153 = por %p151, %p152
      %p155 = scmp.ne.s32.totalorder %s140, %s154
      %p156 = scmp.eq.s32.totalorder %s25, 0
      %p157 = por %p155, %p156
      %s159 = sadd.s32 %s158, 1
      %p162 = scmp.eq.s32.totalorder %s19, 2
      %p163 = scmp.ne.s32.totalorder %s158, %s160
      %p164 = scmp.eq.s32.totalorder %s19, 0
      %p165 = por %p163, %p164
      %p166 = scmp.ne.s32.totalorder %s158, %s160
      %p167 = scmp.eq.s32.totalorder %s24, 2
      %p168 = por %p166, %p167
      %p169 = scmp.ne.s32.totalorder %s160, %s161
      %p170 = scmp.eq.s32.totalorder %s24, 0
      %p171 = por %p169, %p170
      %p172 = scmp.ne.s32.totalorder %s160, %s161
      %p173 = scmp.eq.s32.totalorder %s25, 2
      %p174 = por %p172, %p173
      %p176 = scmp.ne.s32.totalorder %s161, %s175
      %p177 = scmp.eq.s32.totalorder %s25, 0
      %p178 = por %p176, %p177
      %s180 = sadd.s32 %s179, 1
      %p183 = scmp.eq.s32.totalorder %s19, 2
      %p184 = scmp.ne.s32.totalorder %s179, %s181
      %p185 = scmp.eq.s32.totalorder %s19, 0
      %p186 = por %p184, %p185
      %p187 = scmp.ne.s32.totalorder %s179, %s181
      %p188 = scmp.eq.s32.totalorder %s24, 2
      %p189 = por %p187, %p188
      %p190 = scmp.ne.s32.totalorder %s181, %s182
      %p191 = scmp.eq.s32.totalorder %s24, 0
      %p192 = por %p190, %p191
      %p193 = scmp.ne.s32.totalorder %s181, %s182
      %p194 = scmp.eq.s32.totalorder %s25, 2
      %p195 = por %p193, %p194
      %p197 = scmp.ne.s32.totalorder %s182, %s196
      %p198 = scmp.eq.s32.totalorder %s25, 0
      %p199 = por %p197, %p198
      %s201 = sadd.s32 %s200, 1
      %p204 = scmp.eq.s32.totalorder %s19, 2
      %p205 = scmp.ne.s32.totalorder %s200, %s202
      %p206 = scmp.eq.s32.totalorder %s19, 0
      %p207 = por %p205, %p206
      %p208 = scmp.ne.s32.totalorder %s200, %s202
      %p209 = scmp.eq.s32.totalorder %s24, 2
      %p210 = por %p208, %p209
      %p211 = scmp.ne.s32.totalorder %s202, %s203
      %p212 = scmp.eq.s32.totalorder %s24, 0
      %p213 = por %p211, %p212
      %p214 = scmp.ne.s32.totalorder %s202, %s203
      %p215 = scmp.eq.s32.totalorder %s25, 2
      %p216 = por %p214, %p215
      %p218 = scmp.ne.s32.totalorder %s203, %s217
      %p219 = scmp.eq.s32.totalorder %s25, 0
      %p220 = por %p218, %p219
      %s222 = sadd.s32 %s221, 1
      %p225 = scmp.eq.s32.totalorder %s19, 2
      %p226 = scmp.ne.s32.totalorder %s221, %s223
      %p227 = scmp.eq.s32.totalorder %s19, 0
      %p228 = por %p226, %p227
      %p229 = scmp.ne.s32.totalorder %s221, %s223
      %p230 = scmp.eq.s32.totalorder %s24, 2
      %p231 = por %p229, %p230
      %p232 = scmp.ne.s32.totalorder %s223, %s224
      %p233 = scmp.eq.s32.totalorder %s24, 0
      %p234 = por %p232, %p233
      %p235 = scmp.ne.s32.totalorder %s223, %s224
      %p236 = scmp.eq.s32.totalorder %s25, 2
      %p237 = por %p235, %p236
      %p239 = scmp.ne.s32.totalorder %s224, %s238
      %p240 = scmp.eq.s32.totalorder %s25, 0
      %p241 = por %p239, %p240
      %p242 = scmp.le.s32.totalorder 1, %s19
      %p243 = scmp.lt.s32.totalorder %s19, 4
      %p244 = pnand %p242, %p243
      %p245 = pneg %p244
      // Predicated region
      $region9: #{activation_maximization_forward.1} parent=5 // pred_check
        _
      $region10: #{activation_maximization_forward.1} parent=5 // pred_check_branch
        %247 = sbr.rel (%p244) target = $region12
      $region11: #{activation_maximization_forward.1} parent=5 // pred_region
        %s248 = ssub.s32 %s19, 1
        // Predicated region
        $region13: #{activation_maximization_forward.1} parent=11 // pred_check
          %p249 = pneg %p40
        $region14: #{activation_maximization_forward.1} parent=11 // pred_check_branch
          %251 = sbr.rel (%p249) target = $region16
        $region15: #{activation_maximization_forward.1} parent=11 // pred_region
          %s253 = ssub.s32 16, 16
          %254 = vsyncadd [#allocation6], %s253
          %s256 = sshll.u32 %s0, 4
          %s257 = int_to_ptr.vmem [resolvable:$true] %s256
          %259 = dma.vmem_to_smem %s257, 16, [#allocation4], [#allocation6]
        $region16: #{activation_maximization_forward.1} parent=11 // pred_fallthru
          _
        // Predicated region
        $region17: #{activation_maximization_forward.1} parent=11 // pred_check
          %p260 = pneg %p61
        $region18: #{activation_maximization_forward.1} parent=11 // pred_check_branch
          %262 = sbr.rel (%p260) target = $region20
        $region19: #{activation_maximization_forward.1} parent=11 // pred_region
          _
        $region20: #{activation_maximization_forward.1} parent=11 // pred_fallthru
          _
        // Predicated region
        $region21: #{activation_maximization_forward.1} parent=11 // pred_check
          %p263 = pneg %p82
        $region22: #{activation_maximization_forward.1} parent=11 // pred_check_branch
          %265 = sbr.rel (%p263) target = $region24
        $region23: #{activation_maximization_forward.1} parent=11 // pred_region
          _
        $region24: #{activation_maximization_forward.1} parent=11 // pred_fallthru
          _
        // Predicated region
        $region25: #{activation_maximization_forward.1} parent=11 // pred_check
          %p266 = pneg %p129
        $region26: #{activation_maximization_forward.1} parent=11 // pred_check_branch
          %268 = sbr.rel (%p266) target = $region28
        $region27: #{activation_maximization_forward.1} parent=11 // pred_region
          _
        $region28: #{activation_maximization_forward.1} parent=11 // pred_fallthru
          _
        // Predicated region
        $region29: #{activation_maximization_forward.1} parent=11 // pred_check
          %p269 = pneg %p150
        $region30: #{activation_maximization_forward.1} parent=11 // pred_check_branch
          %271 = sbr.rel (%p269) target = $region32
        $region31: #{activation_maximization_forward.1} parent=11 // pred_region
          _
        $region32: #{activation_maximization_forward.1} parent=11 // pred_fallthru
          _
        // Predicated region
        $region33: #{activation_maximization_forward.1} parent=11 // pred_check
          %p272 = pneg %p171
        $region34: #{activation_maximization_forward.1} parent=11 // pred_check_branch
          %274 = sbr.rel (%p272) target = $region36
        $region35: #{activation_maximization_forward.1} parent=11 // pred_region
          _
        $region36: #{activation_maximization_forward.1} parent=11 // pred_fallthru
          _
        // Predicated region
        $region37: #{activation_maximization_forward.1} parent=11 // pred_check
          %p275 = pneg %p192
        $region38: #{activation_maximization_forward.1} parent=11 // pred_check_branch
          %277 = sbr.rel (%p275) target = $region40
        $region39: #{activation_maximization_forward.1} parent=11 // pred_region
          _
        $region40: #{activation_maximization_forward.1} parent=11 // pred_fallthru
          _
      $region12: #{activation_maximization_forward.1} parent=5 // pred_fallthru
        _
      %p278 = scmp.lt.s32.totalorder %s19, 3
      // Predicated region
      $region41: #{activation_maximization_forward.1} parent=5 // pred_check
        %p279 = pneg %p278
      $region42: #{activation_maximization_forward.1} parent=5 // pred_check_branch
        %281 = sbr.rel (%p279) target = $region44
      $region43: #{activation_maximization_forward.1} parent=5 // pred_region
        // Predicated region
        $region45: #{activation_maximization_forward.1} parent=43 // pred_check
          %p282 = pneg %p102
        $region46: #{activation_maximization_forward.1} parent=43 // pred_check_branch
          %284 = sbr.rel (%p282) target = $region48
        $region47: #{activation_maximization_forward.1} parent=43 // pred_region
          %s285 = smul.u32 176, %s19
          %p286 = scmp.lt.s32.totalorder %s285, 527
          %s287 = scalar_select %p286, %s285, 527
          %s288 = smul.addr %s287, 8
          %s289 = scalar_lea.vmem %s3, %s288
          %s290 = smul.u32 176, %s19
        $region48: #{activation_maximization_forward.1} parent=43 // pred_fallthru
          _
      $region44: #{activation_maximization_forward.1} parent=5 // pred_fallthru
        _
      %p291 = scmp.le.s32.totalorder 1, %s19
      %p292 = scmp.lt.s32.totalorder %s19, 4
      %p293 = pnand %p291, %p292
      %p294 = pneg %p293
      // Predicated region
      $region49: #{activation_maximization_forward.1} parent=5 // pred_check
        _
      $region50: #{activation_maximization_forward.1} parent=5 // pred_check_branch
        %296 = sbr.rel (%p293) target = $region52
      $region51: #{activation_maximization_forward.1} parent=5 // pred_region
        %s297 = ssub.s32 %s19, 1
        // Predicated region
        $region53: #{activation_maximization_forward.1} parent=51 // pred_check
          %p298 = pneg %p40
        $region54: #{activation_maximization_forward.1} parent=51 // pred_check_branch
          %300 = sbr.rel (%p298) target = $region56
        $region55: #{activation_maximization_forward.1} parent=51 // pred_region
          %301 = dma.done [#allocation6], 16
        $region56: #{activation_maximization_forward.1} parent=51 // pred_fallthru
          _
        %302 = sfence
        %p303 = pneg %p40
        %p304 = pneg %p37
        %p305 = pneg %p61
        %p306 = pneg %p58
        %p307 = pneg %p82
        %p308 = pneg %p79
        %s309 = smul.u32 176, %s24
        %p310 = scmp.lt.s32.totalorder %s309, 527
        %s311 = scalar_select %p310, %s309, 527
        %s312 = smul.addr %s311, 8
        %s313 = scalar_lea.vmem %s3, %s312
        %p314 = pneg %p108
        %p315 = pneg %p105
        %p316 = pneg %p129
        %p317 = pneg %p126
        %p318 = pneg %p150
        %p319 = pneg %p147
        %p320 = pneg %p171
        %p321 = pneg %p168
        %p322 = pneg %p192
        %p323 = pneg %p189
        %p324 = pneg %p213
        %p325 = pneg %p210
        %p326 = pneg %p234
        %p327 = pneg %p231
        %s328 = smul.u32 176, %s24
        %p329 = scmp.lt.s32.totalorder %s328, 527
        %s330 = scalar_select %p329, %s328, 527
        %s331 = smul.addr %s330, 8
        %s332 = scalar_lea.vmem %s3, %s331
        %s333 = smul.u32 176, %s24
        %p335 = scmp.eq.s32.totalorder %s24, 0
        // Predicated region
        $region57: #{activation_maximization_forward.1} parent=51 // pred_check
          %p336 = pneg %p335
        $region58: #{activation_maximization_forward.1} parent=51 // pred_check_branch
          %338 = sbr.rel (%p336) target = $region60
        $region59: #{activation_maximization_forward.1} parent=51 // pred_region
          %339 = vst [vmem:[#allocation2] sm:$0x1] 0.0
          %v340 = vld [vmem:[%s1] sm:$0xff]
          %v341 = vld [vmem:[%s1 + $0x8] sm:$0xff]
          %v342 = vld [vmem:[%s1 + $0x10] sm:$0xff]
          %v343 = vld [vmem:[%s1 + $0x18] sm:$0xff]
          %v344 = vld [vmem:[%s1 + $0x20] sm:$0xff]
          %v345 = vld [vmem:[%s1 + $0x28] sm:$0xf]
          %s346 = sld [smem:[#allocation4]]
          %v347 = vstv %s346
          %v348 = vsub.f32 %v340, %v347
          %v349 = vsub.f32 %v341, %v347
          %v350 = vsub.f32 %v342, %v347
          %v351 = vsub.f32 %v343, %v347
          %v352 = vsub.f32 %v344, %v347
          %v353 = vsub.f32 %v345, %v347
          %s354 = sld [smem:[#allocation4 + $0x1]]
          %v355 = vstv %s354
          %v356 = vmul.f32 %v348, %v355
          %v357 = vmul.f32 %v349, %v355
          %v358 = vmul.f32 %v350, %v355
          %v359 = vmul.f32 %v351, %v355
          %v360 = vmul.f32 %v352, %v355
          %v361 = vmul.f32 %v353, %v355
          %v368 = vlaneseq
          %v369 = vshrl.u32 %v368, 7
          %v370 = vsub.s32 0, %v369
          %v371 = vrot.slane %v356, %v370
          %v372 = vlaneseq
          %v373 = vshrl.u32 %v372, 7
          %v374 = vsub.s32 1, %v373
          %v375 = vrot.slane %v356, %v374
          %v376 = vlaneseq
          %v377 = vshrl.u32 %v376, 7
          %v378 = vsub.s32 2, %v377
          %v379 = vrot.slane %v356, %v378
          %v380 = vlaneseq
          %v381 = vshrl.u32 %v380, 7
          %v382 = vsub.s32 3, %v381
          %v383 = vrot.slane %v356, %v382
          %v384 = vlaneseq
          %v385 = vshrl.u32 %v384, 7
          %v386 = vsub.s32 4, %v385
          %v387 = vrot.slane %v356, %v386
          %v388 = vlaneseq
          %v389 = vshrl.u32 %v388, 7
          %v390 = vsub.s32 5, %v389
          %v391 = vrot.slane %v356, %v390
          %v392 = vlaneseq
          %v393 = vshrl.u32 %v392, 7
          %v394 = vsub.s32 6, %v393
          %v395 = vrot.slane %v356, %v394
          %v396 = vlaneseq
          %v397 = vshrl.u32 %v396, 7
          %v398 = vsub.s32 7, %v397
          %v399 = vrot.slane %v356, %v398
          %v400 = vlaneseq
          %v401 = vshrl.u32 %v400, 7
          %v402 = vsub.s32 0, %v401
          %v403 = vrot.slane %v357, %v402
          %v404 = vlaneseq
          %v405 = vshrl.u32 %v404, 7
          %v406 = vsub.s32 1, %v405
          %v407 = vrot.slane %v357, %v406
          %v408 = vlaneseq
          %v409 = vshrl.u32 %v408, 7
          %v410 = vsub.s32 2, %v409
          %v411 = vrot.slane %v357, %v410
          %v412 = vlaneseq
          %v413 = vshrl.u32 %v412, 7
          %v414 = vsub.s32 3, %v413
          %v415 = vrot.slane %v357, %v414
          %v416 = vlaneseq
          %v417 = vshrl.u32 %v416, 7
          %v418 = vsub.s32 4, %v417
          %v419 = vrot.slane %v357, %v418
          %v420 = vlaneseq
          %v421 = vshrl.u32 %v420, 7
          %v422 = vsub.s32 5, %v421
          %v423 = vrot.slane %v357, %v422
          %v424 = vlaneseq
          %v425 = vshrl.u32 %v424, 7
          %v426 = vsub.s32 6, %v425
          %v427 = vrot.slane %v357, %v426
          %v428 = vlaneseq
          %v429 = vshrl.u32 %v428, 7
          %v430 = vsub.s32 7, %v429
          %v431 = vrot.slane %v357, %v430
          %v432 = vlaneseq
          %v433 = vshrl.u32 %v432, 7
          %v434 = vsub.s32 0, %v433
          %v435 = vrot.slane %v358, %v434
          %v436 = vlaneseq
          %v437 = vshrl.u32 %v436, 7
          %v438 = vsub.s32 1, %v437
          %v439 = vrot.slane %v358, %v438
          %v440 = vlaneseq
          %v441 = vshrl.u32 %v440, 7
          %v442 = vsub.s32 2, %v441
          %v443 = vrot.slane %v358, %v442
          %v444 = vlaneseq
          %v445 = vshrl.u32 %v444, 7
          %v446 = vsub.s32 3, %v445
          %v447 = vrot.slane %v358, %v446
          %v448 = vlaneseq
          %v449 = vshrl.u32 %v448, 7
          %v450 = vsub.s32 4, %v449
          %v451 = vrot.slane %v358, %v450
          %v452 = vlaneseq
          %v453 = vshrl.u32 %v452, 7
          %v454 = vsub.s32 5, %v453
          %v455 = vrot.slane %v358, %v454
          %v456 = vlaneseq
          %v457 = vshrl.u32 %v456, 7
          %v458 = vsub.s32 6, %v457
          %v459 = vrot.slane %v358, %v458
          %v460 = vlaneseq
          %v461 = vshrl.u32 %v460, 7
          %v462 = vsub.s32 7, %v461
          %v463 = vrot.slane %v358, %v462
          %v464 = vlaneseq
          %v465 = vshrl.u32 %v464, 7
          %v466 = vsub.s32 0, %v465
          %v467 = vrot.slane %v359, %v466
          %v468 = vlaneseq
          %v469 = vshrl.u32 %v468, 7
          %v470 = vsub.s32 1, %v469
          %v471 = vrot.slane %v359, %v470
          %v472 = vlaneseq
          %v473 = vshrl.u32 %v472, 7
          %v474 = vsub.s32 2, %v473
          %v475 = vrot.slane %v359, %v474
          %v476 = vlaneseq
          %v477 = vshrl.u32 %v476, 7
          %v478 = vsub.s32 3, %v477
          %v479 = vrot.slane %v359, %v478
          %v480 = vlaneseq
          %v481 = vshrl.u32 %v480, 7
          %v482 = vsub.s32 4, %v481
          %v483 = vrot.slane %v359, %v482
          %v484 = vlaneseq
          %v485 = vshrl.u32 %v484, 7
          %v486 = vsub.s32 5, %v485
          %v487 = vrot.slane %v359, %v486
          %v488 = vlaneseq
          %v489 = vshrl.u32 %v488, 7
          %v490 = vsub.s32 6, %v489
          %v491 = vrot.slane %v359, %v490
          %v492 = vlaneseq
          %v493 = vshrl.u32 %v492, 7
          %v494 = vsub.s32 7, %v493
          %v495 = vrot.slane %v359, %v494
          %v496 = vlaneseq
          %v497 = vshrl.u32 %v496, 7
          %v498 = vsub.s32 0, %v497
          %v499 = vrot.slane %v360, %v498
          %v500 = vlaneseq
          %v501 = vshrl.u32 %v500, 7
          %v502 = vsub.s32 1, %v501
          %v503 = vrot.slane %v360, %v502
          %v504 = vlaneseq
          %v505 = vshrl.u32 %v504, 7
          %v506 = vsub.s32 2, %v505
          %v507 = vrot.slane %v360, %v506
          %v508 = vlaneseq
          %v509 = vshrl.u32 %v508, 7
          %v510 = vsub.s32 3, %v509
          %v511 = vrot.slane %v360, %v510
          %v512 = vlaneseq
          %v513 = vshrl.u32 %v512, 7
          %v514 = vsub.s32 4, %v513
          %v515 = vrot.slane %v360, %v514
          %v516 = vlaneseq
          %v517 = vshrl.u32 %v516, 7
          %v518 = vsub.s32 5, %v517
          %v519 = vrot.slane %v360, %v518
          %v520 = vlaneseq
          %v521 = vshrl.u32 %v520, 7
          %v522 = vsub.s32 6, %v521
          %v523 = vrot.slane %v360, %v522
          %v524 = vlaneseq
          %v525 = vshrl.u32 %v524, 7
          %v526 = vsub.s32 7, %v525
          %v527 = vrot.slane %v360, %v526
          %v528 = vlaneseq
          %v529 = vshrl.u32 %v528, 7
          %v530 = vsub.s32 0, %v529
          %v531 = vrot.slane %v361, %v530
          %v532 = vlaneseq
          %v533 = vshrl.u32 %v532, 7
          %v534 = vsub.s32 1, %v533
          %v535 = vrot.slane %v361, %v534
          %v536 = vlaneseq
          %v537 = vshrl.u32 %v536, 7
          %v538 = vsub.s32 2, %v537
          %v539 = vrot.slane %v361, %v538
          %v540 = vlaneseq
          %v541 = vshrl.u32 %v540, 7
          %v542 = vsub.s32 3, %v541
          %v543 = vrot.slane %v361, %v542
          %v588 = vpack.c.bf16 %v371, %v371
          %v589 = vpack.c.bf16 %v375, %v375
          %v590 = vpack.c.bf16 %v379, %v379
          %v591 = vpack.c.bf16 %v383, %v383
          %v592 = vpack.c.bf16 %v387, %v387
          %v593 = vpack.c.bf16 %v391, %v391
          %v594 = vpack.c.bf16 %v395, %v395
          %v595 = vpack.c.bf16 %v399, %v399
          %v596 = vpack.c.bf16 %v403, %v403
          %v597 = vpack.c.bf16 %v407, %v407
          %v598 = vpack.c.bf16 %v411, %v411
          %v599 = vpack.c.bf16 %v415, %v415
          %v600 = vpack.c.bf16 %v419, %v419
          %v601 = vpack.c.bf16 %v423, %v423
          %v602 = vpack.c.bf16 %v427, %v427
          %v603 = vpack.c.bf16 %v431, %v431
          %v604 = vpack.c.bf16 %v435, %v435
          %v605 = vpack.c.bf16 %v439, %v439
          %v606 = vpack.c.bf16 %v443, %v443
          %v607 = vpack.c.bf16 %v447, %v447
          %v608 = vpack.c.bf16 %v451, %v451
          %v609 = vpack.c.bf16 %v455, %v455
          %v610 = vpack.c.bf16 %v459, %v459
          %v611 = vpack.c.bf16 %v463, %v463
          %v612 = vpack.c.bf16 %v467, %v467
          %v613 = vpack.c.bf16 %v471, %v471
          %v614 = vpack.c.bf16 %v475, %v475
          %v615 = vpack.c.bf16 %v479, %v479
          %v616 = vpack.c.bf16 %v483, %v483
          %v617 = vpack.c.bf16 %v487, %v487
          %v618 = vpack.c.bf16 %v491, %v491
          %v619 = vpack.c.bf16 %v495, %v495
          %v620 = vpack.c.bf16 %v499, %v499
          %v621 = vpack.c.bf16 %v503, %v503
          %v622 = vpack.c.bf16 %v507, %v507
          %v623 = vpack.c.bf16 %v511, %v511
          %v624 = vpack.c.bf16 %v515, %v515
          %v625 = vpack.c.bf16 %v519, %v519
          %v626 = vpack.c.bf16 %v523, %v523
          %v627 = vpack.c.bf16 %v527, %v527
          %v628 = vpack.c.bf16 %v531, %v531
          %v629 = vpack.c.bf16 %v535, %v535
          %v630 = vpack.c.bf16 %v539, %v539
          %v631 = vpack.c.bf16 %v543, %v543
          %v676 = vcombine.low %v588, %v589
          %v677 = vcombine.low %v590, %v591
          %v678 = vcombine.low %v592, %v593
          %v679 = vcombine.low %v594, %v595
          %v681 = vunpack.c.l.s4 1966171168
          %v682 = vunpack.c.0.s8 %v681
          %v683 = vlaneseq
          %v684 = vshrl.u32 %v683, 7
          %v685 = vsub.s32 %v682, %v684
          %v686 = vrot.slane %v676, %v685
          %v688 = vunpack.c.l.s4 1966171168
          %v689 = vunpack.c.0.s8 %v688
          %v690 = vlaneseq
          %v691 = vshrl.u32 %v690, 7
          %v692 = vsub.s32 %v689, %v691
          %v693 = vrot.slane %v677, %v692
          %v695 = vunpack.c.l.s4 1966171168
          %v696 = vunpack.c.0.s8 %v695
          %v697 = vlaneseq
          %v698 = vshrl.u32 %v697, 7
          %v699 = vsub.s32 %v696, %v698
          %v700 = vrot.slane %v678, %v699
          %v702 = vunpack.c.l.s4 1966171168
          %v703 = vunpack.c.0.s8 %v702
          %v704 = vlaneseq
          %v705 = vshrl.u32 %v704, 7
          %v706 = vsub.s32 %v703, %v705
          %v707 = vrot.slane %v679, %v706
          %v708 = vcombine.low %v686, %v693
          %v709 = vcombine.low %v700, %v707
          %v711 = vunpack.c.l.s4 1966171168
          %v712 = vunpack.c.0.s8 %v711
          %v713 = vlaneseq
          %v714 = vshrl.u32 %v713, 7
          %v715 = vsub.s32 %v712, %v714
          %v716 = vrot.slane %v708, %v715
          %v718 = vunpack.c.l.s4 1966171168
          %v719 = vunpack.c.0.s8 %v718
          %v720 = vlaneseq
          %v721 = vshrl.u32 %v720, 7
          %v722 = vsub.s32 %v719, %v721
          %v723 = vrot.slane %v709, %v722
          %v724 = vcombine.low %v716, %v723
          %v725 = vcombine.low %v596, %v597
          %v726 = vcombine.low %v598, %v599
          %v727 = vcombine.low %v600, %v601
          %v728 = vcombine.low %v602, %v603
          %v730 = vunpack.c.l.s4 1966171168
          %v731 = vunpack.c.0.s8 %v730
          %v732 = vlaneseq
          %v733 = vshrl.u32 %v732, 7
          %v734 = vsub.s32 %v731, %v733
          %v735 = vrot.slane %v725, %v734
          %v737 = vunpack.c.l.s4 1966171168
          %v738 = vunpack.c.0.s8 %v737
          %v739 = vlaneseq
          %v740 = vshrl.u32 %v739, 7
          %v741 = vsub.s32 %v738, %v740
          %v742 = vrot.slane %v726, %v741
          %v744 = vunpack.c.l.s4 1966171168
          %v745 = vunpack.c.0.s8 %v744
          %v746 = vlaneseq
          %v747 = vshrl.u32 %v746, 7
          %v748 = vsub.s32 %v745, %v747
          %v749 = vrot.slane %v727, %v748
          %v751 = vunpack.c.l.s4 1966171168
          %v752 = vunpack.c.0.s8 %v751
          %v753 = vlaneseq
          %v754 = vshrl.u32 %v753, 7
          %v755 = vsub.s32 %v752, %v754
          %v756 = vrot.slane %v728, %v755
          %v757 = vcombine.low %v735, %v742
          %v758 = vcombine.low %v749, %v756
          %v760 = vunpack.c.l.s4 1966171168
          %v761 = vunpack.c.0.s8 %v760
          %v762 = vlaneseq
          %v763 = vshrl.u32 %v762, 7
          %v764 = vsub.s32 %v761, %v763
          %v765 = vrot.slane %v757, %v764
          %v767 = vunpack.c.l.s4 1966171168
          %v768 = vunpack.c.0.s8 %v767
          %v769 = vlaneseq
          %v770 = vshrl.u32 %v769, 7
          %v771 = vsub.s32 %v768, %v770
          %v772 = vrot.slane %v758, %v771
          %v773 = vcombine.low %v765, %v772
          %v774 = vcombine.low %v604, %v605
          %v775 = vcombine.low %v606, %v607
          %v776 = vcombine.low %v608, %v609
          %v777 = vcombine.low %v610, %v611
          %v779 = vunpack.c.l.s4 1966171168
          %v780 = vunpack.c.0.s8 %v779
          %v781 = vlaneseq
          %v782 = vshrl.u32 %v781, 7
          %v783 = vsub.s32 %v780, %v782
          %v784 = vrot.slane %v774, %v783
          %v786 = vunpack.c.l.s4 1966171168
          %v787 = vunpack.c.0.s8 %v786
          %v788 = vlaneseq
          %v789 = vshrl.u32 %v788, 7
          %v790 = vsub.s32 %v787, %v789
          %v791 = vrot.slane %v775, %v790
          %v793 = vunpack.c.l.s4 1966171168
          %v794 = vunpack.c.0.s8 %v793
          %v795 = vlaneseq
          %v796 = vshrl.u32 %v795, 7
          %v797 = vsub.s32 %v794, %v796
          %v798 = vrot.slane %v776, %v797
          %v800 = vunpack.c.l.s4 1966171168
          %v801 = vunpack.c.0.s8 %v800
          %v802 = vlaneseq
          %v803 = vshrl.u32 %v802, 7
          %v804 = vsub.s32 %v801, %v803
          %v805 = vrot.slane %v777, %v804
          %v806 = vcombine.low %v784, %v791
          %v807 = vcombine.low %v798, %v805
          %v809 = vunpack.c.l.s4 1966171168
          %v810 = vunpack.c.0.s8 %v809
          %v811 = vlaneseq
          %v812 = vshrl.u32 %v811, 7
          %v813 = vsub.s32 %v810, %v812
          %v814 = vrot.slane %v806, %v813
          %v816 = vunpack.c.l.s4 1966171168
          %v817 = vunpack.c.0.s8 %v816
          %v818 = vlaneseq
          %v819 = vshrl.u32 %v818, 7
          %v820 = vsub.s32 %v817, %v819
          %v821 = vrot.slane %v807, %v820
          %v822 = vcombine.low %v814, %v821
          %v823 = vcombine.low %v612, %v613
          %v824 = vcombine.low %v614, %v615
          %v825 = vcombine.low %v616, %v617
          %v826 = vcombine.low %v618, %v619
          %v828 = vunpack.c.l.s4 1966171168
          %v829 = vunpack.c.0.s8 %v828
          %v830 = vlaneseq
          %v831 = vshrl.u32 %v830, 7
          %v832 = vsub.s32 %v829, %v831
          %v833 = vrot.slane %v823, %v832
          %v835 = vunpack.c.l.s4 1966171168
          %v836 = vunpack.c.0.s8 %v835
          %v837 = vlaneseq
          %v838 = vshrl.u32 %v837, 7
          %v839 = vsub.s32 %v836, %v838
          %v840 = vrot.slane %v824, %v839
          %v842 = vunpack.c.l.s4 1966171168
          %v843 = vunpack.c.0.s8 %v842
          %v844 = vlaneseq
          %v845 = vshrl.u32 %v844, 7
          %v846 = vsub.s32 %v843, %v845
          %v847 = vrot.slane %v825, %v846
          %v849 = vunpack.c.l.s4 1966171168
          %v850 = vunpack.c.0.s8 %v849
          %v851 = vlaneseq
          %v852 = vshrl.u32 %v851, 7
          %v853 = vsub.s32 %v850, %v852
          %v854 = vrot.slane %v826, %v853
          %v855 = vcombine.low %v833, %v840
          %v856 = vcombine.low %v847, %v854
          %v858 = vunpack.c.l.s4 1966171168
          %v859 = vunpack.c.0.s8 %v858
          %v860 = vlaneseq
          %v861 = vshrl.u32 %v860, 7
          %v862 = vsub.s32 %v859, %v861
          %v863 = vrot.slane %v855, %v862
          %v865 = vunpack.c.l.s4 1966171168
          %v866 = vunpack.c.0.s8 %v865
          %v867 = vlaneseq
          %v868 = vshrl.u32 %v867, 7
          %v869 = vsub.s32 %v866, %v868
          %v870 = vrot.slane %v856, %v869
          %v871 = vcombine.low %v863, %v870
          %v872 = vcombine.low %v620, %v621
          %v873 = vcombine.low %v622, %v623
          %v874 = vcombine.low %v624, %v625
          %v875 = vcombine.low %v626, %v627
          %v877 = vunpack.c.l.s4 1966171168
          %v878 = vunpack.c.0.s8 %v877
          %v879 = vlaneseq
          %v880 = vshrl.u32 %v879, 7
          %v881 = vsub.s32 %v878, %v880
          %v882 = vrot.slane %v872, %v881
          %v884 = vunpack.c.l.s4 1966171168
          %v885 = vunpack.c.0.s8 %v884
          %v886 = vlaneseq
          %v887 = vshrl.u32 %v886, 7
          %v888 = vsub.s32 %v885, %v887
          %v889 = vrot.slane %v873, %v888
          %v891 = vunpack.c.l.s4 1966171168
          %v892 = vunpack.c.0.s8 %v891
          %v893 = vlaneseq
          %v894 = vshrl.u32 %v893, 7
          %v895 = vsub.s32 %v892, %v894
          %v896 = vrot.slane %v874, %v895
          %v898 = vunpack.c.l.s4 1966171168
          %v899 = vunpack.c.0.s8 %v898
          %v900 = vlaneseq
          %v901 = vshrl.u32 %v900, 7
          %v902 = vsub.s32 %v899, %v901
          %v903 = vrot.slane %v875, %v902
          %v904 = vcombine.low %v882, %v889
          %v905 = vcombine.low %v896, %v903
          %v907 = vunpack.c.l.s4 1966171168
          %v908 = vunpack.c.0.s8 %v907
          %v909 = vlaneseq
          %v910 = vshrl.u32 %v909, 7
          %v911 = vsub.s32 %v908, %v910
          %v912 = vrot.slane %v904, %v911
          %v914 = vunpack.c.l.s4 1966171168
          %v915 = vunpack.c.0.s8 %v914
          %v916 = vlaneseq
          %v917 = vshrl.u32 %v916, 7
          %v918 = vsub.s32 %v915, %v917
          %v919 = vrot.slane %v905, %v918
          %v920 = vcombine.low %v912, %v919
          %v921 = vcombine.low %v628, %v629
          %v922 = vcombine.low %v630, %v631
          %v924 = vunpack.c.l.s4 1966171168
          %v925 = vunpack.c.0.s8 %v924
          %v926 = vlaneseq
          %v927 = vshrl.u32 %v926, 7
          %v928 = vsub.s32 %v925, %v927
          %v929 = vrot.slane %v921, %v928
          %v931 = vunpack.c.l.s4 1966171168
          %v932 = vunpack.c.0.s8 %v931
          %v933 = vlaneseq
          %v934 = vshrl.u32 %v933, 7
          %v935 = vsub.s32 %v932, %v934
          %v936 = vrot.slane %v922, %v935
          %v937 = vcombine.low %v929, %v936
          %v939 = vunpack.c.l.s4 1966171168
          %v940 = vunpack.c.0.s8 %v939
          %v941 = vlaneseq
          %v942 = vshrl.u32 %v941, 7
          %v943 = vsub.s32 %v940, %v942
          %v944 = vrot.slane %v937, %v943
          %vm951 = vcmask 1040384
          %vm952 = vsmask.f32 256
          %vm953 = vmand %vm951, %vm952
          %vm954 = vcmask 1041409
          %vm955 = vsmask.f32 1280
          %vm956 = vmand %vm954, %vm955
          %vm957 = vmor %vm956, %vm953
          %vm958 = vcmask 1042434
          %vm959 = vsmask.f32 2304
          %vm960 = vmand %vm958, %vm959
          %vm961 = vmor %vm960, %vm957
          %vm962 = vcmask 1043459
          %vm963 = vsmask.f32 3328
          %vm964 = vmand %vm962, %vm963
          %vm965 = vmor %vm964, %vm961
          %vm966 = vcmask 1044484
          %vm967 = vsmask.f32 4352
          %vm968 = vmand %vm966, %vm967
          %vm969 = vmor %vm968, %vm965
          %vm970 = vcmask 1045509
          %vm971 = vsmask.f32 5376
          %vm972 = vmand %vm970, %vm971
          %vm973 = vmor %vm972, %vm969
          %vm974 = vcmask 1046534
          %vm975 = vsmask.f32 6400
          %vm976 = vmand %vm974, %vm975
          %vm977 = vmor %vm976, %vm973
          %vm978 = vcmask 1047559
          %vm979 = vsmask.f32 7424
          %vm980 = vmand %vm978, %vm979
          %vm981 = vmor %vm980, %vm977
          %v982 = vld [vmem:[#allocation3] sm:$0xff]
          %v983 = vsel %vm981, %v724, %v982
          %984 = vst [vmem:[#allocation3] sm:$0xff] %v983
          %v985 = vld [vmem:[#allocation3 + $0x8] sm:$0xff]
          %v986 = vsel %vm981, %v773, %v985
          %987 = vst [vmem:[#allocation3 + $0x8] sm:$0xff] %v986
          %v988 = vld [vmem:[#allocation3 + $0x10] sm:$0xff]
          %v989 = vsel %vm981, %v822, %v988
          %990 = vst [vmem:[#allocation3 + $0x10] sm:$0xff] %v989
          %v991 = vld [vmem:[#allocation3 + $0x18] sm:$0xff]
          %v992 = vsel %vm981, %v871, %v991
          %993 = vst [vmem:[#allocation3 + $0x18] sm:$0xff] %v992
          %v994 = vld [vmem:[#allocation3 + $0x20] sm:$0xff]
          %v995 = vsel %vm981, %v920, %v994
          %996 = vst [vmem:[#allocation3 + $0x20] sm:$0xff] %v995
          %v997 = vld [vmem:[#allocation3 + $0x28] sm:$0xf]
          %v998 = vsel %vm965, %v944, %v997
          %999 = vst [vmem:[#allocation3 + $0x28] sm:$0xf] %v998
        $region60: #{activation_maximization_forward.1} parent=51 // pred_fallthru
          _
        %p1000 = scmp.eq.s32.totalorder %s24, 1
        // Predicated region
        $region61: #{activation_maximization_forward.1} parent=51 // pred_check
          %p1001 = pneg %p1000
        $region62: #{activation_maximization_forward.1} parent=51 // pred_check_branch
          %1003 = sbr.rel (%p1001) target = $region64
        $region63: #{activation_maximization_forward.1} parent=51 // pred_region
          %v1004 = vld [vmem:[%s2] sm:$0xff]
          %v1005 = vld [vmem:[%s2 + $0x8] sm:$0xff]
          %v1006 = vld [vmem:[%s2 + $0x10] sm:$0xff]
          %v1007 = vld [vmem:[%s2 + $0x18] sm:$0xff]
          %v1008 = vld [vmem:[%s2 + $0x20] sm:$0xff]
          %v1009 = vld [vmem:[%s2 + $0x28] sm:$0xf]
          %v1010 = vand.u32 2147483647, %v1004
          %vm1011 = vcmp.le.f32.partialorder %v1010, 0.7853982
          %vm1012 = vcmp.lt.s32.totalorder %v1004, 0
          %v1013 = vand.u32 %v1004, 2139095040
          %v1014 = vshrl.u32 %v1013, 23
          %v1015 = vsub.s32 %v1014, 127
          %v1016 = vand.u32 2147483647, %v1004
          %v1017 = vand.u32 %v1016, 8388607
          %v1018 = vor.u32 %v1017, 8388608
          %v1019 = vsub.s32 0, %v1018
          %v1020 = vadd.s32 %v1015, 1
          %vm1021 = vcmp.gt.s32.totalorder %v1020, 0
          %v1022 = vsel %vm1021, %v1020, 0
          %v1023 = vshrl.u32 %v1022, 5
          %v1024 = vand.u32 %v1022, 31
          %v1025 = vsub.s32 32, %v1024
          %v1026 = vshrl.u32 683565275, %v1025
          %v1027 = vshll.u32 683565275, %v1024
          %v1028 = vshrl.u32 2475754826, %v1025
          %v1029 = vor.u32 %v1027, %v1028
          %v1030 = vshll.u32 2475754826, %v1024
          %v1031 = vshrl.u32 2131351028, %v1025
          %v1032 = vor.u32 %v1030, %v1031
          %v1033 = vshll.u32 2131351028, %v1024
          %v1034 = vshrl.u32 2102212464, %v1025
          %v1035 = vor.u32 %v1033, %v1034
          %v1036 = vshll.u32 2102212464, %v1024
          %v1037 = vshrl.u32 920167782, %v1025
          %v1038 = vor.u32 %v1036, %v1037
          %v1039 = vshll.u32 920167782, %v1024
          %v1040 = vshrl.u32 1326507024, %v1025
          %v1041 = vor.u32 %v1039, %v1040
          %vm1042 = vcmp.lt.s32.totalorder %v1023, 1
          %vm1043 = vcmp.lt.s32.totalorder %v1023, 2
          %vm1044 = vcmp.lt.s32.totalorder %v1023, 3
          %vm1045 = vcmp.lt.s32.totalorder %v1023, 4
          %v1046 = vsel %vm1042, %v1026, %v1029
          %v1047 = vsel %vm1045, %v1035, 2102212464
          %v1048 = vsel %vm1044, %v1032, %v1047
          %v1049 = vsel %vm1043, %v1046, %v1048
          %v1050 = vsel %vm1042, %v1029, %v1032
          %v1051 = vsel %vm1045, %v1038, 920167782
          %v1052 = vsel %vm1044, %v1035, %v1051
          %v1053 = vsel %vm1043, %v1050, %v1052
          %v1054 = vsel %vm1042, %v1032, %v1035
          %v1055 = vsel %vm1045, %v1041, 1326507024
          %v1056 = vsel %vm1044, %v1038, %v1055
          %v1057 = vsel %vm1043, %v1054, %v1056
          %v1058 = vshll.u32 %v1018, 8
          %v1059 = vmul.u32.u64.compose %v1058, %v1057
          %v1060 = vextract.low.u32 %v1059
          %v1061 = vextract.high.u32 %v1059
          %v1062 = vmul.u32.u64.compose %v1058, %v1053
          %v1063 = vextract.low.u32 %v1062
          %v1064 = vextract.high.u32 %v1062
          %v1065 = vmul.u32 %v1058, %v1049
          %v1066 = vadd.s32 %v1061, %v1063
          %vm1067 = vc.u32 %v1061, %v1063
          %v1068 = vadd.s32 %v1064, 1
          %v1069 = vsel %vm1067, %v1068, %v1064
          %v1070 = vadd.s32 %v1065, %v1069
          %v1071 = vadd.s32 %v1070, 536870912
          %v1072 = vshrl.u32 %v1071, 30
          %v1073 = vshll.u32 %v1072, 30
          %v1074 = vsub.s32 %v1070, %v1073
          %vm1075 = vcmp.lt.s32.totalorder %v1074, 0
          %v1076 = vsub.s32 0, %v1074
          %v1077 = vsel %vm1075, %v1076, %v1074
          %v1078 = vclz %v1077
          %v1079 = vsub.s32 %v1078, 2
          %vm1080 = vcmp.gt.s32.totalorder 0, %v1079
          %v1081 = vsel %vm1080, 0, %v1079
          %v1082 = vsub.s32 32, %v1081
          %v1083 = vshll.u32 %v1074, %v1081
          %v1084 = vshrl.u32 %v1066, %v1082
          %v1085 = vor.u32 %v1083, %v1084
          %v1086 = vsub.s32 4294967266, %v1081
          %v1087 = vadd.s32 %v1086, 127
          %v1088 = vshll.u32 %v1087, 23
          %v1089 = vor.u32 4788187, %v1088
          %v1090 = vand.u32 2147483647, %v1089
          %v1092 = vcvt.s32.f32 %v1085
          %v1093 = vmul.f32 %v1092, %v1090
          %v1094 = vxor.u32 %v1093, 2147483648
          %v1095 = vsel %vm1012, %v1094, %v1093
          %v1096 = vsub.s32 4, %v1072
          %v1097 = vsel %vm1012, %v1096, %v1072
          %v1098 = vsel %vm1011, %v1004, %v1095
          %v1099 = vsel %vm1011, 0, %v1097
          %v1100 = vcosq.f32.pop %v1098
          %v1101 = vsinq.f32.pop %v1098
          %vm1102 = vweird.f32 %v1004
          %v1103 = vand.u32 %v1099, 3
          %vm1104 = vcmp.lt.s32.totalorder %v1103, 2
          %vm1105 = vcmp.eq.s32.totalorder %v1103, 0
          %v1106 = vxor.u32 %v1101, 2147483648
          %v1107 = vsel %vm1105, %v1100, %v1106
          %vm1108 = vcmp.eq.s32.totalorder %v1103, 2
          %v1109 = vxor.u32 %v1100, 2147483648
          %v1110 = vsel %vm1108, %v1109, %v1101
          %v1111 = vsel %vm1104, %v1107, %v1110
          %v1112 = vsel %vm1102, nan, %v1111
          %v1113 = vand.u32 2147483647, %v1005
          %vm1114 = vcmp.le.f32.partialorder %v1113, 0.7853982
          %vm1115 = vcmp.lt.s32.totalorder %v1005, 0
          %v1116 = vand.u32 %v1005, 2139095040
          %v1117 = vshrl.u32 %v1116, 23
          %v1118 = vsub.s32 %v1117, 127
          %v1119 = vand.u32 2147483647, %v1005
          %v1120 = vand.u32 %v1119, 8388607
          %v1121 = vor.u32 %v1120, 8388608
          %v1122 = vsub.s32 0, %v1121
          %v1123 = vadd.s32 %v1118, 1
          %vm1124 = vcmp.gt.s32.totalorder %v1123, 0
          %v1125 = vsel %vm1124, %v1123, 0
          %v1126 = vshrl.u32 %v1125, 5
          %v1127 = vand.u32 %v1125, 31
          %v1128 = vsub.s32 32, %v1127
          %v1129 = vshrl.u32 683565275, %v1128
          %v1130 = vshll.u32 683565275, %v1127
          %v1131 = vshrl.u32 2475754826, %v1128
          %v1132 = vor.u32 %v1130, %v1131
          %v1133 = vshll.u32 2475754826, %v1127
          %v1134 = vshrl.u32 2131351028, %v1128
          %v1135 = vor.u32 %v1133, %v1134
          %v1136 = vshll.u32 2131351028, %v1127
          %v1137 = vshrl.u32 2102212464, %v1128
          %v1138 = vor.u32 %v1136, %v1137
          %v1139 = vshll.u32 2102212464, %v1127
          %v1140 = vshrl.u32 920167782, %v1128
          %v1141 = vor.u32 %v1139, %v1140
          %v1142 = vshll.u32 920167782, %v1127
          %v1143 = vshrl.u32 1326507024, %v1128
          %v1144 = vor.u32 %v1142, %v1143
          %vm1145 = vcmp.lt.s32.totalorder %v1126, 1
          %vm1146 = vcmp.lt.s32.totalorder %v1126, 2
          %vm1147 = vcmp.lt.s32.totalorder %v1126, 3
          %vm1148 = vcmp.lt.s32.totalorder %v1126, 4
          %v1149 = vsel %vm1145, %v1129, %v1132
          %v1150 = vsel %vm1148, %v1138, 2102212464
          %v1151 = vsel %vm1147, %v1135, %v1150
          %v1152 = vsel %vm1146, %v1149, %v1151
          %v1153 = vsel %vm1145, %v1132, %v1135
          %v1154 = vsel %vm1148, %v1141, 920167782
          %v1155 = vsel %vm1147, %v1138, %v1154
          %v1156 = vsel %vm1146, %v1153, %v1155
          %v1157 = vsel %vm1145, %v1135, %v1138
          %v1158 = vsel %vm1148, %v1144, 1326507024
          %v1159 = vsel %vm1147, %v1141, %v1158
          %v1160 = vsel %vm1146, %v1157, %v1159
          %v1161 = vshll.u32 %v1121, 8
          %v1162 = vmul.u32.u64.compose %v1161, %v1160
          %v1163 = vextract.low.u32 %v1162
          %v1164 = vextract.high.u32 %v1162
          %v1165 = vmul.u32.u64.compose %v1161, %v1156
          %v1166 = vextract.low.u32 %v1165
          %v1167 = vextract.high.u32 %v1165
          %v1168 = vmul.u32 %v1161, %v1152
          %v1169 = vadd.s32 %v1164, %v1166
          %vm1170 = vc.u32 %v1164, %v1166
          %v1171 = vadd.s32 %v1167, 1
          %v1172 = vsel %vm1170, %v1171, %v1167
          %v1173 = vadd.s32 %v1168, %v1172
          %v1174 = vadd.s32 %v1173, 536870912
          %v1175 = vshrl.u32 %v1174, 30
          %v1176 = vshll.u32 %v1175, 30
          %v1177 = vsub.s32 %v1173, %v1176
          %vm1178 = vcmp.lt.s32.totalorder %v1177, 0
          %v1179 = vsub.s32 0, %v1177
          %v1180 = vsel %vm1178, %v1179, %v1177
          %v1181 = vclz %v1180
          %v1182 = vsub.s32 %v1181, 2
          %vm1183 = vcmp.gt.s32.totalorder 0, %v1182
          %v1184 = vsel %vm1183, 0, %v1182
          %v1185 = vsub.s32 32, %v1184
          %v1186 = vshll.u32 %v1177, %v1184
          %v1187 = vshrl.u32 %v1169, %v1185
          %v1188 = vor.u32 %v1186, %v1187
          %v1189 = vsub.s32 4294967266, %v1184
          %v1190 = vadd.s32 %v1189, 127
          %v1191 = vshll.u32 %v1190, 23
          %v1192 = vor.u32 4788187, %v1191
          %v1193 = vand.u32 2147483647, %v1192
          %v1195 = vcvt.s32.f32 %v1188
          %v1196 = vmul.f32 %v1195, %v1193
          %v1197 = vxor.u32 %v1196, 2147483648
          %v1198 = vsel %vm1115, %v1197, %v1196
          %v1199 = vsub.s32 4, %v1175
          %v1200 = vsel %vm1115, %v1199, %v1175
          %v1201 = vsel %vm1114, %v1005, %v1198
          %v1202 = vsel %vm1114, 0, %v1200
          %v1203 = vcosq.f32.pop %v1201
          %v1204 = vsinq.f32.pop %v1201
          %vm1205 = vweird.f32 %v1005
          %v1206 = vand.u32 %v1202, 3
          %vm1207 = vcmp.lt.s32.totalorder %v1206, 2
          %vm1208 = vcmp.eq.s32.totalorder %v1206, 0
          %v1209 = vxor.u32 %v1204, 2147483648
          %v1210 = vsel %vm1208, %v1203, %v1209
          %vm1211 = vcmp.eq.s32.totalorder %v1206, 2
          %v1212 = vxor.u32 %v1203, 2147483648
          %v1213 = vsel %vm1211, %v1212, %v1204
          %v1214 = vsel %vm1207, %v1210, %v1213
          %v1215 = vsel %vm1205, nan, %v1214
          %v1216 = vand.u32 2147483647, %v1006
          %vm1217 = vcmp.le.f32.partialorder %v1216, 0.7853982
          %vm1218 = vcmp.lt.s32.totalorder %v1006, 0
          %v1219 = vand.u32 %v1006, 2139095040
          %v1220 = vshrl.u32 %v1219, 23
          %v1221 = vsub.s32 %v1220, 127
          %v1222 = vand.u32 2147483647, %v1006
          %v1223 = vand.u32 %v1222, 8388607
          %v1224 = vor.u32 %v1223, 8388608
          %v1225 = vsub.s32 0, %v1224
          %v1226 = vadd.s32 %v1221, 1
          %vm1227 = vcmp.gt.s32.totalorder %v1226, 0
          %v1228 = vsel %vm1227, %v1226, 0
          %v1229 = vshrl.u32 %v1228, 5
          %v1230 = vand.u32 %v1228, 31
          %v1231 = vsub.s32 32, %v1230
          %v1232 = vshrl.u32 683565275, %v1231
          %v1233 = vshll.u32 683565275, %v1230
          %v1234 = vshrl.u32 2475754826, %v1231
          %v1235 = vor.u32 %v1233, %v1234
          %v1236 = vshll.u32 2475754826, %v1230
          %v1237 = vshrl.u32 2131351028, %v1231
          %v1238 = vor.u32 %v1236, %v1237
          %v1239 = vshll.u32 2131351028, %v1230
          %v1240 = vshrl.u32 2102212464, %v1231
          %v1241 = vor.u32 %v1239, %v1240
          %v1242 = vshll.u32 2102212464, %v1230
          %v1243 = vshrl.u32 920167782, %v1231
          %v1244 = vor.u32 %v1242, %v1243
          %v1245 = vshll.u32 920167782, %v1230
          %v1246 = vshrl.u32 1326507024, %v1231
          %v1247 = vor.u32 %v1245, %v1246
          %vm1248 = vcmp.lt.s32.totalorder %v1229, 1
          %vm1249 = vcmp.lt.s32.totalorder %v1229, 2
          %vm1250 = vcmp.lt.s32.totalorder %v1229, 3
          %vm1251 = vcmp.lt.s32.totalorder %v1229, 4
          %v1252 = vsel %vm1248, %v1232, %v1235
          %v1253 = vsel %vm1251, %v1241, 2102212464
          %v1254 = vsel %vm1250, %v1238, %v1253
          %v1255 = vsel %vm1249, %v1252, %v1254
          %v1256 = vsel %vm1248, %v1235, %v1238
          %v1257 = vsel %vm1251, %v1244, 920167782
          %v1258 = vsel %vm1250, %v1241, %v1257
          %v1259 = vsel %vm1249, %v1256, %v1258
          %v1260 = vsel %vm1248, %v1238, %v1241
          %v1261 = vsel %vm1251, %v1247, 1326507024
          %v1262 = vsel %vm1250, %v1244, %v1261
          %v1263 = vsel %vm1249, %v1260, %v1262
          %v1264 = vshll.u32 %v1224, 8
          %v1265 = vmul.u32.u64.compose %v1264, %v1263
          %v1266 = vextract.low.u32 %v1265
          %v1267 = vextract.high.u32 %v1265
          %v1268 = vmul.u32.u64.compose %v1264, %v1259
          %v1269 = vextract.low.u32 %v1268
          %v1270 = vextract.high.u32 %v1268
          %v1271 = vmul.u32 %v1264, %v1255
          %v1272 = vadd.s32 %v1267, %v1269
          %vm1273 = vc.u32 %v1267, %v1269
          %v1274 = vadd.s32 %v1270, 1
          %v1275 = vsel %vm1273, %v1274, %v1270
          %v1276 = vadd.s32 %v1271, %v1275
          %v1277 = vadd.s32 %v1276, 536870912
          %v1278 = vshrl.u32 %v1277, 30
          %v1279 = vshll.u32 %v1278, 30
          %v1280 = vsub.s32 %v1276, %v1279
          %vm1281 = vcmp.lt.s32.totalorder %v1280, 0
          %v1282 = vsub.s32 0, %v1280
          %v1283 = vsel %vm1281, %v1282, %v1280
          %v1284 = vclz %v1283
          %v1285 = vsub.s32 %v1284, 2
          %vm1286 = vcmp.gt.s32.totalorder 0, %v1285
          %v1287 = vsel %vm1286, 0, %v1285
          %v1288 = vsub.s32 32, %v1287
          %v1289 = vshll.u32 %v1280, %v1287
          %v1290 = vshrl.u32 %v1272, %v1288
          %v1291 = vor.u32 %v1289, %v1290
          %v1292 = vsub.s32 4294967266, %v1287
          %v1293 = vadd.s32 %v1292, 127
          %v1294 = vshll.u32 %v1293, 23
          %v1295 = vor.u32 4788187, %v1294
          %v1296 = vand.u32 2147483647, %v1295
          %v1298 = vcvt.s32.f32 %v1291
          %v1299 = vmul.f32 %v1298, %v1296
          %v1300 = vxor.u32 %v1299, 2147483648
          %v1301 = vsel %vm1218, %v1300, %v1299
          %v1302 = vsub.s32 4, %v1278
          %v1303 = vsel %vm1218, %v1302, %v1278
          %v1304 = vsel %vm1217, %v1006, %v1301
          %v1305 = vsel %vm1217, 0, %v1303
          %v1306 = vcosq.f32.pop %v1304
          %v1307 = vsinq.f32.pop %v1304
          %vm1308 = vweird.f32 %v1006
          %v1309 = vand.u32 %v1305, 3
          %vm1310 = vcmp.lt.s32.totalorder %v1309, 2
          %vm1311 = vcmp.eq.s32.totalorder %v1309, 0
          %v1312 = vxor.u32 %v1307, 2147483648
          %v1313 = vsel %vm1311, %v1306, %v1312
          %vm1314 = vcmp.eq.s32.totalorder %v1309, 2
          %v1315 = vxor.u32 %v1306, 2147483648
          %v1316 = vsel %vm1314, %v1315, %v1307
          %v1317 = vsel %vm1310, %v1313, %v1316
          %v1318 = vsel %vm1308, nan, %v1317
          %v1319 = vand.u32 2147483647, %v1007
          %vm1320 = vcmp.le.f32.partialorder %v1319, 0.7853982
          %vm1321 = vcmp.lt.s32.totalorder %v1007, 0
          %v1322 = vand.u32 %v1007, 2139095040
          %v1323 = vshrl.u32 %v1322, 23
          %v1324 = vsub.s32 %v1323, 127
          %v1325 = vand.u32 2147483647, %v1007
          %v1326 = vand.u32 %v1325, 8388607
          %v1327 = vor.u32 %v1326, 8388608
          %v1328 = vsub.s32 0, %v1327
          %v1329 = vadd.s32 %v1324, 1
          %vm1330 = vcmp.gt.s32.totalorder %v1329, 0
          %v1331 = vsel %vm1330, %v1329, 0
          %v1332 = vshrl.u32 %v1331, 5
          %v1333 = vand.u32 %v1331, 31
          %v1334 = vsub.s32 32, %v1333
          %v1335 = vshrl.u32 683565275, %v1334
          %v1336 = vshll.u32 683565275, %v1333
          %v1337 = vshrl.u32 2475754826, %v1334
          %v1338 = vor.u32 %v1336, %v1337
          %v1339 = vshll.u32 2475754826, %v1333
          %v1340 = vshrl.u32 2131351028, %v1334
          %v1341 = vor.u32 %v1339, %v1340
          %v1342 = vshll.u32 2131351028, %v1333
          %v1343 = vshrl.u32 2102212464, %v1334
          %v1344 = vor.u32 %v1342, %v1343
          %v1345 = vshll.u32 2102212464, %v1333
          %v1346 = vshrl.u32 920167782, %v1334
          %v1347 = vor.u32 %v1345, %v1346
          %v1348 = vshll.u32 920167782, %v1333
          %v1349 = vshrl.u32 1326507024, %v1334
          %v1350 = vor.u32 %v1348, %v1349
          %vm1351 = vcmp.lt.s32.totalorder %v1332, 1
          %vm1352 = vcmp.lt.s32.totalorder %v1332, 2
          %vm1353 = vcmp.lt.s32.totalorder %v1332, 3
          %vm1354 = vcmp.lt.s32.totalorder %v1332, 4
          %v1355 = vsel %vm1351, %v1335, %v1338
          %v1356 = vsel %vm1354, %v1344, 2102212464
          %v1357 = vsel %vm1353, %v1341, %v1356
          %v1358 = vsel %vm1352, %v1355, %v1357
          %v1359 = vsel %vm1351, %v1338, %v1341
          %v1360 = vsel %vm1354, %v1347, 920167782
          %v1361 = vsel %vm1353, %v1344, %v1360
          %v1362 = vsel %vm1352, %v1359, %v1361
          %v1363 = vsel %vm1351, %v1341, %v1344
          %v1364 = vsel %vm1354, %v1350, 1326507024
          %v1365 = vsel %vm1353, %v1347, %v1364
          %v1366 = vsel %vm1352, %v1363, %v1365
          %v1367 = vshll.u32 %v1327, 8
          %v1368 = vmul.u32.u64.compose %v1367, %v1366
          %v1369 = vextract.low.u32 %v1368
          %v1370 = vextract.high.u32 %v1368
          %v1371 = vmul.u32.u64.compose %v1367, %v1362
          %v1372 = vextract.low.u32 %v1371
          %v1373 = vextract.high.u32 %v1371
          %v1374 = vmul.u32 %v1367, %v1358
          %v1375 = vadd.s32 %v1370, %v1372
          %vm1376 = vc.u32 %v1370, %v1372
          %v1377 = vadd.s32 %v1373, 1
          %v1378 = vsel %vm1376, %v1377, %v1373
          %v1379 = vadd.s32 %v1374, %v1378
          %v1380 = vadd.s32 %v1379, 536870912
          %v1381 = vshrl.u32 %v1380, 30
          %v1382 = vshll.u32 %v1381, 30
          %v1383 = vsub.s32 %v1379, %v1382
          %vm1384 = vcmp.lt.s32.totalorder %v1383, 0
          %v1385 = vsub.s32 0, %v1383
          %v1386 = vsel %vm1384, %v1385, %v1383
          %v1387 = vclz %v1386
          %v1388 = vsub.s32 %v1387, 2
          %vm1389 = vcmp.gt.s32.totalorder 0, %v1388
          %v1390 = vsel %vm1389, 0, %v1388
          %v1391 = vsub.s32 32, %v1390
          %v1392 = vshll.u32 %v1383, %v1390
          %v1393 = vshrl.u32 %v1375, %v1391
          %v1394 = vor.u32 %v1392, %v1393
          %v1395 = vsub.s32 4294967266, %v1390
          %v1396 = vadd.s32 %v1395, 127
          %v1397 = vshll.u32 %v1396, 23
          %v1398 = vor.u32 4788187, %v1397
          %v1399 = vand.u32 2147483647, %v1398
          %v1401 = vcvt.s32.f32 %v1394
          %v1402 = vmul.f32 %v1401, %v1399
          %v1403 = vxor.u32 %v1402, 2147483648
          %v1404 = vsel %vm1321, %v1403, %v1402
          %v1405 = vsub.s32 4, %v1381
          %v1406 = vsel %vm1321, %v1405, %v1381
          %v1407 = vsel %vm1320, %v1007, %v1404
          %v1408 = vsel %vm1320, 0, %v1406
          %v1409 = vcosq.f32.pop %v1407
          %v1410 = vsinq.f32.pop %v1407
          %vm1411 = vweird.f32 %v1007
          %v1412 = vand.u32 %v1408, 3
          %vm1413 = vcmp.lt.s32.totalorder %v1412, 2
          %vm1414 = vcmp.eq.s32.totalorder %v1412, 0
          %v1415 = vxor.u32 %v1410, 2147483648
          %v1416 = vsel %vm1414, %v1409, %v1415
          %vm1417 = vcmp.eq.s32.totalorder %v1412, 2
          %v1418 = vxor.u32 %v1409, 2147483648
          %v1419 = vsel %vm1417, %v1418, %v1410
          %v1420 = vsel %vm1413, %v1416, %v1419
          %v1421 = vsel %vm1411, nan, %v1420
          %v1422 = vand.u32 2147483647, %v1008
          %vm1423 = vcmp.le.f32.partialorder %v1422, 0.7853982
          %vm1424 = vcmp.lt.s32.totalorder %v1008, 0
          %v1425 = vand.u32 %v1008, 2139095040
          %v1426 = vshrl.u32 %v1425, 23
          %v1427 = vsub.s32 %v1426, 127
          %v1428 = vand.u32 2147483647, %v1008
          %v1429 = vand.u32 %v1428, 8388607
          %v1430 = vor.u32 %v1429, 8388608
          %v1431 = vsub.s32 0, %v1430
          %v1432 = vadd.s32 %v1427, 1
          %vm1433 = vcmp.gt.s32.totalorder %v1432, 0
          %v1434 = vsel %vm1433, %v1432, 0
          %v1435 = vshrl.u32 %v1434, 5
          %v1436 = vand.u32 %v1434, 31
          %v1437 = vsub.s32 32, %v1436
          %v1438 = vshrl.u32 683565275, %v1437
          %v1439 = vshll.u32 683565275, %v1436
          %v1440 = vshrl.u32 2475754826, %v1437
          %v1441 = vor.u32 %v1439, %v1440
          %v1442 = vshll.u32 2475754826, %v1436
          %v1443 = vshrl.u32 2131351028, %v1437
          %v1444 = vor.u32 %v1442, %v1443
          %v1445 = vshll.u32 2131351028, %v1436
          %v1446 = vshrl.u32 2102212464, %v1437
          %v1447 = vor.u32 %v1445, %v1446
          %v1448 = vshll.u32 2102212464, %v1436
          %v1449 = vshrl.u32 920167782, %v1437
          %v1450 = vor.u32 %v1448, %v1449
          %v1451 = vshll.u32 920167782, %v1436
          %v1452 = vshrl.u32 1326507024, %v1437
          %v1453 = vor.u32 %v1451, %v1452
          %vm1454 = vcmp.lt.s32.totalorder %v1435, 1
          %vm1455 = vcmp.lt.s32.totalorder %v1435, 2
          %vm1456 = vcmp.lt.s32.totalorder %v1435, 3
          %vm1457 = vcmp.lt.s32.totalorder %v1435, 4
          %v1458 = vsel %vm1454, %v1438, %v1441
          %v1459 = vsel %vm1457, %v1447, 2102212464
          %v1460 = vsel %vm1456, %v1444, %v1459
          %v1461 = vsel %vm1455, %v1458, %v1460
          %v1462 = vsel %vm1454, %v1441, %v1444
          %v1463 = vsel %vm1457, %v1450, 920167782
          %v1464 = vsel %vm1456, %v1447, %v1463
          %v1465 = vsel %vm1455, %v1462, %v1464
          %v1466 = vsel %vm1454, %v1444, %v1447
          %v1467 = vsel %vm1457, %v1453, 1326507024
          %v1468 = vsel %vm1456, %v1450, %v1467
          %v1469 = vsel %vm1455, %v1466, %v1468
          %v1470 = vshll.u32 %v1430, 8
          %v1471 = vmul.u32.u64.compose %v1470, %v1469
          %v1472 = vextract.low.u32 %v1471
          %v1473 = vextract.high.u32 %v1471
          %v1474 = vmul.u32.u64.compose %v1470, %v1465
          %v1475 = vextract.low.u32 %v1474
          %v1476 = vextract.high.u32 %v1474
          %v1477 = vmul.u32 %v1470, %v1461
          %v1478 = vadd.s32 %v1473, %v1475
          %vm1479 = vc.u32 %v1473, %v1475
          %v1480 = vadd.s32 %v1476, 1
          %v1481 = vsel %vm1479, %v1480, %v1476
          %v1482 = vadd.s32 %v1477, %v1481
          %v1483 = vadd.s32 %v1482, 536870912
          %v1484 = vshrl.u32 %v1483, 30
          %v1485 = vshll.u32 %v1484, 30
          %v1486 = vsub.s32 %v1482, %v1485
          %vm1487 = vcmp.lt.s32.totalorder %v1486, 0
          %v1488 = vsub.s32 0, %v1486
          %v1489 = vsel %vm1487, %v1488, %v1486
          %v1490 = vclz %v1489
          %v1491 = vsub.s32 %v1490, 2
          %vm1492 = vcmp.gt.s32.totalorder 0, %v1491
          %v1493 = vsel %vm1492, 0, %v1491
          %v1494 = vsub.s32 32, %v1493
          %v1495 = vshll.u32 %v1486, %v1493
          %v1496 = vshrl.u32 %v1478, %v1494
          %v1497 = vor.u32 %v1495, %v1496
          %v1498 = vsub.s32 4294967266, %v1493
          %v1499 = vadd.s32 %v1498, 127
          %v1500 = vshll.u32 %v1499, 23
          %v1501 = vor.u32 4788187, %v1500
          %v1502 = vand.u32 2147483647, %v1501
          %v1504 = vcvt.s32.f32 %v1497
          %v1505 = vmul.f32 %v1504, %v1502
          %v1506 = vxor.u32 %v1505, 2147483648
          %v1507 = vsel %vm1424, %v1506, %v1505
          %v1508 = vsub.s32 4, %v1484
          %v1509 = vsel %vm1424, %v1508, %v1484
          %v1510 = vsel %vm1423, %v1008, %v1507
          %v1511 = vsel %vm1423, 0, %v1509
          %v1512 = vcosq.f32.pop %v1510
          %v1513 = vsinq.f32.pop %v1510
          %vm1514 = vweird.f32 %v1008
          %v1515 = vand.u32 %v1511, 3
          %vm1516 = vcmp.lt.s32.totalorder %v1515, 2
          %vm1517 = vcmp.eq.s32.totalorder %v1515, 0
          %v1518 = vxor.u32 %v1513, 2147483648
          %v1519 = vsel %vm1517, %v1512, %v1518
          %vm1520 = vcmp.eq.s32.totalorder %v1515, 2
          %v1521 = vxor.u32 %v1512, 2147483648
          %v1522 = vsel %vm1520, %v1521, %v1513
          %v1523 = vsel %vm1516, %v1519, %v1522
          %v1524 = vsel %vm1514, nan, %v1523
          %v1525 = vand.u32 2147483647, %v1009
          %vm1526 = vcmp.le.f32.partialorder %v1525, 0.7853982
          %vm1527 = vcmp.lt.s32.totalorder %v1009, 0
          %v1528 = vand.u32 %v1009, 2139095040
          %v1529 = vshrl.u32 %v1528, 23
          %v1530 = vsub.s32 %v1529, 127
          %v1531 = vand.u32 2147483647, %v1009
          %v1532 = vand.u32 %v1531, 8388607
          %v1533 = vor.u32 %v1532, 8388608
          %v1534 = vsub.s32 0, %v1533
          %v1535 = vadd.s32 %v1530, 1
          %vm1536 = vcmp.gt.s32.totalorder %v1535, 0
          %v1537 = vsel %vm1536, %v1535, 0
          %v1538 = vshrl.u32 %v1537, 5
          %v1539 = vand.u32 %v1537, 31
          %v1540 = vsub.s32 32, %v1539
          %v1541 = vshrl.u32 683565275, %v1540
          %v1542 = vshll.u32 683565275, %v1539
          %v1543 = vshrl.u32 2475754826, %v1540
          %v1544 = vor.u32 %v1542, %v1543
          %v1545 = vshll.u32 2475754826, %v1539
          %v1546 = vshrl.u32 2131351028, %v1540
          %v1547 = vor.u32 %v1545, %v1546
          %v1548 = vshll.u32 2131351028, %v1539
          %v1549 = vshrl.u32 2102212464, %v1540
          %v1550 = vor.u32 %v1548, %v1549
          %v1551 = vshll.u32 2102212464, %v1539
          %v1552 = vshrl.u32 920167782, %v1540
          %v1553 = vor.u32 %v1551, %v1552
          %v1554 = vshll.u32 920167782, %v1539
          %v1555 = vshrl.u32 1326507024, %v1540
          %v1556 = vor.u32 %v1554, %v1555
          %vm1557 = vcmp.lt.s32.totalorder %v1538, 1
          %vm1558 = vcmp.lt.s32.totalorder %v1538, 2
          %vm1559 = vcmp.lt.s32.totalorder %v1538, 3
          %vm1560 = vcmp.lt.s32.totalorder %v1538, 4
          %v1561 = vsel %vm1557, %v1541, %v1544
          %v1562 = vsel %vm1560, %v1550, 2102212464
          %v1563 = vsel %vm1559, %v1547, %v1562
          %v1564 = vsel %vm1558, %v1561, %v1563
          %v1565 = vsel %vm1557, %v1544, %v1547
          %v1566 = vsel %vm1560, %v1553, 920167782
          %v1567 = vsel %vm1559, %v1550, %v1566
          %v1568 = vsel %vm1558, %v1565, %v1567
          %v1569 = vsel %vm1557, %v1547, %v1550
          %v1570 = vsel %vm1560, %v1556, 1326507024
          %v1571 = vsel %vm1559, %v1553, %v1570
          %v1572 = vsel %vm1558, %v1569, %v1571
          %v1573 = vshll.u32 %v1533, 8
          %v1574 = vmul.u32.u64.compose %v1573, %v1572
          %v1575 = vextract.low.u32 %v1574
          %v1576 = vextract.high.u32 %v1574
          %v1577 = vmul.u32.u64.compose %v1573, %v1568
          %v1578 = vextract.low.u32 %v1577
          %v1579 = vextract.high.u32 %v1577
          %v1580 = vmul.u32 %v1573, %v1564
          %v1581 = vadd.s32 %v1576, %v1578
          %vm1582 = vc.u32 %v1576, %v1578
          %v1583 = vadd.s32 %v1579, 1
          %v1584 = vsel %vm1582, %v1583, %v1579
          %v1585 = vadd.s32 %v1580, %v1584
          %v1586 = vadd.s32 %v1585, 536870912
          %v1587 = vshrl.u32 %v1586, 30
          %v1588 = vshll.u32 %v1587, 30
          %v1589 = vsub.s32 %v1585, %v1588
          %vm1590 = vcmp.lt.s32.totalorder %v1589, 0
          %v1591 = vsub.s32 0, %v1589
          %v1592 = vsel %vm1590, %v1591, %v1589
          %v1593 = vclz %v1592
          %v1594 = vsub.s32 %v1593, 2
          %vm1595 = vcmp.gt.s32.totalorder 0, %v1594
          %v1596 = vsel %vm1595, 0, %v1594
          %v1597 = vsub.s32 32, %v1596
          %v1598 = vshll.u32 %v1589, %v1596
          %v1599 = vshrl.u32 %v1581, %v1597
          %v1600 = vor.u32 %v1598, %v1599
          %v1601 = vsub.s32 4294967266, %v1596
          %v1602 = vadd.s32 %v1601, 127
          %v1603 = vshll.u32 %v1602, 23
          %v1604 = vor.u32 4788187, %v1603
          %v1605 = vand.u32 2147483647, %v1604
          %v1607 = vcvt.s32.f32 %v1600
          %v1608 = vmul.f32 %v1607, %v1605
          %v1609 = vxor.u32 %v1608, 2147483648
          %v1610 = vsel %vm1527, %v1609, %v1608
          %v1611 = vsub.s32 4, %v1587
          %v1612 = vsel %vm1527, %v1611, %v1587
          %v1613 = vsel %vm1526, %v1009, %v1610
          %v1614 = vsel %vm1526, 0, %v1612
          %v1615 = vcosq.f32.pop %v1613
          %v1616 = vsinq.f32.pop %v1613
          %vm1617 = vweird.f32 %v1009
          %v1618 = vand.u32 %v1614, 3
          %vm1619 = vcmp.lt.s32.totalorder %v1618, 2
          %vm1620 = vcmp.eq.s32.totalorder %v1618, 0
          %v1621 = vxor.u32 %v1616, 2147483648
          %v1622 = vsel %vm1620, %v1615, %v1621
          %vm1623 = vcmp.eq.s32.totalorder %v1618, 2
          %v1624 = vxor.u32 %v1615, 2147483648
          %v1625 = vsel %vm1623, %v1624, %v1616
          %v1626 = vsel %vm1619, %v1622, %v1625
          %v1627 = vsel %vm1617, nan, %v1626
          %v1634 = vlaneseq
          %v1635 = vshrl.u32 %v1634, 7
          %v1636 = vsub.s32 0, %v1635
          %v1637 = vrot.slane %v1112, %v1636
          %v1638 = vlaneseq
          %v1639 = vshrl.u32 %v1638, 7
          %v1640 = vsub.s32 1, %v1639
          %v1641 = vrot.slane %v1112, %v1640
          %v1642 = vlaneseq
          %v1643 = vshrl.u32 %v1642, 7
          %v1644 = vsub.s32 2, %v1643
          %v1645 = vrot.slane %v1112, %v1644
          %v1646 = vlaneseq
          %v1647 = vshrl.u32 %v1646, 7
          %v1648 = vsub.s32 3, %v1647
          %v1649 = vrot.slane %v1112, %v1648
          %v1650 = vlaneseq
          %v1651 = vshrl.u32 %v1650, 7
          %v1652 = vsub.s32 4, %v1651
          %v1653 = vrot.slane %v1112, %v1652
          %v1654 = vlaneseq
          %v1655 = vshrl.u32 %v1654, 7
          %v1656 = vsub.s32 5, %v1655
          %v1657 = vrot.slane %v1112, %v1656
          %v1658 = vlaneseq
          %v1659 = vshrl.u32 %v1658, 7
          %v1660 = vsub.s32 6, %v1659
          %v1661 = vrot.slane %v1112, %v1660
          %v1662 = vlaneseq
          %v1663 = vshrl.u32 %v1662, 7
          %v1664 = vsub.s32 7, %v1663
          %v1665 = vrot.slane %v1112, %v1664
          %v1666 = vlaneseq
          %v1667 = vshrl.u32 %v1666, 7
          %v1668 = vsub.s32 0, %v1667
          %v1669 = vrot.slane %v1215, %v1668
          %v1670 = vlaneseq
          %v1671 = vshrl.u32 %v1670, 7
          %v1672 = vsub.s32 1, %v1671
          %v1673 = vrot.slane %v1215, %v1672
          %v1674 = vlaneseq
          %v1675 = vshrl.u32 %v1674, 7
          %v1676 = vsub.s32 2, %v1675
          %v1677 = vrot.slane %v1215, %v1676
          %v1678 = vlaneseq
          %v1679 = vshrl.u32 %v1678, 7
          %v1680 = vsub.s32 3, %v1679
          %v1681 = vrot.slane %v1215, %v1680
          %v1682 = vlaneseq
          %v1683 = vshrl.u32 %v1682, 7
          %v1684 = vsub.s32 4, %v1683
          %v1685 = vrot.slane %v1215, %v1684
          %v1686 = vlaneseq
          %v1687 = vshrl.u32 %v1686, 7
          %v1688 = vsub.s32 5, %v1687
          %v1689 = vrot.slane %v1215, %v1688
          %v1690 = vlaneseq
          %v1691 = vshrl.u32 %v1690, 7
          %v1692 = vsub.s32 6, %v1691
          %v1693 = vrot.slane %v1215, %v1692
          %v1694 = vlaneseq
          %v1695 = vshrl.u32 %v1694, 7
          %v1696 = vsub.s32 7, %v1695
          %v1697 = vrot.slane %v1215, %v1696
          %v1698 = vlaneseq
          %v1699 = vshrl.u32 %v1698, 7
          %v1700 = vsub.s32 0, %v1699
          %v1701 = vrot.slane %v1318, %v1700
          %v1702 = vlaneseq
          %v1703 = vshrl.u32 %v1702, 7
          %v1704 = vsub.s32 1, %v1703
          %v1705 = vrot.slane %v1318, %v1704
          %v1706 = vlaneseq
          %v1707 = vshrl.u32 %v1706, 7
          %v1708 = vsub.s32 2, %v1707
          %v1709 = vrot.slane %v1318, %v1708
          %v1710 = vlaneseq
          %v1711 = vshrl.u32 %v1710, 7
          %v1712 = vsub.s32 3, %v1711
          %v1713 = vrot.slane %v1318, %v1712
          %v1714 = vlaneseq
          %v1715 = vshrl.u32 %v1714, 7
          %v1716 = vsub.s32 4, %v1715
          %v1717 = vrot.slane %v1318, %v1716
          %v1718 = vlaneseq
          %v1719 = vshrl.u32 %v1718, 7
          %v1720 = vsub.s32 5, %v1719
          %v1721 = vrot.slane %v1318, %v1720
          %v1722 = vlaneseq
          %v1723 = vshrl.u32 %v1722, 7
          %v1724 = vsub.s32 6, %v1723
          %v1725 = vrot.slane %v1318, %v1724
          %v1726 = vlaneseq
          %v1727 = vshrl.u32 %v1726, 7
          %v1728 = vsub.s32 7, %v1727
          %v1729 = vrot.slane %v1318, %v1728
          %v1730 = vlaneseq
          %v1731 = vshrl.u32 %v1730, 7
          %v1732 = vsub.s32 0, %v1731
          %v1733 = vrot.slane %v1421, %v1732
          %v1734 = vlaneseq
          %v1735 = vshrl.u32 %v1734, 7
          %v1736 = vsub.s32 1, %v1735
          %v1737 = vrot.slane %v1421, %v1736
          %v1738 = vlaneseq
          %v1739 = vshrl.u32 %v1738, 7
          %v1740 = vsub.s32 2, %v1739
          %v1741 = vrot.slane %v1421, %v1740
          %v1742 = vlaneseq
          %v1743 = vshrl.u32 %v1742, 7
          %v1744 = vsub.s32 3, %v1743
          %v1745 = vrot.slane %v1421, %v1744
          %v1746 = vlaneseq
          %v1747 = vshrl.u32 %v1746, 7
          %v1748 = vsub.s32 4, %v1747
          %v1749 = vrot.slane %v1421, %v1748
          %v1750 = vlaneseq
          %v1751 = vshrl.u32 %v1750, 7
          %v1752 = vsub.s32 5, %v1751
          %v1753 = vrot.slane %v1421, %v1752
          %v1754 = vlaneseq
          %v1755 = vshrl.u32 %v1754, 7
          %v1756 = vsub.s32 6, %v1755
          %v1757 = vrot.slane %v1421, %v1756
          %v1758 = vlaneseq
          %v1759 = vshrl.u32 %v1758, 7
          %v1760 = vsub.s32 7, %v1759
          %v1761 = vrot.slane %v1421, %v1760
          %v1762 = vlaneseq
          %v1763 = vshrl.u32 %v1762, 7
          %v1764 = vsub.s32 0, %v1763
          %v1765 = vrot.slane %v1524, %v1764
          %v1766 = vlaneseq
          %v1767 = vshrl.u32 %v1766, 7
          %v1768 = vsub.s32 1, %v1767
          %v1769 = vrot.slane %v1524, %v1768
          %v1770 = vlaneseq
          %v1771 = vshrl.u32 %v1770, 7
          %v1772 = vsub.s32 2, %v1771
          %v1773 = vrot.slane %v1524, %v1772
          %v1774 = vlaneseq
          %v1775 = vshrl.u32 %v1774, 7
          %v1776 = vsub.s32 3, %v1775
          %v1777 = vrot.slane %v1524, %v1776
          %v1778 = vlaneseq
          %v1779 = vshrl.u32 %v1778, 7
          %v1780 = vsub.s32 4, %v1779
          %v1781 = vrot.slane %v1524, %v1780
          %v1782 = vlaneseq
          %v1783 = vshrl.u32 %v1782, 7
          %v1784 = vsub.s32 5, %v1783
          %v1785 = vrot.slane %v1524, %v1784
          %v1786 = vlaneseq
          %v1787 = vshrl.u32 %v1786, 7
          %v1788 = vsub.s32 6, %v1787
          %v1789 = vrot.slane %v1524, %v1788
          %v1790 = vlaneseq
          %v1791 = vshrl.u32 %v1790, 7
          %v1792 = vsub.s32 7, %v1791
          %v1793 = vrot.slane %v1524, %v1792
          %v1794 = vlaneseq
          %v1795 = vshrl.u32 %v1794, 7
          %v1796 = vsub.s32 0, %v1795
          %v1797 = vrot.slane %v1627, %v1796
          %v1798 = vlaneseq
          %v1799 = vshrl.u32 %v1798, 7
          %v1800 = vsub.s32 1, %v1799
          %v1801 = vrot.slane %v1627, %v1800
          %v1802 = vlaneseq
          %v1803 = vshrl.u32 %v1802, 7
          %v1804 = vsub.s32 2, %v1803
          %v1805 = vrot.slane %v1627, %v1804
          %v1806 = vlaneseq
          %v1807 = vshrl.u32 %v1806, 7
          %v1808 = vsub.s32 3, %v1807
          %v1809 = vrot.slane %v1627, %v1808
          %v1854 = vpack.c.bf16 %v1637, %v1637
          %v1855 = vpack.c.bf16 %v1641, %v1641
          %v1856 = vpack.c.bf16 %v1645, %v1645
          %v1857 = vpack.c.bf16 %v1649, %v1649
          %v1858 = vpack.c.bf16 %v1653, %v1653
          %v1859 = vpack.c.bf16 %v1657, %v1657
          %v1860 = vpack.c.bf16 %v1661, %v1661
          %v1861 = vpack.c.bf16 %v1665, %v1665
          %v1862 = vpack.c.bf16 %v1669, %v1669
          %v1863 = vpack.c.bf16 %v1673, %v1673
          %v1864 = vpack.c.bf16 %v1677, %v1677
          %v1865 = vpack.c.bf16 %v1681, %v1681
          %v1866 = vpack.c.bf16 %v1685, %v1685
          %v1867 = vpack.c.bf16 %v1689, %v1689
          %v1868 = vpack.c.bf16 %v1693, %v1693
          %v1869 = vpack.c.bf16 %v1697, %v1697
          %v1870 = vpack.c.bf16 %v1701, %v1701
          %v1871 = vpack.c.bf16 %v1705, %v1705
          %v1872 = vpack.c.bf16 %v1709, %v1709
          %v1873 = vpack.c.bf16 %v1713, %v1713
          %v1874 = vpack.c.bf16 %v1717, %v1717
          %v1875 = vpack.c.bf16 %v1721, %v1721
          %v1876 = vpack.c.bf16 %v1725, %v1725
          %v1877 = vpack.c.bf16 %v1729, %v1729
          %v1878 = vpack.c.bf16 %v1733, %v1733
          %v1879 = vpack.c.bf16 %v1737, %v1737
          %v1880 = vpack.c.bf16 %v1741, %v1741
          %v1881 = vpack.c.bf16 %v1745, %v1745
          %v1882 = vpack.c.bf16 %v1749, %v1749
          %v1883 = vpack.c.bf16 %v1753, %v1753
          %v1884 = vpack.c.bf16 %v1757, %v1757
          %v1885 = vpack.c.bf16 %v1761, %v1761
          %v1886 = vpack.c.bf16 %v1765, %v1765
          %v1887 = vpack.c.bf16 %v1769, %v1769
          %v1888 = vpack.c.bf16 %v1773, %v1773
          %v1889 = vpack.c.bf16 %v1777, %v1777
          %v1890 = vpack.c.bf16 %v1781, %v1781
          %v1891 = vpack.c.bf16 %v1785, %v1785
          %v1892 = vpack.c.bf16 %v1789, %v1789
          %v1893 = vpack.c.bf16 %v1793, %v1793
          %v1894 = vpack.c.bf16 %v1797, %v1797
          %v1895 = vpack.c.bf16 %v1801, %v1801
          %v1896 = vpack.c.bf16 %v1805, %v1805
          %v1897 = vpack.c.bf16 %v1809, %v1809
          %v1942 = vcombine.low %v1854, %v1855
          %v1943 = vcombine.low %v1856, %v1857
          %v1944 = vcombine.low %v1858, %v1859
          %v1945 = vcombine.low %v1860, %v1861
          %v1947 = vunpack.c.l.s4 1966171168
          %v1948 = vunpack.c.0.s8 %v1947
          %v1949 = vlaneseq
          %v1950 = vshrl.u32 %v1949, 7
          %v1951 = vsub.s32 %v1948, %v1950
          %v1952 = vrot.slane %v1942, %v1951
          %v1954 = vunpack.c.l.s4 1966171168
          %v1955 = vunpack.c.0.s8 %v1954
          %v1956 = vlaneseq
          %v1957 = vshrl.u32 %v1956, 7
          %v1958 = vsub.s32 %v1955, %v1957
          %v1959 = vrot.slane %v1943, %v1958
          %v1961 = vunpack.c.l.s4 1966171168
          %v1962 = vunpack.c.0.s8 %v1961
          %v1963 = vlaneseq
          %v1964 = vshrl.u32 %v1963, 7
          %v1965 = vsub.s32 %v1962, %v1964
          %v1966 = vrot.slane %v1944, %v1965
          %v1968 = vunpack.c.l.s4 1966171168
          %v1969 = vunpack.c.0.s8 %v1968
          %v1970 = vlaneseq
          %v1971 = vshrl.u32 %v1970, 7
          %v1972 = vsub.s32 %v1969, %v1971
          %v1973 = vrot.slane %v1945, %v1972
          %v1974 = vcombine.low %v1952, %v1959
          %v1975 = vcombine.low %v1966, %v1973
          %v1977 = vunpack.c.l.s4 1966171168
          %v1978 = vunpack.c.0.s8 %v1977
          %v1979 = vlaneseq
          %v1980 = vshrl.u32 %v1979, 7
          %v1981 = vsub.s32 %v1978, %v1980
          %v1982 = vrot.slane %v1974, %v1981
          %v1984 = vunpack.c.l.s4 1966171168
          %v1985 = vunpack.c.0.s8 %v1984
          %v1986 = vlaneseq
          %v1987 = vshrl.u32 %v1986, 7
          %v1988 = vsub.s32 %v1985, %v1987
          %v1989 = vrot.slane %v1975, %v1988
          %v1990 = vcombine.low %v1982, %v1989
          %v1991 = vcombine.low %v1862, %v1863
          %v1992 = vcombine.low %v1864, %v1865
          %v1993 = vcombine.low %v1866, %v1867
          %v1994 = vcombine.low %v1868, %v1869
          %v1996 = vunpack.c.l.s4 1966171168
          %v1997 = vunpack.c.0.s8 %v1996
          %v1998 = vlaneseq
          %v1999 = vshrl.u32 %v1998, 7
          %v2000 = vsub.s32 %v1997, %v1999
          %v2001 = vrot.slane %v1991, %v2000
          %v2003 = vunpack.c.l.s4 1966171168
          %v2004 = vunpack.c.0.s8 %v2003
          %v2005 = vlaneseq
          %v2006 = vshrl.u32 %v2005, 7
          %v2007 = vsub.s32 %v2004, %v2006
          %v2008 = vrot.slane %v1992, %v2007
          %v2010 = vunpack.c.l.s4 1966171168
          %v2011 = vunpack.c.0.s8 %v2010
          %v2012 = vlaneseq
          %v2013 = vshrl.u32 %v2012, 7
          %v2014 = vsub.s32 %v2011, %v2013
          %v2015 = vrot.slane %v1993, %v2014
          %v2017 = vunpack.c.l.s4 1966171168
          %v2018 = vunpack.c.0.s8 %v2017
          %v2019 = vlaneseq
          %v2020 = vshrl.u32 %v2019, 7
          %v2021 = vsub.s32 %v2018, %v2020
          %v2022 = vrot.slane %v1994, %v2021
          %v2023 = vcombine.low %v2001, %v2008
          %v2024 = vcombine.low %v2015, %v2022
          %v2026 = vunpack.c.l.s4 1966171168
          %v2027 = vunpack.c.0.s8 %v2026
          %v2028 = vlaneseq
          %v2029 = vshrl.u32 %v2028, 7
          %v2030 = vsub.s32 %v2027, %v2029
          %v2031 = vrot.slane %v2023, %v2030
          %v2033 = vunpack.c.l.s4 1966171168
          %v2034 = vunpack.c.0.s8 %v2033
          %v2035 = vlaneseq
          %v2036 = vshrl.u32 %v2035, 7
          %v2037 = vsub.s32 %v2034, %v2036
          %v2038 = vrot.slane %v2024, %v2037
          %v2039 = vcombine.low %v2031, %v2038
          %v2040 = vcombine.low %v1870, %v1871
          %v2041 = vcombine.low %v1872, %v1873
          %v2042 = vcombine.low %v1874, %v1875
          %v2043 = vcombine.low %v1876, %v1877
          %v2045 = vunpack.c.l.s4 1966171168
          %v2046 = vunpack.c.0.s8 %v2045
          %v2047 = vlaneseq
          %v2048 = vshrl.u32 %v2047, 7
          %v2049 = vsub.s32 %v2046, %v2048
          %v2050 = vrot.slane %v2040, %v2049
          %v2052 = vunpack.c.l.s4 1966171168
          %v2053 = vunpack.c.0.s8 %v2052
          %v2054 = vlaneseq
          %v2055 = vshrl.u32 %v2054, 7
          %v2056 = vsub.s32 %v2053, %v2055
          %v2057 = vrot.slane %v2041, %v2056
          %v2059 = vunpack.c.l.s4 1966171168
          %v2060 = vunpack.c.0.s8 %v2059
          %v2061 = vlaneseq
          %v2062 = vshrl.u32 %v2061, 7
          %v2063 = vsub.s32 %v2060, %v2062
          %v2064 = vrot.slane %v2042, %v2063
          %v2066 = vunpack.c.l.s4 1966171168
          %v2067 = vunpack.c.0.s8 %v2066
          %v2068 = vlaneseq
          %v2069 = vshrl.u32 %v2068, 7
          %v2070 = vsub.s32 %v2067, %v2069
          %v2071 = vrot.slane %v2043, %v2070
          %v2072 = vcombine.low %v2050, %v2057
          %v2073 = vcombine.low %v2064, %v2071
          %v2075 = vunpack.c.l.s4 1966171168
          %v2076 = vunpack.c.0.s8 %v2075
          %v2077 = vlaneseq
          %v2078 = vshrl.u32 %v2077, 7
          %v2079 = vsub.s32 %v2076, %v2078
          %v2080 = vrot.slane %v2072, %v2079
          %v2082 = vunpack.c.l.s4 1966171168
          %v2083 = vunpack.c.0.s8 %v2082
          %v2084 = vlaneseq
          %v2085 = vshrl.u32 %v2084, 7
          %v2086 = vsub.s32 %v2083, %v2085
          %v2087 = vrot.slane %v2073, %v2086
          %v2088 = vcombine.low %v2080, %v2087
          %v2089 = vcombine.low %v1878, %v1879
          %v2090 = vcombine.low %v1880, %v1881
          %v2091 = vcombine.low %v1882, %v1883
          %v2092 = vcombine.low %v1884, %v1885
          %v2094 = vunpack.c.l.s4 1966171168
          %v2095 = vunpack.c.0.s8 %v2094
          %v2096 = vlaneseq
          %v2097 = vshrl.u32 %v2096, 7
          %v2098 = vsub.s32 %v2095, %v2097
          %v2099 = vrot.slane %v2089, %v2098
          %v2101 = vunpack.c.l.s4 1966171168
          %v2102 = vunpack.c.0.s8 %v2101
          %v2103 = vlaneseq
          %v2104 = vshrl.u32 %v2103, 7
          %v2105 = vsub.s32 %v2102, %v2104
          %v2106 = vrot.slane %v2090, %v2105
          %v2108 = vunpack.c.l.s4 1966171168
          %v2109 = vunpack.c.0.s8 %v2108
          %v2110 = vlaneseq
          %v2111 = vshrl.u32 %v2110, 7
          %v2112 = vsub.s32 %v2109, %v2111
          %v2113 = vrot.slane %v2091, %v2112
          %v2115 = vunpack.c.l.s4 1966171168
          %v2116 = vunpack.c.0.s8 %v2115
          %v2117 = vlaneseq
          %v2118 = vshrl.u32 %v2117, 7
          %v2119 = vsub.s32 %v2116, %v2118
          %v2120 = vrot.slane %v2092, %v2119
          %v2121 = vcombine.low %v2099, %v2106
          %v2122 = vcombine.low %v2113, %v2120
          %v2124 = vunpack.c.l.s4 1966171168
          %v2125 = vunpack.c.0.s8 %v2124
          %v2126 = vlaneseq
          %v2127 = vshrl.u32 %v2126, 7
          %v2128 = vsub.s32 %v2125, %v2127
          %v2129 = vrot.slane %v2121, %v2128
          %v2131 = vunpack.c.l.s4 1966171168
          %v2132 = vunpack.c.0.s8 %v2131
          %v2133 = vlaneseq
          %v2134 = vshrl.u32 %v2133, 7
          %v2135 = vsub.s32 %v2132, %v2134
          %v2136 = vrot.slane %v2122, %v2135
          %v2137 = vcombine.low %v2129, %v2136
          %v2138 = vcombine.low %v1886, %v1887
          %v2139 = vcombine.low %v1888, %v1889
          %v2140 = vcombine.low %v1890, %v1891
          %v2141 = vcombine.low %v1892, %v1893
          %v2143 = vunpack.c.l.s4 1966171168
          %v2144 = vunpack.c.0.s8 %v2143
          %v2145 = vlaneseq
          %v2146 = vshrl.u32 %v2145, 7
          %v2147 = vsub.s32 %v2144, %v2146
          %v2148 = vrot.slane %v2138, %v2147
          %v2150 = vunpack.c.l.s4 1966171168
          %v2151 = vunpack.c.0.s8 %v2150
          %v2152 = vlaneseq
          %v2153 = vshrl.u32 %v2152, 7
          %v2154 = vsub.s32 %v2151, %v2153
          %v2155 = vrot.slane %v2139, %v2154
          %v2157 = vunpack.c.l.s4 1966171168
          %v2158 = vunpack.c.0.s8 %v2157
          %v2159 = vlaneseq
          %v2160 = vshrl.u32 %v2159, 7
          %v2161 = vsub.s32 %v2158, %v2160
          %v2162 = vrot.slane %v2140, %v2161
          %v2164 = vunpack.c.l.s4 1966171168
          %v2165 = vunpack.c.0.s8 %v2164
          %v2166 = vlaneseq
          %v2167 = vshrl.u32 %v2166, 7
          %v2168 = vsub.s32 %v2165, %v2167
          %v2169 = vrot.slane %v2141, %v2168
          %v2170 = vcombine.low %v2148, %v2155
          %v2171 = vcombine.low %v2162, %v2169
          %v2173 = vunpack.c.l.s4 1966171168
          %v2174 = vunpack.c.0.s8 %v2173
          %v2175 = vlaneseq
          %v2176 = vshrl.u32 %v2175, 7
          %v2177 = vsub.s32 %v2174, %v2176
          %v2178 = vrot.slane %v2170, %v2177
          %v2180 = vunpack.c.l.s4 1966171168
          %v2181 = vunpack.c.0.s8 %v2180
          %v2182 = vlaneseq
          %v2183 = vshrl.u32 %v2182, 7
          %v2184 = vsub.s32 %v2181, %v2183
          %v2185 = vrot.slane %v2171, %v2184
          %v2186 = vcombine.low %v2178, %v2185
          %v2187 = vcombine.low %v1894, %v1895
          %v2188 = vcombine.low %v1896, %v1897
          %v2190 = vunpack.c.l.s4 1966171168
          %v2191 = vunpack.c.0.s8 %v2190
          %v2192 = vlaneseq
          %v2193 = vshrl.u32 %v2192, 7
          %v2194 = vsub.s32 %v2191, %v2193
          %v2195 = vrot.slane %v2187, %v2194
          %v2197 = vunpack.c.l.s4 1966171168
          %v2198 = vunpack.c.0.s8 %v2197
          %v2199 = vlaneseq
          %v2200 = vshrl.u32 %v2199, 7
          %v2201 = vsub.s32 %v2198, %v2200
          %v2202 = vrot.slane %v2188, %v2201
          %v2203 = vcombine.low %v2195, %v2202
          %v2205 = vunpack.c.l.s4 1966171168
          %v2206 = vunpack.c.0.s8 %v2205
          %v2207 = vlaneseq
          %v2208 = vshrl.u32 %v2207, 7
          %v2209 = vsub.s32 %v2206, %v2208
          %v2210 = vrot.slane %v2203, %v2209
          %vm2217 = vcmask 1040384
          %vm2218 = vsmask.f32 256
          %vm2219 = vmand %vm2217, %vm2218
          %vm2220 = vcmask 1041409
          %vm2221 = vsmask.f32 1280
          %vm2222 = vmand %vm2220, %vm2221
          %vm2223 = vmor %vm2222, %vm2219
          %vm2224 = vcmask 1042434
          %vm2225 = vsmask.f32 2304
          %vm2226 = vmand %vm2224, %vm2225
          %vm2227 = vmor %vm2226, %vm2223
          %vm2228 = vcmask 1043459
          %vm2229 = vsmask.f32 3328
          %vm2230 = vmand %vm2228, %vm2229
          %vm2231 = vmor %vm2230, %vm2227
          %vm2232 = vcmask 1044484
          %vm2233 = vsmask.f32 4352
          %vm2234 = vmand %vm2232, %vm2233
          %vm2235 = vmor %vm2234, %vm2231
          %vm2236 = vcmask 1045509
          %vm2237 = vsmask.f32 5376
          %vm2238 = vmand %vm2236, %vm2237
          %vm2239 = vmor %vm2238, %vm2235
          %vm2240 = vcmask 1046534
          %vm2241 = vsmask.f32 6400
          %vm2242 = vmand %vm2240, %vm2241
          %vm2243 = vmor %vm2242, %vm2239
          %vm2244 = vcmask 1047559
          %vm2245 = vsmask.f32 7424
          %vm2246 = vmand %vm2244, %vm2245
          %vm2247 = vmor %vm2246, %vm2243
          %v2248 = vld [vmem:[#allocation3] sm:$0xff]
          %v2249 = vsel %vm2247, %v1990, %v2248
          %2250 = vst [vmem:[#allocation3] sm:$0xff] %v2249
          %v2251 = vld [vmem:[#allocation3 + $0x8] sm:$0xff]
          %v2252 = vsel %vm2247, %v2039, %v2251
          %2253 = vst [vmem:[#allocation3 + $0x8] sm:$0xff] %v2252
          %v2254 = vld [vmem:[#allocation3 + $0x10] sm:$0xff]
          %v2255 = vsel %vm2247, %v2088, %v2254
          %2256 = vst [vmem:[#allocation3 + $0x10] sm:$0xff] %v2255
          %v2257 = vld [vmem:[#allocation3 + $0x18] sm:$0xff]
          %v2258 = vsel %vm2247, %v2137, %v2257
          %2259 = vst [vmem:[#allocation3 + $0x18] sm:$0xff] %v2258
          %v2260 = vld [vmem:[#allocation3 + $0x20] sm:$0xff]
          %v2261 = vsel %vm2247, %v2186, %v2260
          %2262 = vst [vmem:[#allocation3 + $0x20] sm:$0xff] %v2261
          %v2263 = vld [vmem:[#allocation3 + $0x28] sm:$0xf]
          %v2264 = vsel %vm2231, %v2210, %v2263
          %2265 = vst [vmem:[#allocation3 + $0x28] sm:$0xf] %v2264
        $region64: #{activation_maximization_forward.1} parent=51 // pred_fallthru
          _
        %p2266 = scmp.eq.s32.totalorder %s24, 2
        // Predicated region
        $region65: #{activation_maximization_forward.1} parent=51 // pred_check
          %p2267 = pneg %p2266
        $region66: #{activation_maximization_forward.1} parent=51 // pred_check_branch
          %2269 = sbr.rel (%p2267) target = $region68
        $region67: #{activation_maximization_forward.1} parent=51 // pred_region
          %v2270 = vld [vmem:[%s2] sm:$0xff]
          %v2271 = vld [vmem:[%s2 + $0x8] sm:$0xff]
          %v2272 = vld [vmem:[%s2 + $0x10] sm:$0xff]
          %v2273 = vld [vmem:[%s2 + $0x18] sm:$0xff]
          %v2274 = vld [vmem:[%s2 + $0x20] sm:$0xff]
          %v2275 = vld [vmem:[%s2 + $0x28] sm:$0xf]
          %v2276 = vand.u32 2147483647, %v2270
          %vm2277 = vcmp.le.f32.partialorder %v2276, 0.7853982
          %vm2278 = vcmp.lt.s32.totalorder %v2270, 0
          %v2279 = vand.u32 %v2270, 2139095040
          %v2280 = vshrl.u32 %v2279, 23
          %v2281 = vsub.s32 %v2280, 127
          %v2282 = vand.u32 2147483647, %v2270
          %v2283 = vand.u32 %v2282, 8388607
          %v2284 = vor.u32 %v2283, 8388608
          %v2285 = vsub.s32 0, %v2284
          %v2286 = vadd.s32 %v2281, 1
          %vm2287 = vcmp.gt.s32.totalorder %v2286, 0
          %v2288 = vsel %vm2287, %v2286, 0
          %v2289 = vshrl.u32 %v2288, 5
          %v2290 = vand.u32 %v2288, 31
          %v2291 = vsub.s32 32, %v2290
          %v2292 = vshrl.u32 683565275, %v2291
          %v2293 = vshll.u32 683565275, %v2290
          %v2294 = vshrl.u32 2475754826, %v2291
          %v2295 = vor.u32 %v2293, %v2294
          %v2296 = vshll.u32 2475754826, %v2290
          %v2297 = vshrl.u32 2131351028, %v2291
          %v2298 = vor.u32 %v2296, %v2297
          %v2299 = vshll.u32 2131351028, %v2290
          %v2300 = vshrl.u32 2102212464, %v2291
          %v2301 = vor.u32 %v2299, %v2300
          %v2302 = vshll.u32 2102212464, %v2290
          %v2303 = vshrl.u32 920167782, %v2291
          %v2304 = vor.u32 %v2302, %v2303
          %v2305 = vshll.u32 920167782, %v2290
          %v2306 = vshrl.u32 1326507024, %v2291
          %v2307 = vor.u32 %v2305, %v2306
          %vm2308 = vcmp.lt.s32.totalorder %v2289, 1
          %vm2309 = vcmp.lt.s32.totalorder %v2289, 2
          %vm2310 = vcmp.lt.s32.totalorder %v2289, 3
          %vm2311 = vcmp.lt.s32.totalorder %v2289, 4
          %v2312 = vsel %vm2308, %v2292, %v2295
          %v2313 = vsel %vm2311, %v2301, 2102212464
          %v2314 = vsel %vm2310, %v2298, %v2313
          %v2315 = vsel %vm2309, %v2312, %v2314
          %v2316 = vsel %vm2308, %v2295, %v2298
          %v2317 = vsel %vm2311, %v2304, 920167782
          %v2318 = vsel %vm2310, %v2301, %v2317
          %v2319 = vsel %vm2309, %v2316, %v2318
          %v2320 = vsel %vm2308, %v2298, %v2301
          %v2321 = vsel %vm2311, %v2307, 1326507024
          %v2322 = vsel %vm2310, %v2304, %v2321
          %v2323 = vsel %vm2309, %v2320, %v2322
          %v2324 = vshll.u32 %v2284, 8
          %v2325 = vmul.u32.u64.compose %v2324, %v2323
          %v2326 = vextract.low.u32 %v2325
          %v2327 = vextract.high.u32 %v2325
          %v2328 = vmul.u32.u64.compose %v2324, %v2319
          %v2329 = vextract.low.u32 %v2328
          %v2330 = vextract.high.u32 %v2328
          %v2331 = vmul.u32 %v2324, %v2315
          %v2332 = vadd.s32 %v2327, %v2329
          %vm2333 = vc.u32 %v2327, %v2329
          %v2334 = vadd.s32 %v2330, 1
          %v2335 = vsel %vm2333, %v2334, %v2330
          %v2336 = vadd.s32 %v2331, %v2335
          %v2337 = vadd.s32 %v2336, 536870912
          %v2338 = vshrl.u32 %v2337, 30
          %v2339 = vshll.u32 %v2338, 30
          %v2340 = vsub.s32 %v2336, %v2339
          %vm2341 = vcmp.lt.s32.totalorder %v2340, 0
          %v2342 = vsub.s32 0, %v2340
          %v2343 = vsel %vm2341, %v2342, %v2340
          %v2344 = vclz %v2343
          %v2345 = vsub.s32 %v2344, 2
          %vm2346 = vcmp.gt.s32.totalorder 0, %v2345
          %v2347 = vsel %vm2346, 0, %v2345
          %v2348 = vsub.s32 32, %v2347
          %v2349 = vshll.u32 %v2340, %v2347
          %v2350 = vshrl.u32 %v2332, %v2348
          %v2351 = vor.u32 %v2349, %v2350
          %v2352 = vsub.s32 4294967266, %v2347
          %v2353 = vadd.s32 %v2352, 127
          %v2354 = vshll.u32 %v2353, 23
          %v2355 = vor.u32 4788187, %v2354
          %v2356 = vand.u32 2147483647, %v2355
          %v2358 = vcvt.s32.f32 %v2351
          %v2359 = vmul.f32 %v2358, %v2356
          %v2360 = vxor.u32 %v2359, 2147483648
          %v2361 = vsel %vm2278, %v2360, %v2359
          %v2362 = vsub.s32 4, %v2338
          %v2363 = vsel %vm2278, %v2362, %v2338
          %v2364 = vsel %vm2277, %v2270, %v2361
          %v2365 = vsel %vm2277, 0, %v2363
          %v2366 = vcosq.f32.pop %v2364
          %v2367 = vsinq.f32.pop %v2364
          %vm2368 = vweird.f32 %v2270
          %v2369 = vadd.s32 %v2365, 3
          %v2370 = vand.u32 %v2369, 3
          %vm2371 = vcmp.lt.s32.totalorder %v2370, 2
          %vm2372 = vcmp.eq.s32.totalorder %v2370, 0
          %v2373 = vxor.u32 %v2367, 2147483648
          %v2374 = vsel %vm2372, %v2366, %v2373
          %vm2375 = vcmp.eq.s32.totalorder %v2370, 2
          %v2376 = vxor.u32 %v2366, 2147483648
          %v2377 = vsel %vm2375, %v2376, %v2367
          %v2378 = vsel %vm2371, %v2374, %v2377
          %v2379 = vsel %vm2368, nan, %v2378
          %v2380 = vand.u32 2147483647, %v2271
          %vm2381 = vcmp.le.f32.partialorder %v2380, 0.7853982
          %vm2382 = vcmp.lt.s32.totalorder %v2271, 0
          %v2383 = vand.u32 %v2271, 2139095040
          %v2384 = vshrl.u32 %v2383, 23
          %v2385 = vsub.s32 %v2384, 127
          %v2386 = vand.u32 2147483647, %v2271
          %v2387 = vand.u32 %v2386, 8388607
          %v2388 = vor.u32 %v2387, 8388608
          %v2389 = vsub.s32 0, %v2388
          %v2390 = vadd.s32 %v2385, 1
          %vm2391 = vcmp.gt.s32.totalorder %v2390, 0
          %v2392 = vsel %vm2391, %v2390, 0
          %v2393 = vshrl.u32 %v2392, 5
          %v2394 = vand.u32 %v2392, 31
          %v2395 = vsub.s32 32, %v2394
          %v2396 = vshrl.u32 683565275, %v2395
          %v2397 = vshll.u32 683565275, %v2394
          %v2398 = vshrl.u32 2475754826, %v2395
          %v2399 = vor.u32 %v2397, %v2398
          %v2400 = vshll.u32 2475754826, %v2394
          %v2401 = vshrl.u32 2131351028, %v2395
          %v2402 = vor.u32 %v2400, %v2401
          %v2403 = vshll.u32 2131351028, %v2394
          %v2404 = vshrl.u32 2102212464, %v2395
          %v2405 = vor.u32 %v2403, %v2404
          %v2406 = vshll.u32 2102212464, %v2394
          %v2407 = vshrl.u32 920167782, %v2395
          %v2408 = vor.u32 %v2406, %v2407
          %v2409 = vshll.u32 920167782, %v2394
          %v2410 = vshrl.u32 1326507024, %v2395
          %v2411 = vor.u32 %v2409, %v2410
          %vm2412 = vcmp.lt.s32.totalorder %v2393, 1
          %vm2413 = vcmp.lt.s32.totalorder %v2393, 2
          %vm2414 = vcmp.lt.s32.totalorder %v2393, 3
          %vm2415 = vcmp.lt.s32.totalorder %v2393, 4
          %v2416 = vsel %vm2412, %v2396, %v2399
          %v2417 = vsel %vm2415, %v2405, 2102212464
          %v2418 = vsel %vm2414, %v2402, %v2417
          %v2419 = vsel %vm2413, %v2416, %v2418
          %v2420 = vsel %vm2412, %v2399, %v2402
          %v2421 = vsel %vm2415, %v2408, 920167782
          %v2422 = vsel %vm2414, %v2405, %v2421
          %v2423 = vsel %vm2413, %v2420, %v2422
          %v2424 = vsel %vm2412, %v2402, %v2405
          %v2425 = vsel %vm2415, %v2411, 1326507024
          %v2426 = vsel %vm2414, %v2408, %v2425
          %v2427 = vsel %vm2413, %v2424, %v2426
          %v2428 = vshll.u32 %v2388, 8
          %v2429 = vmul.u32.u64.compose %v2428, %v2427
          %v2430 = vextract.low.u32 %v2429
          %v2431 = vextract.high.u32 %v2429
          %v2432 = vmul.u32.u64.compose %v2428, %v2423
          %v2433 = vextract.low.u32 %v2432
          %v2434 = vextract.high.u32 %v2432
          %v2435 = vmul.u32 %v2428, %v2419
          %v2436 = vadd.s32 %v2431, %v2433
          %vm2437 = vc.u32 %v2431, %v2433
          %v2438 = vadd.s32 %v2434, 1
          %v2439 = vsel %vm2437, %v2438, %v2434
          %v2440 = vadd.s32 %v2435, %v2439
          %v2441 = vadd.s32 %v2440, 536870912
          %v2442 = vshrl.u32 %v2441, 30
          %v2443 = vshll.u32 %v2442, 30
          %v2444 = vsub.s32 %v2440, %v2443
          %vm2445 = vcmp.lt.s32.totalorder %v2444, 0
          %v2446 = vsub.s32 0, %v2444
          %v2447 = vsel %vm2445, %v2446, %v2444
          %v2448 = vclz %v2447
          %v2449 = vsub.s32 %v2448, 2
          %vm2450 = vcmp.gt.s32.totalorder 0, %v2449
          %v2451 = vsel %vm2450, 0, %v2449
          %v2452 = vsub.s32 32, %v2451
          %v2453 = vshll.u32 %v2444, %v2451
          %v2454 = vshrl.u32 %v2436, %v2452
          %v2455 = vor.u32 %v2453, %v2454
          %v2456 = vsub.s32 4294967266, %v2451
          %v2457 = vadd.s32 %v2456, 127
          %v2458 = vshll.u32 %v2457, 23
          %v2459 = vor.u32 4788187, %v2458
          %v2460 = vand.u32 2147483647, %v2459
          %v2462 = vcvt.s32.f32 %v2455
          %v2463 = vmul.f32 %v2462, %v2460
          %v2464 = vxor.u32 %v2463, 2147483648
          %v2465 = vsel %vm2382, %v2464, %v2463
          %v2466 = vsub.s32 4, %v2442
          %v2467 = vsel %vm2382, %v2466, %v2442
          %v2468 = vsel %vm2381, %v2271, %v2465
          %v2469 = vsel %vm2381, 0, %v2467
          %v2470 = vcosq.f32.pop %v2468
          %v2471 = vsinq.f32.pop %v2468
          %vm2472 = vweird.f32 %v2271
          %v2473 = vadd.s32 %v2469, 3
          %v2474 = vand.u32 %v2473, 3
          %vm2475 = vcmp.lt.s32.totalorder %v2474, 2
          %vm2476 = vcmp.eq.s32.totalorder %v2474, 0
          %v2477 = vxor.u32 %v2471, 2147483648
          %v2478 = vsel %vm2476, %v2470, %v2477
          %vm2479 = vcmp.eq.s32.totalorder %v2474, 2
          %v2480 = vxor.u32 %v2470, 2147483648
          %v2481 = vsel %vm2479, %v2480, %v2471
          %v2482 = vsel %vm2475, %v2478, %v2481
          %v2483 = vsel %vm2472, nan, %v2482
          %v2484 = vand.u32 2147483647, %v2272
          %vm2485 = vcmp.le.f32.partialorder %v2484, 0.7853982
          %vm2486 = vcmp.lt.s32.totalorder %v2272, 0
          %v2487 = vand.u32 %v2272, 2139095040
          %v2488 = vshrl.u32 %v2487, 23
          %v2489 = vsub.s32 %v2488, 127
          %v2490 = vand.u32 2147483647, %v2272
          %v2491 = vand.u32 %v2490, 8388607
          %v2492 = vor.u32 %v2491, 8388608
          %v2493 = vsub.s32 0, %v2492
          %v2494 = vadd.s32 %v2489, 1
          %vm2495 = vcmp.gt.s32.totalorder %v2494, 0
          %v2496 = vsel %vm2495, %v2494, 0
          %v2497 = vshrl.u32 %v2496, 5
          %v2498 = vand.u32 %v2496, 31
          %v2499 = vsub.s32 32, %v2498
          %v2500 = vshrl.u32 683565275, %v2499
          %v2501 = vshll.u32 683565275, %v2498
          %v2502 = vshrl.u32 2475754826, %v2499
          %v2503 = vor.u32 %v2501, %v2502
          %v2504 = vshll.u32 2475754826, %v2498
          %v2505 = vshrl.u32 2131351028, %v2499
          %v2506 = vor.u32 %v2504, %v2505
          %v2507 = vshll.u32 2131351028, %v2498
          %v2508 = vshrl.u32 2102212464, %v2499
          %v2509 = vor.u32 %v2507, %v2508
          %v2510 = vshll.u32 2102212464, %v2498
          %v2511 = vshrl.u32 920167782, %v2499
          %v2512 = vor.u32 %v2510, %v2511
          %v2513 = vshll.u32 920167782, %v2498
          %v2514 = vshrl.u32 1326507024, %v2499
          %v2515 = vor.u32 %v2513, %v2514
          %vm2516 = vcmp.lt.s32.totalorder %v2497, 1
          %vm2517 = vcmp.lt.s32.totalorder %v2497, 2
          %vm2518 = vcmp.lt.s32.totalorder %v2497, 3
          %vm2519 = vcmp.lt.s32.totalorder %v2497, 4
          %v2520 = vsel %vm2516, %v2500, %v2503
          %v2521 = vsel %vm2519, %v2509, 2102212464
          %v2522 = vsel %vm2518, %v2506, %v2521
          %v2523 = vsel %vm2517, %v2520, %v2522
          %v2524 = vsel %vm2516, %v2503, %v2506
          %v2525 = vsel %vm2519, %v2512, 920167782
          %v2526 = vsel %vm2518, %v2509, %v2525
          %v2527 = vsel %vm2517, %v2524, %v2526
          %v2528 = vsel %vm2516, %v2506, %v2509
          %v2529 = vsel %vm2519, %v2515, 1326507024
          %v2530 = vsel %vm2518, %v2512, %v2529
          %v2531 = vsel %vm2517, %v2528, %v2530
          %v2532 = vshll.u32 %v2492, 8
          %v2533 = vmul.u32.u64.compose %v2532, %v2531
          %v2534 = vextract.low.u32 %v2533
          %v2535 = vextract.high.u32 %v2533
          %v2536 = vmul.u32.u64.compose %v2532, %v2527
          %v2537 = vextract.low.u32 %v2536
          %v2538 = vextract.high.u32 %v2536
          %v2539 = vmul.u32 %v2532, %v2523
          %v2540 = vadd.s32 %v2535, %v2537
          %vm2541 = vc.u32 %v2535, %v2537
          %v2542 = vadd.s32 %v2538, 1
          %v2543 = vsel %vm2541, %v2542, %v2538
          %v2544 = vadd.s32 %v2539, %v2543
          %v2545 = vadd.s32 %v2544, 536870912
          %v2546 = vshrl.u32 %v2545, 30
          %v2547 = vshll.u32 %v2546, 30
          %v2548 = vsub.s32 %v2544, %v2547
          %vm2549 = vcmp.lt.s32.totalorder %v2548, 0
          %v2550 = vsub.s32 0, %v2548
          %v2551 = vsel %vm2549, %v2550, %v2548
          %v2552 = vclz %v2551
          %v2553 = vsub.s32 %v2552, 2
          %vm2554 = vcmp.gt.s32.totalorder 0, %v2553
          %v2555 = vsel %vm2554, 0, %v2553
          %v2556 = vsub.s32 32, %v2555
          %v2557 = vshll.u32 %v2548, %v2555
          %v2558 = vshrl.u32 %v2540, %v2556
          %v2559 = vor.u32 %v2557, %v2558
          %v2560 = vsub.s32 4294967266, %v2555
          %v2561 = vadd.s32 %v2560, 127
          %v2562 = vshll.u32 %v2561, 23
          %v2563 = vor.u32 4788187, %v2562
          %v2564 = vand.u32 2147483647, %v2563
          %v2566 = vcvt.s32.f32 %v2559
          %v2567 = vmul.f32 %v2566, %v2564
          %v2568 = vxor.u32 %v2567, 2147483648
          %v2569 = vsel %vm2486, %v2568, %v2567
          %v2570 = vsub.s32 4, %v2546
          %v2571 = vsel %vm2486, %v2570, %v2546
          %v2572 = vsel %vm2485, %v2272, %v2569
          %v2573 = vsel %vm2485, 0, %v2571
          %v2574 = vcosq.f32.pop %v2572
          %v2575 = vsinq.f32.pop %v2572
          %vm2576 = vweird.f32 %v2272
          %v2577 = vadd.s32 %v2573, 3
          %v2578 = vand.u32 %v2577, 3
          %vm2579 = vcmp.lt.s32.totalorder %v2578, 2
          %vm2580 = vcmp.eq.s32.totalorder %v2578, 0
          %v2581 = vxor.u32 %v2575, 2147483648
          %v2582 = vsel %vm2580, %v2574, %v2581
          %vm2583 = vcmp.eq.s32.totalorder %v2578, 2
          %v2584 = vxor.u32 %v2574, 2147483648
          %v2585 = vsel %vm2583, %v2584, %v2575
          %v2586 = vsel %vm2579, %v2582, %v2585
          %v2587 = vsel %vm2576, nan, %v2586
          %v2588 = vand.u32 2147483647, %v2273
          %vm2589 = vcmp.le.f32.partialorder %v2588, 0.7853982
          %vm2590 = vcmp.lt.s32.totalorder %v2273, 0
          %v2591 = vand.u32 %v2273, 2139095040
          %v2592 = vshrl.u32 %v2591, 23
          %v2593 = vsub.s32 %v2592, 127
          %v2594 = vand.u32 2147483647, %v2273
          %v2595 = vand.u32 %v2594, 8388607
          %v2596 = vor.u32 %v2595, 8388608
          %v2597 = vsub.s32 0, %v2596
          %v2598 = vadd.s32 %v2593, 1
          %vm2599 = vcmp.gt.s32.totalorder %v2598, 0
          %v2600 = vsel %vm2599, %v2598, 0
          %v2601 = vshrl.u32 %v2600, 5
          %v2602 = vand.u32 %v2600, 31
          %v2603 = vsub.s32 32, %v2602
          %v2604 = vshrl.u32 683565275, %v2603
          %v2605 = vshll.u32 683565275, %v2602
          %v2606 = vshrl.u32 2475754826, %v2603
          %v2607 = vor.u32 %v2605, %v2606
          %v2608 = vshll.u32 2475754826, %v2602
          %v2609 = vshrl.u32 2131351028, %v2603
          %v2610 = vor.u32 %v2608, %v2609
          %v2611 = vshll.u32 2131351028, %v2602
          %v2612 = vshrl.u32 2102212464, %v2603
          %v2613 = vor.u32 %v2611, %v2612
          %v2614 = vshll.u32 2102212464, %v2602
          %v2615 = vshrl.u32 920167782, %v2603
          %v2616 = vor.u32 %v2614, %v2615
          %v2617 = vshll.u32 920167782, %v2602
          %v2618 = vshrl.u32 1326507024, %v2603
          %v2619 = vor.u32 %v2617, %v2618
          %vm2620 = vcmp.lt.s32.totalorder %v2601, 1
          %vm2621 = vcmp.lt.s32.totalorder %v2601, 2
          %vm2622 = vcmp.lt.s32.totalorder %v2601, 3
          %vm2623 = vcmp.lt.s32.totalorder %v2601, 4
          %v2624 = vsel %vm2620, %v2604, %v2607
          %v2625 = vsel %vm2623, %v2613, 2102212464
          %v2626 = vsel %vm2622, %v2610, %v2625
          %v2627 = vsel %vm2621, %v2624, %v2626
          %v2628 = vsel %vm2620, %v2607, %v2610
          %v2629 = vsel %vm2623, %v2616, 920167782
          %v2630 = vsel %vm2622, %v2613, %v2629
          %v2631 = vsel %vm2621, %v2628, %v2630
          %v2632 = vsel %vm2620, %v2610, %v2613
          %v2633 = vsel %vm2623, %v2619, 1326507024
          %v2634 = vsel %vm2622, %v2616, %v2633
          %v2635 = vsel %vm2621, %v2632, %v2634
          %v2636 = vshll.u32 %v2596, 8
          %v2637 = vmul.u32.u64.compose %v2636, %v2635
          %v2638 = vextract.low.u32 %v2637
          %v2639 = vextract.high.u32 %v2637
          %v2640 = vmul.u32.u64.compose %v2636, %v2631
          %v2641 = vextract.low.u32 %v2640
          %v2642 = vextract.high.u32 %v2640
          %v2643 = vmul.u32 %v2636, %v2627
          %v2644 = vadd.s32 %v2639, %v2641
          %vm2645 = vc.u32 %v2639, %v2641
          %v2646 = vadd.s32 %v2642, 1
          %v2647 = vsel %vm2645, %v2646, %v2642
          %v2648 = vadd.s32 %v2643, %v2647
          %v2649 = vadd.s32 %v2648, 536870912
          %v2650 = vshrl.u32 %v2649, 30
          %v2651 = vshll.u32 %v2650, 30
          %v2652 = vsub.s32 %v2648, %v2651
          %vm2653 = vcmp.lt.s32.totalorder %v2652, 0
          %v2654 = vsub.s32 0, %v2652
          %v2655 = vsel %vm2653, %v2654, %v2652
          %v2656 = vclz %v2655
          %v2657 = vsub.s32 %v2656, 2
          %vm2658 = vcmp.gt.s32.totalorder 0, %v2657
          %v2659 = vsel %vm2658, 0, %v2657
          %v2660 = vsub.s32 32, %v2659
          %v2661 = vshll.u32 %v2652, %v2659
          %v2662 = vshrl.u32 %v2644, %v2660
          %v2663 = vor.u32 %v2661, %v2662
          %v2664 = vsub.s32 4294967266, %v2659
          %v2665 = vadd.s32 %v2664, 127
          %v2666 = vshll.u32 %v2665, 23
          %v2667 = vor.u32 4788187, %v2666
          %v2668 = vand.u32 2147483647, %v2667
          %v2670 = vcvt.s32.f32 %v2663
          %v2671 = vmul.f32 %v2670, %v2668
          %v2672 = vxor.u32 %v2671, 2147483648
          %v2673 = vsel %vm2590, %v2672, %v2671
          %v2674 = vsub.s32 4, %v2650
          %v2675 = vsel %vm2590, %v2674, %v2650
          %v2676 = vsel %vm2589, %v2273, %v2673
          %v2677 = vsel %vm2589, 0, %v2675
          %v2678 = vcosq.f32.pop %v2676
          %v2679 = vsinq.f32.pop %v2676
          %vm2680 = vweird.f32 %v2273
          %v2681 = vadd.s32 %v2677, 3
          %v2682 = vand.u32 %v2681, 3
          %vm2683 = vcmp.lt.s32.totalorder %v2682, 2
          %vm2684 = vcmp.eq.s32.totalorder %v2682, 0
          %v2685 = vxor.u32 %v2679, 2147483648
          %v2686 = vsel %vm2684, %v2678, %v2685
          %vm2687 = vcmp.eq.s32.totalorder %v2682, 2
          %v2688 = vxor.u32 %v2678, 2147483648
          %v2689 = vsel %vm2687, %v2688, %v2679
          %v2690 = vsel %vm2683, %v2686, %v2689
          %v2691 = vsel %vm2680, nan, %v2690
          %v2692 = vand.u32 2147483647, %v2274
          %vm2693 = vcmp.le.f32.partialorder %v2692, 0.7853982
          %vm2694 = vcmp.lt.s32.totalorder %v2274, 0
          %v2695 = vand.u32 %v2274, 2139095040
          %v2696 = vshrl.u32 %v2695, 23
          %v2697 = vsub.s32 %v2696, 127
          %v2698 = vand.u32 2147483647, %v2274
          %v2699 = vand.u32 %v2698, 8388607
          %v2700 = vor.u32 %v2699, 8388608
          %v2701 = vsub.s32 0, %v2700
          %v2702 = vadd.s32 %v2697, 1
          %vm2703 = vcmp.gt.s32.totalorder %v2702, 0
          %v2704 = vsel %vm2703, %v2702, 0
          %v2705 = vshrl.u32 %v2704, 5
          %v2706 = vand.u32 %v2704, 31
          %v2707 = vsub.s32 32, %v2706
          %v2708 = vshrl.u32 683565275, %v2707
          %v2709 = vshll.u32 683565275, %v2706
          %v2710 = vshrl.u32 2475754826, %v2707
          %v2711 = vor.u32 %v2709, %v2710
          %v2712 = vshll.u32 2475754826, %v2706
          %v2713 = vshrl.u32 2131351028, %v2707
          %v2714 = vor.u32 %v2712, %v2713
          %v2715 = vshll.u32 2131351028, %v2706
          %v2716 = vshrl.u32 2102212464, %v2707
          %v2717 = vor.u32 %v2715, %v2716
          %v2718 = vshll.u32 2102212464, %v2706
          %v2719 = vshrl.u32 920167782, %v2707
          %v2720 = vor.u32 %v2718, %v2719
          %v2721 = vshll.u32 920167782, %v2706
          %v2722 = vshrl.u32 1326507024, %v2707
          %v2723 = vor.u32 %v2721, %v2722
          %vm2724 = vcmp.lt.s32.totalorder %v2705, 1
          %vm2725 = vcmp.lt.s32.totalorder %v2705, 2
          %vm2726 = vcmp.lt.s32.totalorder %v2705, 3
          %vm2727 = vcmp.lt.s32.totalorder %v2705, 4
          %v2728 = vsel %vm2724, %v2708, %v2711
          %v2729 = vsel %vm2727, %v2717, 2102212464
          %v2730 = vsel %vm2726, %v2714, %v2729
          %v2731 = vsel %vm2725, %v2728, %v2730
          %v2732 = vsel %vm2724, %v2711, %v2714
          %v2733 = vsel %vm2727, %v2720, 920167782
          %v2734 = vsel %vm2726, %v2717, %v2733
          %v2735 = vsel %vm2725, %v2732, %v2734
          %v2736 = vsel %vm2724, %v2714, %v2717
          %v2737 = vsel %vm2727, %v2723, 1326507024
          %v2738 = vsel %vm2726, %v2720, %v2737
          %v2739 = vsel %vm2725, %v2736, %v2738
          %v2740 = vshll.u32 %v2700, 8
          %v2741 = vmul.u32.u64.compose %v2740, %v2739
          %v2742 = vextract.low.u32 %v2741
          %v2743 = vextract.high.u32 %v2741
          %v2744 = vmul.u32.u64.compose %v2740, %v2735
          %v2745 = vextract.low.u32 %v2744
          %v2746 = vextract.high.u32 %v2744
          %v2747 = vmul.u32 %v2740, %v2731
          %v2748 = vadd.s32 %v2743, %v2745
          %vm2749 = vc.u32 %v2743, %v2745
          %v2750 = vadd.s32 %v2746, 1
          %v2751 = vsel %vm2749, %v2750, %v2746
          %v2752 = vadd.s32 %v2747, %v2751
          %v2753 = vadd.s32 %v2752, 536870912
          %v2754 = vshrl.u32 %v2753, 30
          %v2755 = vshll.u32 %v2754, 30
          %v2756 = vsub.s32 %v2752, %v2755
          %vm2757 = vcmp.lt.s32.totalorder %v2756, 0
          %v2758 = vsub.s32 0, %v2756
          %v2759 = vsel %vm2757, %v2758, %v2756
          %v2760 = vclz %v2759
          %v2761 = vsub.s32 %v2760, 2
          %vm2762 = vcmp.gt.s32.totalorder 0, %v2761
          %v2763 = vsel %vm2762, 0, %v2761
          %v2764 = vsub.s32 32, %v2763
          %v2765 = vshll.u32 %v2756, %v2763
          %v2766 = vshrl.u32 %v2748, %v2764
          %v2767 = vor.u32 %v2765, %v2766
          %v2768 = vsub.s32 4294967266, %v2763
          %v2769 = vadd.s32 %v2768, 127
          %v2770 = vshll.u32 %v2769, 23
          %v2771 = vor.u32 4788187, %v2770
          %v2772 = vand.u32 2147483647, %v2771
          %v2774 = vcvt.s32.f32 %v2767
          %v2775 = vmul.f32 %v2774, %v2772
          %v2776 = vxor.u32 %v2775, 2147483648
          %v2777 = vsel %vm2694, %v2776, %v2775
          %v2778 = vsub.s32 4, %v2754
          %v2779 = vsel %vm2694, %v2778, %v2754
          %v2780 = vsel %vm2693, %v2274, %v2777
          %v2781 = vsel %vm2693, 0, %v2779
          %v2782 = vcosq.f32.pop %v2780
          %v2783 = vsinq.f32.pop %v2780
          %vm2784 = vweird.f32 %v2274
          %v2785 = vadd.s32 %v2781, 3
          %v2786 = vand.u32 %v2785, 3
          %vm2787 = vcmp.lt.s32.totalorder %v2786, 2
          %vm2788 = vcmp.eq.s32.totalorder %v2786, 0
          %v2789 = vxor.u32 %v2783, 2147483648
          %v2790 = vsel %vm2788, %v2782, %v2789
          %vm2791 = vcmp.eq.s32.totalorder %v2786, 2
          %v2792 = vxor.u32 %v2782, 2147483648
          %v2793 = vsel %vm2791, %v2792, %v2783
          %v2794 = vsel %vm2787, %v2790, %v2793
          %v2795 = vsel %vm2784, nan, %v2794
          %v2796 = vand.u32 2147483647, %v2275
          %vm2797 = vcmp.le.f32.partialorder %v2796, 0.7853982
          %vm2798 = vcmp.lt.s32.totalorder %v2275, 0
          %v2799 = vand.u32 %v2275, 2139095040
          %v2800 = vshrl.u32 %v2799, 23
          %v2801 = vsub.s32 %v2800, 127
          %v2802 = vand.u32 2147483647, %v2275
          %v2803 = vand.u32 %v2802, 8388607
          %v2804 = vor.u32 %v2803, 8388608
          %v2805 = vsub.s32 0, %v2804
          %v2806 = vadd.s32 %v2801, 1
          %vm2807 = vcmp.gt.s32.totalorder %v2806, 0
          %v2808 = vsel %vm2807, %v2806, 0
          %v2809 = vshrl.u32 %v2808, 5
          %v2810 = vand.u32 %v2808, 31
          %v2811 = vsub.s32 32, %v2810
          %v2812 = vshrl.u32 683565275, %v2811
          %v2813 = vshll.u32 683565275, %v2810
          %v2814 = vshrl.u32 2475754826, %v2811
          %v2815 = vor.u32 %v2813, %v2814
          %v2816 = vshll.u32 2475754826, %v2810
          %v2817 = vshrl.u32 2131351028, %v2811
          %v2818 = vor.u32 %v2816, %v2817
          %v2819 = vshll.u32 2131351028, %v2810
          %v2820 = vshrl.u32 2102212464, %v2811
          %v2821 = vor.u32 %v2819, %v2820
          %v2822 = vshll.u32 2102212464, %v2810
          %v2823 = vshrl.u32 920167782, %v2811
          %v2824 = vor.u32 %v2822, %v2823
          %v2825 = vshll.u32 920167782, %v2810
          %v2826 = vshrl.u32 1326507024, %v2811
          %v2827 = vor.u32 %v2825, %v2826
          %vm2828 = vcmp.lt.s32.totalorder %v2809, 1
          %vm2829 = vcmp.lt.s32.totalorder %v2809, 2
          %vm2830 = vcmp.lt.s32.totalorder %v2809, 3
          %vm2831 = vcmp.lt.s32.totalorder %v2809, 4
          %v2832 = vsel %vm2828, %v2812, %v2815
          %v2833 = vsel %vm2831, %v2821, 2102212464
          %v2834 = vsel %vm2830, %v2818, %v2833
          %v2835 = vsel %vm2829, %v2832, %v2834
          %v2836 = vsel %vm2828, %v2815, %v2818
          %v2837 = vsel %vm2831, %v2824, 920167782
          %v2838 = vsel %vm2830, %v2821, %v2837
          %v2839 = vsel %vm2829, %v2836, %v2838
          %v2840 = vsel %vm2828, %v2818, %v2821
          %v2841 = vsel %vm2831, %v2827, 1326507024
          %v2842 = vsel %vm2830, %v2824, %v2841
          %v2843 = vsel %vm2829, %v2840, %v2842
          %v2844 = vshll.u32 %v2804, 8
          %v2845 = vmul.u32.u64.compose %v2844, %v2843
          %v2846 = vextract.low.u32 %v2845
          %v2847 = vextract.high.u32 %v2845
          %v2848 = vmul.u32.u64.compose %v2844, %v2839
          %v2849 = vextract.low.u32 %v2848
          %v2850 = vextract.high.u32 %v2848
          %v2851 = vmul.u32 %v2844, %v2835
          %v2852 = vadd.s32 %v2847, %v2849
          %vm2853 = vc.u32 %v2847, %v2849
          %v2854 = vadd.s32 %v2850, 1
          %v2855 = vsel %vm2853, %v2854, %v2850
          %v2856 = vadd.s32 %v2851, %v2855
          %v2857 = vadd.s32 %v2856, 536870912
          %v2858 = vshrl.u32 %v2857, 30
          %v2859 = vshll.u32 %v2858, 30
          %v2860 = vsub.s32 %v2856, %v2859
          %vm2861 = vcmp.lt.s32.totalorder %v2860, 0
          %v2862 = vsub.s32 0, %v2860
          %v2863 = vsel %vm2861, %v2862, %v2860
          %v2864 = vclz %v2863
          %v2865 = vsub.s32 %v2864, 2
          %vm2866 = vcmp.gt.s32.totalorder 0, %v2865
          %v2867 = vsel %vm2866, 0, %v2865
          %v2868 = vsub.s32 32, %v2867
          %v2869 = vshll.u32 %v2860, %v2867
          %v2870 = vshrl.u32 %v2852, %v2868
          %v2871 = vor.u32 %v2869, %v2870
          %v2872 = vsub.s32 4294967266, %v2867
          %v2873 = vadd.s32 %v2872, 127
          %v2874 = vshll.u32 %v2873, 23
          %v2875 = vor.u32 4788187, %v2874
          %v2876 = vand.u32 2147483647, %v2875
          %v2878 = vcvt.s32.f32 %v2871
          %v2879 = vmul.f32 %v2878, %v2876
          %v2880 = vxor.u32 %v2879, 2147483648
          %v2881 = vsel %vm2798, %v2880, %v2879
          %v2882 = vsub.s32 4, %v2858
          %v2883 = vsel %vm2798, %v2882, %v2858
          %v2884 = vsel %vm2797, %v2275, %v2881
          %v2885 = vsel %vm2797, 0, %v2883
          %v2886 = vcosq.f32.pop %v2884
          %v2887 = vsinq.f32.pop %v2884
          %vm2888 = vweird.f32 %v2275
          %v2889 = vadd.s32 %v2885, 3
          %v2890 = vand.u32 %v2889, 3
          %vm2891 = vcmp.lt.s32.totalorder %v2890, 2
          %vm2892 = vcmp.eq.s32.totalorder %v2890, 0
          %v2893 = vxor.u32 %v2887, 2147483648
          %v2894 = vsel %vm2892, %v2886, %v2893
          %vm2895 = vcmp.eq.s32.totalorder %v2890, 2
          %v2896 = vxor.u32 %v2886, 2147483648
          %v2897 = vsel %vm2895, %v2896, %v2887
          %v2898 = vsel %vm2891, %v2894, %v2897
          %v2899 = vsel %vm2888, nan, %v2898
          %v2906 = vlaneseq
          %v2907 = vshrl.u32 %v2906, 7
          %v2908 = vsub.s32 0, %v2907
          %v2909 = vrot.slane %v2379, %v2908
          %v2910 = vlaneseq
          %v2911 = vshrl.u32 %v2910, 7
          %v2912 = vsub.s32 1, %v2911
          %v2913 = vrot.slane %v2379, %v2912
          %v2914 = vlaneseq
          %v2915 = vshrl.u32 %v2914, 7
          %v2916 = vsub.s32 2, %v2915
          %v2917 = vrot.slane %v2379, %v2916
          %v2918 = vlaneseq
          %v2919 = vshrl.u32 %v2918, 7
          %v2920 = vsub.s32 3, %v2919
          %v2921 = vrot.slane %v2379, %v2920
          %v2922 = vlaneseq
          %v2923 = vshrl.u32 %v2922, 7
          %v2924 = vsub.s32 4, %v2923
          %v2925 = vrot.slane %v2379, %v2924
          %v2926 = vlaneseq
          %v2927 = vshrl.u32 %v2926, 7
          %v2928 = vsub.s32 5, %v2927
          %v2929 = vrot.slane %v2379, %v2928
          %v2930 = vlaneseq
          %v2931 = vshrl.u32 %v2930, 7
          %v2932 = vsub.s32 6, %v2931
          %v2933 = vrot.slane %v2379, %v2932
          %v2934 = vlaneseq
          %v2935 = vshrl.u32 %v2934, 7
          %v2936 = vsub.s32 7, %v2935
          %v2937 = vrot.slane %v2379, %v2936
          %v2938 = vlaneseq
          %v2939 = vshrl.u32 %v2938, 7
          %v2940 = vsub.s32 0, %v2939
          %v2941 = vrot.slane %v2483, %v2940
          %v2942 = vlaneseq
          %v2943 = vshrl.u32 %v2942, 7
          %v2944 = vsub.s32 1, %v2943
          %v2945 = vrot.slane %v2483, %v2944
          %v2946 = vlaneseq
          %v2947 = vshrl.u32 %v2946, 7
          %v2948 = vsub.s32 2, %v2947
          %v2949 = vrot.slane %v2483, %v2948
          %v2950 = vlaneseq
          %v2951 = vshrl.u32 %v2950, 7
          %v2952 = vsub.s32 3, %v2951
          %v2953 = vrot.slane %v2483, %v2952
          %v2954 = vlaneseq
          %v2955 = vshrl.u32 %v2954, 7
          %v2956 = vsub.s32 4, %v2955
          %v2957 = vrot.slane %v2483, %v2956
          %v2958 = vlaneseq
          %v2959 = vshrl.u32 %v2958, 7
          %v2960 = vsub.s32 5, %v2959
          %v2961 = vrot.slane %v2483, %v2960
          %v2962 = vlaneseq
          %v2963 = vshrl.u32 %v2962, 7
          %v2964 = vsub.s32 6, %v2963
          %v2965 = vrot.slane %v2483, %v2964
          %v2966 = vlaneseq
          %v2967 = vshrl.u32 %v2966, 7
          %v2968 = vsub.s32 7, %v2967
          %v2969 = vrot.slane %v2483, %v2968
          %v2970 = vlaneseq
          %v2971 = vshrl.u32 %v2970, 7
          %v2972 = vsub.s32 0, %v2971
          %v2973 = vrot.slane %v2587, %v2972
          %v2974 = vlaneseq
          %v2975 = vshrl.u32 %v2974, 7
          %v2976 = vsub.s32 1, %v2975
          %v2977 = vrot.slane %v2587, %v2976
          %v2978 = vlaneseq
          %v2979 = vshrl.u32 %v2978, 7
          %v2980 = vsub.s32 2, %v2979
          %v2981 = vrot.slane %v2587, %v2980
          %v2982 = vlaneseq
          %v2983 = vshrl.u32 %v2982, 7
          %v2984 = vsub.s32 3, %v2983
          %v2985 = vrot.slane %v2587, %v2984
          %v2986 = vlaneseq
          %v2987 = vshrl.u32 %v2986, 7
          %v2988 = vsub.s32 4, %v2987
          %v2989 = vrot.slane %v2587, %v2988
          %v2990 = vlaneseq
          %v2991 = vshrl.u32 %v2990, 7
          %v2992 = vsub.s32 5, %v2991
          %v2993 = vrot.slane %v2587, %v2992
          %v2994 = vlaneseq
          %v2995 = vshrl.u32 %v2994, 7
          %v2996 = vsub.s32 6, %v2995
          %v2997 = vrot.slane %v2587, %v2996
          %v2998 = vlaneseq
          %v2999 = vshrl.u32 %v2998, 7
          %v3000 = vsub.s32 7, %v2999
          %v3001 = vrot.slane %v2587, %v3000
          %v3002 = vlaneseq
          %v3003 = vshrl.u32 %v3002, 7
          %v3004 = vsub.s32 0, %v3003
          %v3005 = vrot.slane %v2691, %v3004
          %v3006 = vlaneseq
          %v3007 = vshrl.u32 %v3006, 7
          %v3008 = vsub.s32 1, %v3007
          %v3009 = vrot.slane %v2691, %v3008
          %v3010 = vlaneseq
          %v3011 = vshrl.u32 %v3010, 7
          %v3012 = vsub.s32 2, %v3011
          %v3013 = vrot.slane %v2691, %v3012
          %v3014 = vlaneseq
          %v3015 = vshrl.u32 %v3014, 7
          %v3016 = vsub.s32 3, %v3015
          %v3017 = vrot.slane %v2691, %v3016
          %v3018 = vlaneseq
          %v3019 = vshrl.u32 %v3018, 7
          %v3020 = vsub.s32 4, %v3019
          %v3021 = vrot.slane %v2691, %v3020
          %v3022 = vlaneseq
          %v3023 = vshrl.u32 %v3022, 7
          %v3024 = vsub.s32 5, %v3023
          %v3025 = vrot.slane %v2691, %v3024
          %v3026 = vlaneseq
          %v3027 = vshrl.u32 %v3026, 7
          %v3028 = vsub.s32 6, %v3027
          %v3029 = vrot.slane %v2691, %v3028
          %v3030 = vlaneseq
          %v3031 = vshrl.u32 %v3030, 7
          %v3032 = vsub.s32 7, %v3031
          %v3033 = vrot.slane %v2691, %v3032
          %v3034 = vlaneseq
          %v3035 = vshrl.u32 %v3034, 7
          %v3036 = vsub.s32 0, %v3035
          %v3037 = vrot.slane %v2795, %v3036
          %v3038 = vlaneseq
          %v3039 = vshrl.u32 %v3038, 7
          %v3040 = vsub.s32 1, %v3039
          %v3041 = vrot.slane %v2795, %v3040
          %v3042 = vlaneseq
          %v3043 = vshrl.u32 %v3042, 7
          %v3044 = vsub.s32 2, %v3043
          %v3045 = vrot.slane %v2795, %v3044
          %v3046 = vlaneseq
          %v3047 = vshrl.u32 %v3046, 7
          %v3048 = vsub.s32 3, %v3047
          %v3049 = vrot.slane %v2795, %v3048
          %v3050 = vlaneseq
          %v3051 = vshrl.u32 %v3050, 7
          %v3052 = vsub.s32 4, %v3051
          %v3053 = vrot.slane %v2795, %v3052
          %v3054 = vlaneseq
          %v3055 = vshrl.u32 %v3054, 7
          %v3056 = vsub.s32 5, %v3055
          %v3057 = vrot.slane %v2795, %v3056
          %v3058 = vlaneseq
          %v3059 = vshrl.u32 %v3058, 7
          %v3060 = vsub.s32 6, %v3059
          %v3061 = vrot.slane %v2795, %v3060
          %v3062 = vlaneseq
          %v3063 = vshrl.u32 %v3062, 7
          %v3064 = vsub.s32 7, %v3063
          %v3065 = vrot.slane %v2795, %v3064
          %v3066 = vlaneseq
          %v3067 = vshrl.u32 %v3066, 7
          %v3068 = vsub.s32 0, %v3067
          %v3069 = vrot.slane %v2899, %v3068
          %v3070 = vlaneseq
          %v3071 = vshrl.u32 %v3070, 7
          %v3072 = vsub.s32 1, %v3071
          %v3073 = vrot.slane %v2899, %v3072
          %v3074 = vlaneseq
          %v3075 = vshrl.u32 %v3074, 7
          %v3076 = vsub.s32 2, %v3075
          %v3077 = vrot.slane %v2899, %v3076
          %v3078 = vlaneseq
          %v3079 = vshrl.u32 %v3078, 7
          %v3080 = vsub.s32 3, %v3079
          %v3081 = vrot.slane %v2899, %v3080
          %v3126 = vpack.c.bf16 %v2909, %v2909
          %v3127 = vpack.c.bf16 %v2913, %v2913
          %v3128 = vpack.c.bf16 %v2917, %v2917
          %v3129 = vpack.c.bf16 %v2921, %v2921
          %v3130 = vpack.c.bf16 %v2925, %v2925
          %v3131 = vpack.c.bf16 %v2929, %v2929
          %v3132 = vpack.c.bf16 %v2933, %v2933
          %v3133 = vpack.c.bf16 %v2937, %v2937
          %v3134 = vpack.c.bf16 %v2941, %v2941
          %v3135 = vpack.c.bf16 %v2945, %v2945
          %v3136 = vpack.c.bf16 %v2949, %v2949
          %v3137 = vpack.c.bf16 %v2953, %v2953
          %v3138 = vpack.c.bf16 %v2957, %v2957
          %v3139 = vpack.c.bf16 %v2961, %v2961
          %v3140 = vpack.c.bf16 %v2965, %v2965
          %v3141 = vpack.c.bf16 %v2969, %v2969
          %v3142 = vpack.c.bf16 %v2973, %v2973
          %v3143 = vpack.c.bf16 %v2977, %v2977
          %v3144 = vpack.c.bf16 %v2981, %v2981
          %v3145 = vpack.c.bf16 %v2985, %v2985
          %v3146 = vpack.c.bf16 %v2989, %v2989
          %v3147 = vpack.c.bf16 %v2993, %v2993
          %v3148 = vpack.c.bf16 %v2997, %v2997
          %v3149 = vpack.c.bf16 %v3001, %v3001
          %v3150 = vpack.c.bf16 %v3005, %v3005
          %v3151 = vpack.c.bf16 %v3009, %v3009
          %v3152 = vpack.c.bf16 %v3013, %v3013
          %v3153 = vpack.c.bf16 %v3017, %v3017
          %v3154 = vpack.c.bf16 %v3021, %v3021
          %v3155 = vpack.c.bf16 %v3025, %v3025
          %v3156 = vpack.c.bf16 %v3029, %v3029
          %v3157 = vpack.c.bf16 %v3033, %v3033
          %v3158 = vpack.c.bf16 %v3037, %v3037
          %v3159 = vpack.c.bf16 %v3041, %v3041
          %v3160 = vpack.c.bf16 %v3045, %v3045
          %v3161 = vpack.c.bf16 %v3049, %v3049
          %v3162 = vpack.c.bf16 %v3053, %v3053
          %v3163 = vpack.c.bf16 %v3057, %v3057
          %v3164 = vpack.c.bf16 %v3061, %v3061
          %v3165 = vpack.c.bf16 %v3065, %v3065
          %v3166 = vpack.c.bf16 %v3069, %v3069
          %v3167 = vpack.c.bf16 %v3073, %v3073
          %v3168 = vpack.c.bf16 %v3077, %v3077
          %v3169 = vpack.c.bf16 %v3081, %v3081
          %v3214 = vcombine.low %v3126, %v3127
          %v3215 = vcombine.low %v3128, %v3129
          %v3216 = vcombine.low %v3130, %v3131
          %v3217 = vcombine.low %v3132, %v3133
          %v3219 = vunpack.c.l.s4 1966171168
          %v3220 = vunpack.c.0.s8 %v3219
          %v3221 = vlaneseq
          %v3222 = vshrl.u32 %v3221, 7
          %v3223 = vsub.s32 %v3220, %v3222
          %v3224 = vrot.slane %v3214, %v3223
          %v3226 = vunpack.c.l.s4 1966171168
          %v3227 = vunpack.c.0.s8 %v3226
          %v3228 = vlaneseq
          %v3229 = vshrl.u32 %v3228, 7
          %v3230 = vsub.s32 %v3227, %v3229
          %v3231 = vrot.slane %v3215, %v3230
          %v3233 = vunpack.c.l.s4 1966171168
          %v3234 = vunpack.c.0.s8 %v3233
          %v3235 = vlaneseq
          %v3236 = vshrl.u32 %v3235, 7
          %v3237 = vsub.s32 %v3234, %v3236
          %v3238 = vrot.slane %v3216, %v3237
          %v3240 = vunpack.c.l.s4 1966171168
          %v3241 = vunpack.c.0.s8 %v3240
          %v3242 = vlaneseq
          %v3243 = vshrl.u32 %v3242, 7
          %v3244 = vsub.s32 %v3241, %v3243
          %v3245 = vrot.slane %v3217, %v3244
          %v3246 = vcombine.low %v3224, %v3231
          %v3247 = vcombine.low %v3238, %v3245
          %v3249 = vunpack.c.l.s4 1966171168
          %v3250 = vunpack.c.0.s8 %v3249
          %v3251 = vlaneseq
          %v3252 = vshrl.u32 %v3251, 7
          %v3253 = vsub.s32 %v3250, %v3252
          %v3254 = vrot.slane %v3246, %v3253
          %v3256 = vunpack.c.l.s4 1966171168
          %v3257 = vunpack.c.0.s8 %v3256
          %v3258 = vlaneseq
          %v3259 = vshrl.u32 %v3258, 7
          %v3260 = vsub.s32 %v3257, %v3259
          %v3261 = vrot.slane %v3247, %v3260
          %v3262 = vcombine.low %v3254, %v3261
          %v3263 = vcombine.low %v3134, %v3135
          %v3264 = vcombine.low %v3136, %v3137
          %v3265 = vcombine.low %v3138, %v3139
          %v3266 = vcombine.low %v3140, %v3141
          %v3268 = vunpack.c.l.s4 1966171168
          %v3269 = vunpack.c.0.s8 %v3268
          %v3270 = vlaneseq
          %v3271 = vshrl.u32 %v3270, 7
          %v3272 = vsub.s32 %v3269, %v3271
          %v3273 = vrot.slane %v3263, %v3272
          %v3275 = vunpack.c.l.s4 1966171168
          %v3276 = vunpack.c.0.s8 %v3275
          %v3277 = vlaneseq
          %v3278 = vshrl.u32 %v3277, 7
          %v3279 = vsub.s32 %v3276, %v3278
          %v3280 = vrot.slane %v3264, %v3279
          %v3282 = vunpack.c.l.s4 1966171168
          %v3283 = vunpack.c.0.s8 %v3282
          %v3284 = vlaneseq
          %v3285 = vshrl.u32 %v3284, 7
          %v3286 = vsub.s32 %v3283, %v3285
          %v3287 = vrot.slane %v3265, %v3286
          %v3289 = vunpack.c.l.s4 1966171168
          %v3290 = vunpack.c.0.s8 %v3289
          %v3291 = vlaneseq
          %v3292 = vshrl.u32 %v3291, 7
          %v3293 = vsub.s32 %v3290, %v3292
          %v3294 = vrot.slane %v3266, %v3293
          %v3295 = vcombine.low %v3273, %v3280
          %v3296 = vcombine.low %v3287, %v3294
          %v3298 = vunpack.c.l.s4 1966171168
          %v3299 = vunpack.c.0.s8 %v3298
          %v3300 = vlaneseq
          %v3301 = vshrl.u32 %v3300, 7
          %v3302 = vsub.s32 %v3299, %v3301
          %v3303 = vrot.slane %v3295, %v3302
          %v3305 = vunpack.c.l.s4 1966171168
          %v3306 = vunpack.c.0.s8 %v3305
          %v3307 = vlaneseq
          %v3308 = vshrl.u32 %v3307, 7
          %v3309 = vsub.s32 %v3306, %v3308
          %v3310 = vrot.slane %v3296, %v3309
          %v3311 = vcombine.low %v3303, %v3310
          %v3312 = vcombine.low %v3142, %v3143
          %v3313 = vcombine.low %v3144, %v3145
          %v3314 = vcombine.low %v3146, %v3147
          %v3315 = vcombine.low %v3148, %v3149
          %v3317 = vunpack.c.l.s4 1966171168
          %v3318 = vunpack.c.0.s8 %v3317
          %v3319 = vlaneseq
          %v3320 = vshrl.u32 %v3319, 7
          %v3321 = vsub.s32 %v3318, %v3320
          %v3322 = vrot.slane %v3312, %v3321
          %v3324 = vunpack.c.l.s4 1966171168
          %v3325 = vunpack.c.0.s8 %v3324
          %v3326 = vlaneseq
          %v3327 = vshrl.u32 %v3326, 7
          %v3328 = vsub.s32 %v3325, %v3327
          %v3329 = vrot.slane %v3313, %v3328
          %v3331 = vunpack.c.l.s4 1966171168
          %v3332 = vunpack.c.0.s8 %v3331
          %v3333 = vlaneseq
          %v3334 = vshrl.u32 %v3333, 7
          %v3335 = vsub.s32 %v3332, %v3334
          %v3336 = vrot.slane %v3314, %v3335
          %v3338 = vunpack.c.l.s4 1966171168
          %v3339 = vunpack.c.0.s8 %v3338
          %v3340 = vlaneseq
          %v3341 = vshrl.u32 %v3340, 7
          %v3342 = vsub.s32 %v3339, %v3341
          %v3343 = vrot.slane %v3315, %v3342
          %v3344 = vcombine.low %v3322, %v3329
          %v3345 = vcombine.low %v3336, %v3343
          %v3347 = vunpack.c.l.s4 1966171168
          %v3348 = vunpack.c.0.s8 %v3347
          %v3349 = vlaneseq
          %v3350 = vshrl.u32 %v3349, 7
          %v3351 = vsub.s32 %v3348, %v3350
          %v3352 = vrot.slane %v3344, %v3351
          %v3354 = vunpack.c.l.s4 1966171168
          %v3355 = vunpack.c.0.s8 %v3354
          %v3356 = vlaneseq
          %v3357 = vshrl.u32 %v3356, 7
          %v3358 = vsub.s32 %v3355, %v3357
          %v3359 = vrot.slane %v3345, %v3358
          %v3360 = vcombine.low %v3352, %v3359
          %v3361 = vcombine.low %v3150, %v3151
          %v3362 = vcombine.low %v3152, %v3153
          %v3363 = vcombine.low %v3154, %v3155
          %v3364 = vcombine.low %v3156, %v3157
          %v3366 = vunpack.c.l.s4 1966171168
          %v3367 = vunpack.c.0.s8 %v3366
          %v3368 = vlaneseq
          %v3369 = vshrl.u32 %v3368, 7
          %v3370 = vsub.s32 %v3367, %v3369
          %v3371 = vrot.slane %v3361, %v3370
          %v3373 = vunpack.c.l.s4 1966171168
          %v3374 = vunpack.c.0.s8 %v3373
          %v3375 = vlaneseq
          %v3376 = vshrl.u32 %v3375, 7
          %v3377 = vsub.s32 %v3374, %v3376
          %v3378 = vrot.slane %v3362, %v3377
          %v3380 = vunpack.c.l.s4 1966171168
          %v3381 = vunpack.c.0.s8 %v3380
          %v3382 = vlaneseq
          %v3383 = vshrl.u32 %v3382, 7
          %v3384 = vsub.s32 %v3381, %v3383
          %v3385 = vrot.slane %v3363, %v3384
          %v3387 = vunpack.c.l.s4 1966171168
          %v3388 = vunpack.c.0.s8 %v3387
          %v3389 = vlaneseq
          %v3390 = vshrl.u32 %v3389, 7
          %v3391 = vsub.s32 %v3388, %v3390
          %v3392 = vrot.slane %v3364, %v3391
          %v3393 = vcombine.low %v3371, %v3378
          %v3394 = vcombine.low %v3385, %v3392
          %v3396 = vunpack.c.l.s4 1966171168
          %v3397 = vunpack.c.0.s8 %v3396
          %v3398 = vlaneseq
          %v3399 = vshrl.u32 %v3398, 7
          %v3400 = vsub.s32 %v3397, %v3399
          %v3401 = vrot.slane %v3393, %v3400
          %v3403 = vunpack.c.l.s4 1966171168
          %v3404 = vunpack.c.0.s8 %v3403
          %v3405 = vlaneseq
          %v3406 = vshrl.u32 %v3405, 7
          %v3407 = vsub.s32 %v3404, %v3406
          %v3408 = vrot.slane %v3394, %v3407
          %v3409 = vcombine.low %v3401, %v3408
          %v3410 = vcombine.low %v3158, %v3159
          %v3411 = vcombine.low %v3160, %v3161
          %v3412 = vcombine.low %v3162, %v3163
          %v3413 = vcombine.low %v3164, %v3165
          %v3415 = vunpack.c.l.s4 1966171168
          %v3416 = vunpack.c.0.s8 %v3415
          %v3417 = vlaneseq
          %v3418 = vshrl.u32 %v3417, 7
          %v3419 = vsub.s32 %v3416, %v3418
          %v3420 = vrot.slane %v3410, %v3419
          %v3422 = vunpack.c.l.s4 1966171168
          %v3423 = vunpack.c.0.s8 %v3422
          %v3424 = vlaneseq
          %v3425 = vshrl.u32 %v3424, 7
          %v3426 = vsub.s32 %v3423, %v3425
          %v3427 = vrot.slane %v3411, %v3426
          %v3429 = vunpack.c.l.s4 1966171168
          %v3430 = vunpack.c.0.s8 %v3429
          %v3431 = vlaneseq
          %v3432 = vshrl.u32 %v3431, 7
          %v3433 = vsub.s32 %v3430, %v3432
          %v3434 = vrot.slane %v3412, %v3433
          %v3436 = vunpack.c.l.s4 1966171168
          %v3437 = vunpack.c.0.s8 %v3436
          %v3438 = vlaneseq
          %v3439 = vshrl.u32 %v3438, 7
          %v3440 = vsub.s32 %v3437, %v3439
          %v3441 = vrot.slane %v3413, %v3440
          %v3442 = vcombine.low %v3420, %v3427
          %v3443 = vcombine.low %v3434, %v3441
          %v3445 = vunpack.c.l.s4 1966171168
          %v3446 = vunpack.c.0.s8 %v3445
          %v3447 = vlaneseq
          %v3448 = vshrl.u32 %v3447, 7
          %v3449 = vsub.s32 %v3446, %v3448
          %v3450 = vrot.slane %v3442, %v3449
          %v3452 = vunpack.c.l.s4 1966171168
          %v3453 = vunpack.c.0.s8 %v3452
          %v3454 = vlaneseq
          %v3455 = vshrl.u32 %v3454, 7
          %v3456 = vsub.s32 %v3453, %v3455
          %v3457 = vrot.slane %v3443, %v3456
          %v3458 = vcombine.low %v3450, %v3457
          %v3459 = vcombine.low %v3166, %v3167
          %v3460 = vcombine.low %v3168, %v3169
          %v3462 = vunpack.c.l.s4 1966171168
          %v3463 = vunpack.c.0.s8 %v3462
          %v3464 = vlaneseq
          %v3465 = vshrl.u32 %v3464, 7
          %v3466 = vsub.s32 %v3463, %v3465
          %v3467 = vrot.slane %v3459, %v3466
          %v3469 = vunpack.c.l.s4 1966171168
          %v3470 = vunpack.c.0.s8 %v3469
          %v3471 = vlaneseq
          %v3472 = vshrl.u32 %v3471, 7
          %v3473 = vsub.s32 %v3470, %v3472
          %v3474 = vrot.slane %v3460, %v3473
          %v3475 = vcombine.low %v3467, %v3474
          %v3477 = vunpack.c.l.s4 1966171168
          %v3478 = vunpack.c.0.s8 %v3477
          %v3479 = vlaneseq
          %v3480 = vshrl.u32 %v3479, 7
          %v3481 = vsub.s32 %v3478, %v3480
          %v3482 = vrot.slane %v3475, %v3481
          %vm3489 = vcmask 1040384
          %vm3490 = vsmask.f32 256
          %vm3491 = vmand %vm3489, %vm3490
          %vm3492 = vcmask 1041409
          %vm3493 = vsmask.f32 1280
          %vm3494 = vmand %vm3492, %vm3493
          %vm3495 = vmor %vm3494, %vm3491
          %vm3496 = vcmask 1042434
          %vm3497 = vsmask.f32 2304
          %vm3498 = vmand %vm3496, %vm3497
          %vm3499 = vmor %vm3498, %vm3495
          %vm3500 = vcmask 1043459
          %vm3501 = vsmask.f32 3328
          %vm3502 = vmand %vm3500, %vm3501
          %vm3503 = vmor %vm3502, %vm3499
          %vm3504 = vcmask 1044484
          %vm3505 = vsmask.f32 4352
          %vm3506 = vmand %vm3504, %vm3505
          %vm3507 = vmor %vm3506, %vm3503
          %vm3508 = vcmask 1045509
          %vm3509 = vsmask.f32 5376
          %vm3510 = vmand %vm3508, %vm3509
          %vm3511 = vmor %vm3510, %vm3507
          %vm3512 = vcmask 1046534
          %vm3513 = vsmask.f32 6400
          %vm3514 = vmand %vm3512, %vm3513
          %vm3515 = vmor %vm3514, %vm3511
          %vm3516 = vcmask 1047559
          %vm3517 = vsmask.f32 7424
          %vm3518 = vmand %vm3516, %vm3517
          %vm3519 = vmor %vm3518, %vm3515
          %v3520 = vld [vmem:[#allocation3] sm:$0xff]
          %v3521 = vsel %vm3519, %v3262, %v3520
          %3522 = vst [vmem:[#allocation3] sm:$0xff] %v3521
          %v3523 = vld [vmem:[#allocation3 + $0x8] sm:$0xff]
          %v3524 = vsel %vm3519, %v3311, %v3523
          %3525 = vst [vmem:[#allocation3 + $0x8] sm:$0xff] %v3524
          %v3526 = vld [vmem:[#allocation3 + $0x10] sm:$0xff]
          %v3527 = vsel %vm3519, %v3360, %v3526
          %3528 = vst [vmem:[#allocation3 + $0x10] sm:$0xff] %v3527
          %v3529 = vld [vmem:[#allocation3 + $0x18] sm:$0xff]
          %v3530 = vsel %vm3519, %v3409, %v3529
          %3531 = vst [vmem:[#allocation3 + $0x18] sm:$0xff] %v3530
          %v3532 = vld [vmem:[#allocation3 + $0x20] sm:$0xff]
          %v3533 = vsel %vm3519, %v3458, %v3532
          %3534 = vst [vmem:[#allocation3 + $0x20] sm:$0xff] %v3533
          %v3535 = vld [vmem:[#allocation3 + $0x28] sm:$0xf]
          %v3536 = vsel %vm3503, %v3482, %v3535
          %3537 = vst [vmem:[#allocation3 + $0x28] sm:$0xf] %v3536
        $region68: #{activation_maximization_forward.1} parent=51 // pred_fallthru
          _
        %v3538 = vld [vmem:[#allocation2] sm:$0x1]
        %v3539 = vld [vmem:[#allocation3] sm:$0xff]
        %v3540 = vld [vmem:[#allocation3 + $0x8] sm:$0xff]
        %v3541 = vld [vmem:[#allocation3 + $0x10] sm:$0xff]
        %v3542 = vld [vmem:[#allocation3 + $0x18] sm:$0xff]
        %v3543 = vld [vmem:[#allocation3 + $0x20] sm:$0xff]
        %v3544 = vld [vmem:[#allocation3 + $0x28] sm:$0xf]
        %v3545 = vld [vmem:[%s332] sm:$0xff]
        %v3546 = vld [vmem:[%s332 + $0x8] sm:$0xff]
        %v3547 = vld [vmem:[%s332 + $0x10] sm:$0xff]
        %v3548 = vld [vmem:[%s332 + $0x18] sm:$0xff]
        %v3549 = vld [vmem:[%s332 + $0x20] sm:$0xff]
        %v3550 = vld [vmem:[%s332 + $0x28] sm:$0xff]
        %v3551 = vld [vmem:[%s332 + $0x30] sm:$0xff]
        %v3552 = vld [vmem:[%s332 + $0x38] sm:$0xff]
        %v3553 = vld [vmem:[%s332 + $0x40] sm:$0xff]
        %v3554 = vld [vmem:[%s332 + $0x48] sm:$0xff]
        %v3555 = vld [vmem:[%s332 + $0x50] sm:$0xff]
        %v3556 = vld [vmem:[%s332 + $0x58] sm:$0xff]
        %v3557 = vld [vmem:[%s332 + $0x60] sm:$0xff]
        %v3558 = vld [vmem:[%s332 + $0x68] sm:$0xff]
        %v3559 = vld [vmem:[%s332 + $0x70] sm:$0xff]
        %v3560 = vld [vmem:[%s332 + $0x78] sm:$0xff]
        %v3561 = vld [vmem:[%s332 + $0x80] sm:$0xff]
        %v3562 = vld [vmem:[%s332 + $0x88] sm:$0xff]
        %v3563 = vld [vmem:[%s332 + $0x90] sm:$0xff]
        %v3564 = vld [vmem:[%s332 + $0x98] sm:$0xff]
        %v3565 = vld [vmem:[%s332 + $0xa0] sm:$0xff]
        %v3566 = vld [vmem:[%s332 + $0xa8] sm:$0xff]
        %v3567 = vld [vmem:[%s332 + $0xb0] sm:$0xff]
        %v3568 = vld [vmem:[%s332 + $0xb8] sm:$0xff]
        %v3569 = vld [vmem:[%s332 + $0xc0] sm:$0xff]
        %v3570 = vld [vmem:[%s332 + $0xc8] sm:$0xff]
        %v3571 = vld [vmem:[%s332 + $0xd0] sm:$0xff]
        %v3572 = vld [vmem:[%s332 + $0xd8] sm:$0xff]
        %v3573 = vld [vmem:[%s332 + $0xe0] sm:$0xff]
        %v3574 = vld [vmem:[%s332 + $0xe8] sm:$0xff]
        %v3575 = vld [vmem:[%s332 + $0xf0] sm:$0xff]
        %v3576 = vld [vmem:[%s332 + $0xf8] sm:$0xff]
        %v3577 = vld [vmem:[%s332 + $0x100] sm:$0xff]
        %v3578 = vld [vmem:[%s332 + $0x108] sm:$0xff]
        %v3579 = vld [vmem:[%s332 + $0x110] sm:$0xff]
        %v3580 = vld [vmem:[%s332 + $0x118] sm:$0xff]
        %v3581 = vld [vmem:[%s332 + $0x120] sm:$0xff]
        %v3582 = vld [vmem:[%s332 + $0x128] sm:$0xff]
        %v3583 = vld [vmem:[%s332 + $0x130] sm:$0xff]
        %v3584 = vld [vmem:[%s332 + $0x138] sm:$0xff]
        %v3585 = vld [vmem:[%s332 + $0x140] sm:$0xff]
        %v3586 = vld [vmem:[%s332 + $0x148] sm:$0xff]
        %v3587 = vld [vmem:[%s332 + $0x150] sm:$0xff]
        %v3588 = vld [vmem:[%s332 + $0x158] sm:$0xff]
        %v3589 = vld [vmem:[%s332 + $0x160] sm:$0xff]
        %v3590 = vld [vmem:[%s332 + $0x168] sm:$0xff]
        %v3591 = vld [vmem:[%s332 + $0x170] sm:$0xff]
        %v3592 = vld [vmem:[%s332 + $0x178] sm:$0xff]
        %v3593 = vld [vmem:[%s332 + $0x180] sm:$0xff]
        %v3594 = vld [vmem:[%s332 + $0x188] sm:$0xff]
        %v3595 = vld [vmem:[%s332 + $0x190] sm:$0xff]
        %v3596 = vld [vmem:[%s332 + $0x198] sm:$0xff]
        %v3597 = vld [vmem:[%s332 + $0x1a0] sm:$0xff]
        %v3598 = vld [vmem:[%s332 + $0x1a8] sm:$0xff]
        %v3599 = vld [vmem:[%s332 + $0x1b0] sm:$0xff]
        %v3600 = vld [vmem:[%s332 + $0x1b8] sm:$0xff]
        %v3601 = vld [vmem:[%s332 + $0x1c0] sm:$0xff]
        %v3602 = vld [vmem:[%s332 + $0x1c8] sm:$0xff]
        %v3603 = vld [vmem:[%s332 + $0x1d0] sm:$0xff]
        %v3604 = vld [vmem:[%s332 + $0x1d8] sm:$0xff]
        %v3605 = vld [vmem:[%s332 + $0x1e0] sm:$0xff]
        %v3606 = vld [vmem:[%s332 + $0x1e8] sm:$0xff]
        %v3607 = vld [vmem:[%s332 + $0x1f0] sm:$0xff]
        %v3608 = vld [vmem:[%s332 + $0x1f8] sm:$0xff]
        %v3609 = vld [vmem:[%s332 + $0x200] sm:$0xff]
        %v3610 = vld [vmem:[%s332 + $0x208] sm:$0xff]
        %v3611 = vld [vmem:[%s332 + $0x210] sm:$0xff]
        %v3612 = vld [vmem:[%s332 + $0x218] sm:$0xff]
        %v3613 = vld [vmem:[%s332 + $0x220] sm:$0xff]
        %v3614 = vld [vmem:[%s332 + $0x228] sm:$0xff]
        %v3615 = vld [vmem:[%s332 + $0x230] sm:$0xff]
        %v3616 = vld [vmem:[%s332 + $0x238] sm:$0xff]
        %v3617 = vld [vmem:[%s332 + $0x240] sm:$0xff]
        %v3618 = vld [vmem:[%s332 + $0x248] sm:$0xff]
        %v3619 = vld [vmem:[%s332 + $0x250] sm:$0xff]
        %v3620 = vld [vmem:[%s332 + $0x258] sm:$0xff]
        %v3621 = vld [vmem:[%s332 + $0x260] sm:$0xff]
        %v3622 = vld [vmem:[%s332 + $0x268] sm:$0xff]
        %v3623 = vld [vmem:[%s332 + $0x270] sm:$0xff]
        %v3624 = vld [vmem:[%s332 + $0x278] sm:$0xff]
        %v3625 = vld [vmem:[%s332 + $0x280] sm:$0xff]
        %v3626 = vld [vmem:[%s332 + $0x288] sm:$0xff]
        %v3627 = vld [vmem:[%s332 + $0x290] sm:$0xff]
        %v3628 = vld [vmem:[%s332 + $0x298] sm:$0xff]
        %v3629 = vld [vmem:[%s332 + $0x2a0] sm:$0xff]
        %v3630 = vld [vmem:[%s332 + $0x2a8] sm:$0xff]
        %v3631 = vld [vmem:[%s332 + $0x2b0] sm:$0xff]
        %v3632 = vld [vmem:[%s332 + $0x2b8] sm:$0xff]
        %v3633 = vld [vmem:[%s332 + $0x2c0] sm:$0xff]
        %v3634 = vld [vmem:[%s332 + $0x2c8] sm:$0xff]
        %v3635 = vld [vmem:[%s332 + $0x2d0] sm:$0xff]
        %v3636 = vld [vmem:[%s332 + $0x2d8] sm:$0xff]
        %v3637 = vld [vmem:[%s332 + $0x2e0] sm:$0xff]
        %v3638 = vld [vmem:[%s332 + $0x2e8] sm:$0xff]
        %v3639 = vld [vmem:[%s332 + $0x2f0] sm:$0xff]
        %v3640 = vld [vmem:[%s332 + $0x2f8] sm:$0xff]
        %v3641 = vld [vmem:[%s332 + $0x300] sm:$0xff]
        %v3642 = vld [vmem:[%s332 + $0x308] sm:$0xff]
        %v3643 = vld [vmem:[%s332 + $0x310] sm:$0xff]
        %v3644 = vld [vmem:[%s332 + $0x318] sm:$0xff]
        %v3645 = vld [vmem:[%s332 + $0x320] sm:$0xff]
        %v3646 = vld [vmem:[%s332 + $0x328] sm:$0xff]
        %v3647 = vld [vmem:[%s332 + $0x330] sm:$0xff]
        %v3648 = vld [vmem:[%s332 + $0x338] sm:$0xff]
        %v3649 = vld [vmem:[%s332 + $0x340] sm:$0xff]
        %v3650 = vld [vmem:[%s332 + $0x348] sm:$0xff]
        %v3651 = vld [vmem:[%s332 + $0x350] sm:$0xff]
        %v3652 = vld [vmem:[%s332 + $0x358] sm:$0xff]
        %v3653 = vld [vmem:[%s332 + $0x360] sm:$0xff]
        %v3654 = vld [vmem:[%s332 + $0x368] sm:$0xff]
        %v3655 = vld [vmem:[%s332 + $0x370] sm:$0xff]
        %v3656 = vld [vmem:[%s332 + $0x378] sm:$0xff]
        %v3657 = vld [vmem:[%s332 + $0x380] sm:$0xff]
        %v3658 = vld [vmem:[%s332 + $0x388] sm:$0xff]
        %v3659 = vld [vmem:[%s332 + $0x390] sm:$0xff]
        %v3660 = vld [vmem:[%s332 + $0x398] sm:$0xff]
        %v3661 = vld [vmem:[%s332 + $0x3a0] sm:$0xff]
        %v3662 = vld [vmem:[%s332 + $0x3a8] sm:$0xff]
        %v3663 = vld [vmem:[%s332 + $0x3b0] sm:$0xff]
        %v3664 = vld [vmem:[%s332 + $0x3b8] sm:$0xff]
        %v3665 = vld [vmem:[%s332 + $0x3c0] sm:$0xff]
        %v3666 = vld [vmem:[%s332 + $0x3c8] sm:$0xff]
        %v3667 = vld [vmem:[%s332 + $0x3d0] sm:$0xff]
        %v3668 = vld [vmem:[%s332 + $0x3d8] sm:$0xff]
        %v3669 = vld [vmem:[%s332 + $0x3e0] sm:$0xff]
        %v3670 = vld [vmem:[%s332 + $0x3e8] sm:$0xff]
        %v3671 = vld [vmem:[%s332 + $0x3f0] sm:$0xff]
        %v3672 = vld [vmem:[%s332 + $0x3f8] sm:$0xff]
        %v3673 = vld [vmem:[%s332 + $0x400] sm:$0xff]
        %v3674 = vld [vmem:[%s332 + $0x408] sm:$0xff]
        %v3675 = vld [vmem:[%s332 + $0x410] sm:$0xff]
        %v3676 = vld [vmem:[%s332 + $0x418] sm:$0xff]
        %v3677 = vld [vmem:[%s332 + $0x420] sm:$0xff]
        %v3678 = vld [vmem:[%s332 + $0x428] sm:$0xff]
        %v3679 = vld [vmem:[%s332 + $0x430] sm:$0xff]
        %v3680 = vld [vmem:[%s332 + $0x438] sm:$0xff]
        %v3681 = vld [vmem:[%s332 + $0x440] sm:$0xff]
        %v3682 = vld [vmem:[%s332 + $0x448] sm:$0xff]
        %v3683 = vld [vmem:[%s332 + $0x450] sm:$0xff]
        %v3684 = vld [vmem:[%s332 + $0x458] sm:$0xff]
        %v3685 = vld [vmem:[%s332 + $0x460] sm:$0xff]
        %v3686 = vld [vmem:[%s332 + $0x468] sm:$0xff]
        %v3687 = vld [vmem:[%s332 + $0x470] sm:$0xff]
        %v3688 = vld [vmem:[%s332 + $0x478] sm:$0xff]
        %v3689 = vld [vmem:[%s332 + $0x480] sm:$0xff]
        %v3690 = vld [vmem:[%s332 + $0x488] sm:$0xff]
        %v3691 = vld [vmem:[%s332 + $0x490] sm:$0xff]
        %v3692 = vld [vmem:[%s332 + $0x498] sm:$0xff]
        %v3693 = vld [vmem:[%s332 + $0x4a0] sm:$0xff]
        %v3694 = vld [vmem:[%s332 + $0x4a8] sm:$0xff]
        %v3695 = vld [vmem:[%s332 + $0x4b0] sm:$0xff]
        %v3696 = vld [vmem:[%s332 + $0x4b8] sm:$0xff]
        %v3697 = vld [vmem:[%s332 + $0x4c0] sm:$0xff]
        %v3698 = vld [vmem:[%s332 + $0x4c8] sm:$0xff]
        %v3699 = vld [vmem:[%s332 + $0x4d0] sm:$0xff]
        %v3700 = vld [vmem:[%s332 + $0x4d8] sm:$0xff]
        %v3701 = vld [vmem:[%s332 + $0x4e0] sm:$0xff]
        %v3702 = vld [vmem:[%s332 + $0x4e8] sm:$0xff]
        %v3703 = vld [vmem:[%s332 + $0x4f0] sm:$0xff]
        %v3704 = vld [vmem:[%s332 + $0x4f8] sm:$0xff]
        %v3705 = vld [vmem:[%s332 + $0x500] sm:$0xff]
        %v3706 = vld [vmem:[%s332 + $0x508] sm:$0xff]
        %v3707 = vld [vmem:[%s332 + $0x510] sm:$0xff]
        %v3708 = vld [vmem:[%s332 + $0x518] sm:$0xff]
        %v3709 = vld [vmem:[%s332 + $0x520] sm:$0xff]
        %v3710 = vld [vmem:[%s332 + $0x528] sm:$0xff]
        %v3711 = vld [vmem:[%s332 + $0x530] sm:$0xff]
        %v3712 = vld [vmem:[%s332 + $0x538] sm:$0xff]
        %v3713 = vld [vmem:[%s332 + $0x540] sm:$0xff]
        %v3714 = vld [vmem:[%s332 + $0x548] sm:$0xff]
        %v3715 = vld [vmem:[%s332 + $0x550] sm:$0xff]
        %v3716 = vld [vmem:[%s332 + $0x558] sm:$0xff]
        %v3717 = vld [vmem:[%s332 + $0x560] sm:$0xff]
        %v3718 = vld [vmem:[%s332 + $0x568] sm:$0xff]
        %v3719 = vld [vmem:[%s332 + $0x570] sm:$0xff]
        %v3720 = vld [vmem:[%s332 + $0x578] sm:$0xff]
        %v3721 = vunpack.c.l.s8.bf16 %v3545
        %v3722 = vunpack.c.h.s8.bf16 %v3545
        %v3723 = vunpack.c.l.s8.bf16 %v3546
        %v3724 = vunpack.c.h.s8.bf16 %v3546
        %v3725 = vunpack.c.l.s8.bf16 %v3547
        %v3726 = vunpack.c.h.s8.bf16 %v3547
        %v3727 = vunpack.c.l.s8.bf16 %v3548
        %v3728 = vunpack.c.h.s8.bf16 %v3548
        %v3729 = vunpack.c.l.s8.bf16 %v3549
        %v3730 = vunpack.c.h.s8.bf16 %v3549
        %v3731 = vunpack.c.l.s8.bf16 %v3550
        %v3732 = vunpack.c.h.s8.bf16 %v3550
        %v3733 = vunpack.c.l.s8.bf16 %v3551
        %v3734 = vunpack.c.h.s8.bf16 %v3551
        %v3735 = vunpack.c.l.s8.bf16 %v3552
        %v3736 = vunpack.c.h.s8.bf16 %v3552
        %v3737 = vunpack.c.l.s8.bf16 %v3553
        %v3738 = vunpack.c.h.s8.bf16 %v3553
        %v3739 = vunpack.c.l.s8.bf16 %v3554
        %v3740 = vunpack.c.h.s8.bf16 %v3554
        %v3741 = vunpack.c.l.s8.bf16 %v3555
        %v3742 = vunpack.c.h.s8.bf16 %v3555
        %v3743 = vunpack.c.l.s8.bf16 %v3556
        %v3744 = vunpack.c.h.s8.bf16 %v3556
        %v3745 = vunpack.c.l.s8.bf16 %v3557
        %v3746 = vunpack.c.h.s8.bf16 %v3557
        %v3747 = vunpack.c.l.s8.bf16 %v3558
        %v3748 = vunpack.c.h.s8.bf16 %v3558
        %v3749 = vunpack.c.l.s8.bf16 %v3559
        %v3750 = vunpack.c.h.s8.bf16 %v3559
        %v3751 = vunpack.c.l.s8.bf16 %v3560
        %v3752 = vunpack.c.h.s8.bf16 %v3560
        %v3753 = vunpack.c.l.s8.bf16 %v3561
        %v3754 = vunpack.c.h.s8.bf16 %v3561
        %v3755 = vunpack.c.l.s8.bf16 %v3562
        %v3756 = vunpack.c.h.s8.bf16 %v3562
        %v3757 = vunpack.c.l.s8.bf16 %v3563
        %v3758 = vunpack.c.h.s8.bf16 %v3563
        %v3759 = vunpack.c.l.s8.bf16 %v3564
        %v3760 = vunpack.c.h.s8.bf16 %v3564
        %v3761 = vunpack.c.l.s8.bf16 %v3565
        %v3762 = vunpack.c.h.s8.bf16 %v3565
        %v3763 = vunpack.c.l.s8.bf16 %v3566
        %v3764 = vunpack.c.h.s8.bf16 %v3566
        %v3765 = vunpack.c.l.s8.bf16 %v3567
        %v3766 = vunpack.c.h.s8.bf16 %v3567
        %v3767 = vunpack.c.l.s8.bf16 %v3568
        %v3768 = vunpack.c.h.s8.bf16 %v3568
        %v3769 = vunpack.c.l.s8.bf16 %v3569
        %v3770 = vunpack.c.h.s8.bf16 %v3569
        %v3771 = vunpack.c.l.s8.bf16 %v3570
        %v3772 = vunpack.c.h.s8.bf16 %v3570
        %v3773 = vunpack.c.l.s8.bf16 %v3571
        %v3774 = vunpack.c.h.s8.bf16 %v3571
        %v3775 = vunpack.c.l.s8.bf16 %v3572
        %v3776 = vunpack.c.h.s8.bf16 %v3572
        %v3777 = vunpack.c.l.s8.bf16 %v3573
        %v3778 = vunpack.c.h.s8.bf16 %v3573
        %v3779 = vunpack.c.l.s8.bf16 %v3574
        %v3780 = vunpack.c.h.s8.bf16 %v3574
        %v3781 = vunpack.c.l.s8.bf16 %v3575
        %v3782 = vunpack.c.h.s8.bf16 %v3575
        %v3783 = vunpack.c.l.s8.bf16 %v3576
        %v3784 = vunpack.c.h.s8.bf16 %v3576
        %v3785 = vunpack.c.l.s8.bf16 %v3577
        %v3786 = vunpack.c.h.s8.bf16 %v3577
        %v3787 = vunpack.c.l.s8.bf16 %v3578
        %v3788 = vunpack.c.h.s8.bf16 %v3578
        %v3789 = vunpack.c.l.s8.bf16 %v3579
        %v3790 = vunpack.c.h.s8.bf16 %v3579
        %v3791 = vunpack.c.l.s8.bf16 %v3580
        %v3792 = vunpack.c.h.s8.bf16 %v3580
        %v3793 = vunpack.c.l.s8.bf16 %v3581
        %v3794 = vunpack.c.h.s8.bf16 %v3581
        %v3795 = vunpack.c.l.s8.bf16 %v3582
        %v3796 = vunpack.c.h.s8.bf16 %v3582
        %v3797 = vunpack.c.l.s8.bf16 %v3583
        %v3798 = vunpack.c.h.s8.bf16 %v3583
        %v3799 = vunpack.c.l.s8.bf16 %v3584
        %v3800 = vunpack.c.h.s8.bf16 %v3584
        %v3801 = vunpack.c.l.s8.bf16 %v3585
        %v3802 = vunpack.c.h.s8.bf16 %v3585
        %v3803 = vunpack.c.l.s8.bf16 %v3586
        %v3804 = vunpack.c.h.s8.bf16 %v3586
        %v3805 = vunpack.c.l.s8.bf16 %v3587
        %v3806 = vunpack.c.h.s8.bf16 %v3587
        %v3807 = vunpack.c.l.s8.bf16 %v3588
        %v3808 = vunpack.c.h.s8.bf16 %v3588
        %v3809 = vunpack.c.l.s8.bf16 %v3589
        %v3810 = vunpack.c.h.s8.bf16 %v3589
        %v3811 = vunpack.c.l.s8.bf16 %v3590
        %v3812 = vunpack.c.h.s8.bf16 %v3590
        %v3813 = vunpack.c.l.s8.bf16 %v3591
        %v3814 = vunpack.c.h.s8.bf16 %v3591
        %v3815 = vunpack.c.l.s8.bf16 %v3592
        %v3816 = vunpack.c.h.s8.bf16 %v3592
        %v3817 = vunpack.c.l.s8.bf16 %v3593
        %v3818 = vunpack.c.h.s8.bf16 %v3593
        %v3819 = vunpack.c.l.s8.bf16 %v3594
        %v3820 = vunpack.c.h.s8.bf16 %v3594
        %v3821 = vunpack.c.l.s8.bf16 %v3595
        %v3822 = vunpack.c.h.s8.bf16 %v3595
        %v3823 = vunpack.c.l.s8.bf16 %v3596
        %v3824 = vunpack.c.h.s8.bf16 %v3596
        %v3825 = vunpack.c.l.s8.bf16 %v3597
        %v3826 = vunpack.c.h.s8.bf16 %v3597
        %v3827 = vunpack.c.l.s8.bf16 %v3598
        %v3828 = vunpack.c.h.s8.bf16 %v3598
        %v3829 = vunpack.c.l.s8.bf16 %v3599
        %v3830 = vunpack.c.h.s8.bf16 %v3599
        %v3831 = vunpack.c.l.s8.bf16 %v3600
        %v3832 = vunpack.c.h.s8.bf16 %v3600
        %v3833 = vunpack.c.l.s8.bf16 %v3601
        %v3834 = vunpack.c.h.s8.bf16 %v3601
        %v3835 = vunpack.c.l.s8.bf16 %v3602
        %v3836 = vunpack.c.h.s8.bf16 %v3602
        %v3837 = vunpack.c.l.s8.bf16 %v3603
        %v3838 = vunpack.c.h.s8.bf16 %v3603
        %v3839 = vunpack.c.l.s8.bf16 %v3604
        %v3840 = vunpack.c.h.s8.bf16 %v3604
        %v3841 = vunpack.c.l.s8.bf16 %v3605
        %v3842 = vunpack.c.h.s8.bf16 %v3605
        %v3843 = vunpack.c.l.s8.bf16 %v3606
        %v3844 = vunpack.c.h.s8.bf16 %v3606
        %v3845 = vunpack.c.l.s8.bf16 %v3607
        %v3846 = vunpack.c.h.s8.bf16 %v3607
        %v3847 = vunpack.c.l.s8.bf16 %v3608
        %v3848 = vunpack.c.h.s8.bf16 %v3608
        %v3849 = vunpack.c.l.s8.bf16 %v3609
        %v3850 = vunpack.c.h.s8.bf16 %v3609
        %v3851 = vunpack.c.l.s8.bf16 %v3610
        %v3852 = vunpack.c.h.s8.bf16 %v3610
        %v3853 = vunpack.c.l.s8.bf16 %v3611
        %v3854 = vunpack.c.h.s8.bf16 %v3611
        %v3855 = vunpack.c.l.s8.bf16 %v3612
        %v3856 = vunpack.c.h.s8.bf16 %v3612
        %v3857 = vunpack.c.l.s8.bf16 %v3613
        %v3858 = vunpack.c.h.s8.bf16 %v3613
        %v3859 = vunpack.c.l.s8.bf16 %v3614
        %v3860 = vunpack.c.h.s8.bf16 %v3614
        %v3861 = vunpack.c.l.s8.bf16 %v3615
        %v3862 = vunpack.c.h.s8.bf16 %v3615
        %v3863 = vunpack.c.l.s8.bf16 %v3616
        %v3864 = vunpack.c.h.s8.bf16 %v3616
        %v3865 = vunpack.c.l.s8.bf16 %v3617
        %v3866 = vunpack.c.h.s8.bf16 %v3617
        %v3867 = vunpack.c.l.s8.bf16 %v3618
        %v3868 = vunpack.c.h.s8.bf16 %v3618
        %v3869 = vunpack.c.l.s8.bf16 %v3619
        %v3870 = vunpack.c.h.s8.bf16 %v3619
        %v3871 = vunpack.c.l.s8.bf16 %v3620
        %v3872 = vunpack.c.h.s8.bf16 %v3620
        %v3873 = vunpack.c.l.s8.bf16 %v3621
        %v3874 = vunpack.c.h.s8.bf16 %v3621
        %v3875 = vunpack.c.l.s8.bf16 %v3622
        %v3876 = vunpack.c.h.s8.bf16 %v3622
        %v3877 = vunpack.c.l.s8.bf16 %v3623
        %v3878 = vunpack.c.h.s8.bf16 %v3623
        %v3879 = vunpack.c.l.s8.bf16 %v3624
        %v3880 = vunpack.c.h.s8.bf16 %v3624
        %v3881 = vunpack.c.l.s8.bf16 %v3625
        %v3882 = vunpack.c.h.s8.bf16 %v3625
        %v3883 = vunpack.c.l.s8.bf16 %v3626
        %v3884 = vunpack.c.h.s8.bf16 %v3626
        %v3885 = vunpack.c.l.s8.bf16 %v3627
        %v3886 = vunpack.c.h.s8.bf16 %v3627
        %v3887 = vunpack.c.l.s8.bf16 %v3628
        %v3888 = vunpack.c.h.s8.bf16 %v3628
        %v3889 = vunpack.c.l.s8.bf16 %v3629
        %v3890 = vunpack.c.h.s8.bf16 %v3629
        %v3891 = vunpack.c.l.s8.bf16 %v3630
        %v3892 = vunpack.c.h.s8.bf16 %v3630
        %v3893 = vunpack.c.l.s8.bf16 %v3631
        %v3894 = vunpack.c.h.s8.bf16 %v3631
        %v3895 = vunpack.c.l.s8.bf16 %v3632
        %v3896 = vunpack.c.h.s8.bf16 %v3632
        %v3897 = vunpack.c.l.s8.bf16 %v3633
        %v3898 = vunpack.c.h.s8.bf16 %v3633
        %v3899 = vunpack.c.l.s8.bf16 %v3634
        %v3900 = vunpack.c.h.s8.bf16 %v3634
        %v3901 = vunpack.c.l.s8.bf16 %v3635
        %v3902 = vunpack.c.h.s8.bf16 %v3635
        %v3903 = vunpack.c.l.s8.bf16 %v3636
        %v3904 = vunpack.c.h.s8.bf16 %v3636
        %v3905 = vunpack.c.l.s8.bf16 %v3637
        %v3906 = vunpack.c.h.s8.bf16 %v3637
        %v3907 = vunpack.c.l.s8.bf16 %v3638
        %v3908 = vunpack.c.h.s8.bf16 %v3638
        %v3909 = vunpack.c.l.s8.bf16 %v3639
        %v3910 = vunpack.c.h.s8.bf16 %v3639
        %v3911 = vunpack.c.l.s8.bf16 %v3640
        %v3912 = vunpack.c.h.s8.bf16 %v3640
        %v3913 = vunpack.c.l.s8.bf16 %v3641
        %v3914 = vunpack.c.h.s8.bf16 %v3641
        %v3915 = vunpack.c.l.s8.bf16 %v3642
        %v3916 = vunpack.c.h.s8.bf16 %v3642
        %v3917 = vunpack.c.l.s8.bf16 %v3643
        %v3918 = vunpack.c.h.s8.bf16 %v3643
        %v3919 = vunpack.c.l.s8.bf16 %v3644
        %v3920 = vunpack.c.h.s8.bf16 %v3644
        %v3921 = vunpack.c.l.s8.bf16 %v3645
        %v3922 = vunpack.c.h.s8.bf16 %v3645
        %v3923 = vunpack.c.l.s8.bf16 %v3646
        %v3924 = vunpack.c.h.s8.bf16 %v3646
        %v3925 = vunpack.c.l.s8.bf16 %v3647
        %v3926 = vunpack.c.h.s8.bf16 %v3647
        %v3927 = vunpack.c.l.s8.bf16 %v3648
        %v3928 = vunpack.c.h.s8.bf16 %v3648
        %v3929 = vunpack.c.l.s8.bf16 %v3649
        %v3930 = vunpack.c.h.s8.bf16 %v3649
        %v3931 = vunpack.c.l.s8.bf16 %v3650
        %v3932 = vunpack.c.h.s8.bf16 %v3650
        %v3933 = vunpack.c.l.s8.bf16 %v3651
        %v3934 = vunpack.c.h.s8.bf16 %v3651
        %v3935 = vunpack.c.l.s8.bf16 %v3652
        %v3936 = vunpack.c.h.s8.bf16 %v3652
        %v3937 = vunpack.c.l.s8.bf16 %v3653
        %v3938 = vunpack.c.h.s8.bf16 %v3653
        %v3939 = vunpack.c.l.s8.bf16 %v3654
        %v3940 = vunpack.c.h.s8.bf16 %v3654
        %v3941 = vunpack.c.l.s8.bf16 %v3655
        %v3942 = vunpack.c.h.s8.bf16 %v3655
        %v3943 = vunpack.c.l.s8.bf16 %v3656
        %v3944 = vunpack.c.h.s8.bf16 %v3656
        %v3945 = vunpack.c.l.s8.bf16 %v3657
        %v3946 = vunpack.c.h.s8.bf16 %v3657
        %v3947 = vunpack.c.l.s8.bf16 %v3658
        %v3948 = vunpack.c.h.s8.bf16 %v3658
        %v3949 = vunpack.c.l.s8.bf16 %v3659
        %v3950 = vunpack.c.h.s8.bf16 %v3659
        %v3951 = vunpack.c.l.s8.bf16 %v3660
        %v3952 = vunpack.c.h.s8.bf16 %v3660
        %v3953 = vunpack.c.l.s8.bf16 %v3661
        %v3954 = vunpack.c.h.s8.bf16 %v3661
        %v3955 = vunpack.c.l.s8.bf16 %v3662
        %v3956 = vunpack.c.h.s8.bf16 %v3662
        %v3957 = vunpack.c.l.s8.bf16 %v3663
        %v3958 = vunpack.c.h.s8.bf16 %v3663
        %v3959 = vunpack.c.l.s8.bf16 %v3664
        %v3960 = vunpack.c.h.s8.bf16 %v3664
        %v3961 = vunpack.c.l.s8.bf16 %v3665
        %v3962 = vunpack.c.h.s8.bf16 %v3665
        %v3963 = vunpack.c.l.s8.bf16 %v3666
        %v3964 = vunpack.c.h.s8.bf16 %v3666
        %v3965 = vunpack.c.l.s8.bf16 %v3667
        %v3966 = vunpack.c.h.s8.bf16 %v3667
        %v3967 = vunpack.c.l.s8.bf16 %v3668
        %v3968 = vunpack.c.h.s8.bf16 %v3668
        %v3969 = vunpack.c.l.s8.bf16 %v3669
        %v3970 = vunpack.c.h.s8.bf16 %v3669
        %v3971 = vunpack.c.l.s8.bf16 %v3670
        %v3972 = vunpack.c.h.s8.bf16 %v3670
        %v3973 = vunpack.c.l.s8.bf16 %v3671
        %v3974 = vunpack.c.h.s8.bf16 %v3671
        %v3975 = vunpack.c.l.s8.bf16 %v3672
        %v3976 = vunpack.c.h.s8.bf16 %v3672
        %v3977 = vunpack.c.l.s8.bf16 %v3673
        %v3978 = vunpack.c.h.s8.bf16 %v3673
        %v3979 = vunpack.c.l.s8.bf16 %v3674
        %v3980 = vunpack.c.h.s8.bf16 %v3674
        %v3981 = vunpack.c.l.s8.bf16 %v3675
        %v3982 = vunpack.c.h.s8.bf16 %v3675
        %v3983 = vunpack.c.l.s8.bf16 %v3676
        %v3984 = vunpack.c.h.s8.bf16 %v3676
        %v3985 = vunpack.c.l.s8.bf16 %v3677
        %v3986 = vunpack.c.h.s8.bf16 %v3677
        %v3987 = vunpack.c.l.s8.bf16 %v3678
        %v3988 = vunpack.c.h.s8.bf16 %v3678
        %v3989 = vunpack.c.l.s8.bf16 %v3679
        %v3990 = vunpack.c.h.s8.bf16 %v3679
        %v3991 = vunpack.c.l.s8.bf16 %v3680
        %v3992 = vunpack.c.h.s8.bf16 %v3680
        %v3993 = vunpack.c.l.s8.bf16 %v3681
        %v3994 = vunpack.c.h.s8.bf16 %v3681
        %v3995 = vunpack.c.l.s8.bf16 %v3682
        %v3996 = vunpack.c.h.s8.bf16 %v3682
        %v3997 = vunpack.c.l.s8.bf16 %v3683
        %v3998 = vunpack.c.h.s8.bf16 %v3683
        %v3999 = vunpack.c.l.s8.bf16 %v3684
        %v4000 = vunpack.c.h.s8.bf16 %v3684
        %v4001 = vunpack.c.l.s8.bf16 %v3685
        %v4002 = vunpack.c.h.s8.bf16 %v3685
        %v4003 = vunpack.c.l.s8.bf16 %v3686
        %v4004 = vunpack.c.h.s8.bf16 %v3686
        %v4005 = vunpack.c.l.s8.bf16 %v3687
        %v4006 = vunpack.c.h.s8.bf16 %v3687
        %v4007 = vunpack.c.l.s8.bf16 %v3688
        %v4008 = vunpack.c.h.s8.bf16 %v3688
        %v4009 = vunpack.c.l.s8.bf16 %v3689
        %v4010 = vunpack.c.h.s8.bf16 %v3689
        %v4011 = vunpack.c.l.s8.bf16 %v3690
        %v4012 = vunpack.c.h.s8.bf16 %v3690
        %v4013 = vunpack.c.l.s8.bf16 %v3691
        %v4014 = vunpack.c.h.s8.bf16 %v3691
        %v4015 = vunpack.c.l.s8.bf16 %v3692
        %v4016 = vunpack.c.h.s8.bf16 %v3692
        %v4017 = vunpack.c.l.s8.bf16 %v3693
        %v4018 = vunpack.c.h.s8.bf16 %v3693
        %v4019 = vunpack.c.l.s8.bf16 %v3694
        %v4020 = vunpack.c.h.s8.bf16 %v3694
        %v4021 = vunpack.c.l.s8.bf16 %v3695
        %v4022 = vunpack.c.h.s8.bf16 %v3695
        %v4023 = vunpack.c.l.s8.bf16 %v3696
        %v4024 = vunpack.c.h.s8.bf16 %v3696
        %v4025 = vunpack.c.l.s8.bf16 %v3697
        %v4026 = vunpack.c.h.s8.bf16 %v3697
        %v4027 = vunpack.c.l.s8.bf16 %v3698
        %v4028 = vunpack.c.h.s8.bf16 %v3698
        %v4029 = vunpack.c.l.s8.bf16 %v3699
        %v4030 = vunpack.c.h.s8.bf16 %v3699
        %v4031 = vunpack.c.l.s8.bf16 %v3700
        %v4032 = vunpack.c.h.s8.bf16 %v3700
        %v4033 = vunpack.c.l.s8.bf16 %v3701
        %v4034 = vunpack.c.h.s8.bf16 %v3701
        %v4035 = vunpack.c.l.s8.bf16 %v3702
        %v4036 = vunpack.c.h.s8.bf16 %v3702
        %v4037 = vunpack.c.l.s8.bf16 %v3703
        %v4038 = vunpack.c.h.s8.bf16 %v3703
        %v4039 = vunpack.c.l.s8.bf16 %v3704
        %v4040 = vunpack.c.h.s8.bf16 %v3704
        %v4041 = vunpack.c.l.s8.bf16 %v3705
        %v4042 = vunpack.c.h.s8.bf16 %v3705
        %v4043 = vunpack.c.l.s8.bf16 %v3706
        %v4044 = vunpack.c.h.s8.bf16 %v3706
        %v4045 = vunpack.c.l.s8.bf16 %v3707
        %v4046 = vunpack.c.h.s8.bf16 %v3707
        %v4047 = vunpack.c.l.s8.bf16 %v3708
        %v4048 = vunpack.c.h.s8.bf16 %v3708
        %v4049 = vunpack.c.l.s8.bf16 %v3709
        %v4050 = vunpack.c.h.s8.bf16 %v3709
        %v4051 = vunpack.c.l.s8.bf16 %v3710
        %v4052 = vunpack.c.h.s8.bf16 %v3710
        %v4053 = vunpack.c.l.s8.bf16 %v3711
        %v4054 = vunpack.c.h.s8.bf16 %v3711
        %v4055 = vunpack.c.l.s8.bf16 %v3712
        %v4056 = vunpack.c.h.s8.bf16 %v3712
        %v4057 = vunpack.c.l.s8.bf16 %v3713
        %v4058 = vunpack.c.h.s8.bf16 %v3713
        %v4059 = vunpack.c.l.s8.bf16 %v3714
        %v4060 = vunpack.c.h.s8.bf16 %v3714
        %v4061 = vunpack.c.l.s8.bf16 %v3715
        %v4062 = vunpack.c.h.s8.bf16 %v3715
        %v4063 = vunpack.c.l.s8.bf16 %v3716
        %v4064 = vunpack.c.h.s8.bf16 %v3716
        %v4065 = vunpack.c.l.s8.bf16 %v3717
        %v4066 = vunpack.c.h.s8.bf16 %v3717
        %v4067 = vunpack.c.l.s8.bf16 %v3718
        %v4068 = vunpack.c.h.s8.bf16 %v3718
        %v4069 = vunpack.c.l.s8.bf16 %v3719
        %v4070 = vunpack.c.h.s8.bf16 %v3719
        %v4071 = vunpack.c.l.s8.bf16 %v3720
        %v4072 = vunpack.c.h.s8.bf16 %v3720
        %v4079 = vcombine.high %v3539, %v3539
        %v4081 = vunpack.c.l.s4 1966171168
        %v4082 = vunpack.c.0.s8 %v4081
        %v4083 = vlaneseq
        %v4084 = vshrl.u32 %v4083, 7
        %v4085 = vsub.s32 %v4082, %v4084
        %v4086 = vrot.slane %v3539, %v4085
        %v4088 = vunpack.c.l.s4 1966171168
        %v4089 = vunpack.c.0.s8 %v4088
        %v4090 = vlaneseq
        %v4091 = vshrl.u32 %v4090, 7
        %v4092 = vsub.s32 %v4089, %v4091
        %v4093 = vrot.slane %v4079, %v4092
        %v4094 = vcombine.high %v4086, %v4086
        %v4095 = vcombine.high %v4093, %v4093
        %v4097 = vunpack.c.l.s4 1966171168
        %v4098 = vunpack.c.0.s8 %v4097
        %v4099 = vlaneseq
        %v4100 = vshrl.u32 %v4099, 7
        %v4101 = vsub.s32 %v4098, %v4100
        %v4102 = vrot.slane %v4086, %v4101
        %v4104 = vunpack.c.l.s4 1966171168
        %v4105 = vunpack.c.0.s8 %v4104
        %v4106 = vlaneseq
        %v4107 = vshrl.u32 %v4106, 7
        %v4108 = vsub.s32 %v4105, %v4107
        %v4109 = vrot.slane %v4093, %v4108
        %v4111 = vunpack.c.l.s4 1966171168
        %v4112 = vunpack.c.0.s8 %v4111
        %v4113 = vlaneseq
        %v4114 = vshrl.u32 %v4113, 7
        %v4115 = vsub.s32 %v4112, %v4114
        %v4116 = vrot.slane %v4094, %v4115
        %v4118 = vunpack.c.l.s4 1966171168
        %v4119 = vunpack.c.0.s8 %v4118
        %v4120 = vlaneseq
        %v4121 = vshrl.u32 %v4120, 7
        %v4122 = vsub.s32 %v4119, %v4121
        %v4123 = vrot.slane %v4095, %v4122
        %v4124 = vcombine.high %v4102, %v4102
        %v4125 = vcombine.high %v4109, %v4109
        %v4126 = vcombine.high %v4116, %v4116
        %v4127 = vcombine.high %v4123, %v4123
        %v4128 = vcombine.high %v3540, %v3540
        %v4130 = vunpack.c.l.s4 1966171168
        %v4131 = vunpack.c.0.s8 %v4130
        %v4132 = vlaneseq
        %v4133 = vshrl.u32 %v4132, 7
        %v4134 = vsub.s32 %v4131, %v4133
        %v4135 = vrot.slane %v3540, %v4134
        %v4137 = vunpack.c.l.s4 1966171168
        %v4138 = vunpack.c.0.s8 %v4137
        %v4139 = vlaneseq
        %v4140 = vshrl.u32 %v4139, 7
        %v4141 = vsub.s32 %v4138, %v4140
        %v4142 = vrot.slane %v4128, %v4141
        %v4143 = vcombine.high %v4135, %v4135
        %v4144 = vcombine.high %v4142, %v4142
        %v4146 = vunpack.c.l.s4 1966171168
        %v4147 = vunpack.c.0.s8 %v4146
        %v4148 = vlaneseq
        %v4149 = vshrl.u32 %v4148, 7
        %v4150 = vsub.s32 %v4147, %v4149
        %v4151 = vrot.slane %v4135, %v4150
        %v4153 = vunpack.c.l.s4 1966171168
        %v4154 = vunpack.c.0.s8 %v4153
        %v4155 = vlaneseq
        %v4156 = vshrl.u32 %v4155, 7
        %v4157 = vsub.s32 %v4154, %v4156
        %v4158 = vrot.slane %v4142, %v4157
        %v4160 = vunpack.c.l.s4 1966171168
        %v4161 = vunpack.c.0.s8 %v4160
        %v4162 = vlaneseq
        %v4163 = vshrl.u32 %v4162, 7
        %v4164 = vsub.s32 %v4161, %v4163
        %v4165 = vrot.slane %v4143, %v4164
        %v4167 = vunpack.c.l.s4 1966171168
        %v4168 = vunpack.c.0.s8 %v4167
        %v4169 = vlaneseq
        %v4170 = vshrl.u32 %v4169, 7
        %v4171 = vsub.s32 %v4168, %v4170
        %v4172 = vrot.slane %v4144, %v4171
        %v4173 = vcombine.high %v4151, %v4151
        %v4174 = vcombine.high %v4158, %v4158
        %v4175 = vcombine.high %v4165, %v4165
        %v4176 = vcombine.high %v4172, %v4172
        %v4177 = vcombine.high %v3541, %v3541
        %v4179 = vunpack.c.l.s4 1966171168
        %v4180 = vunpack.c.0.s8 %v4179
        %v4181 = vlaneseq
        %v4182 = vshrl.u32 %v4181, 7
        %v4183 = vsub.s32 %v4180, %v4182
        %v4184 = vrot.slane %v3541, %v4183
        %v4186 = vunpack.c.l.s4 1966171168
        %v4187 = vunpack.c.0.s8 %v4186
        %v4188 = vlaneseq
        %v4189 = vshrl.u32 %v4188, 7
        %v4190 = vsub.s32 %v4187, %v4189
        %v4191 = vrot.slane %v4177, %v4190
        %v4192 = vcombine.high %v4184, %v4184
        %v4193 = vcombine.high %v4191, %v4191
        %v4195 = vunpack.c.l.s4 1966171168
        %v4196 = vunpack.c.0.s8 %v4195
        %v4197 = vlaneseq
        %v4198 = vshrl.u32 %v4197, 7
        %v4199 = vsub.s32 %v4196, %v4198
        %v4200 = vrot.slane %v4184, %v4199
        %v4202 = vunpack.c.l.s4 1966171168
        %v4203 = vunpack.c.0.s8 %v4202
        %v4204 = vlaneseq
        %v4205 = vshrl.u32 %v4204, 7
        %v4206 = vsub.s32 %v4203, %v4205
        %v4207 = vrot.slane %v4191, %v4206
        %v4209 = vunpack.c.l.s4 1966171168
        %v4210 = vunpack.c.0.s8 %v4209
        %v4211 = vlaneseq
        %v4212 = vshrl.u32 %v4211, 7
        %v4213 = vsub.s32 %v4210, %v4212
        %v4214 = vrot.slane %v4192, %v4213
        %v4216 = vunpack.c.l.s4 1966171168
        %v4217 = vunpack.c.0.s8 %v4216
        %v4218 = vlaneseq
        %v4219 = vshrl.u32 %v4218, 7
        %v4220 = vsub.s32 %v4217, %v4219
        %v4221 = vrot.slane %v4193, %v4220
        %v4222 = vcombine.high %v4200, %v4200
        %v4223 = vcombine.high %v4207, %v4207
        %v4224 = vcombine.high %v4214, %v4214
        %v4225 = vcombine.high %v4221, %v4221
        %v4226 = vcombine.high %v3542, %v3542
        %v4228 = vunpack.c.l.s4 1966171168
        %v4229 = vunpack.c.0.s8 %v4228
        %v4230 = vlaneseq
        %v4231 = vshrl.u32 %v4230, 7
        %v4232 = vsub.s32 %v4229, %v4231
        %v4233 = vrot.slane %v3542, %v4232
        %v4235 = vunpack.c.l.s4 1966171168
        %v4236 = vunpack.c.0.s8 %v4235
        %v4237 = vlaneseq
        %v4238 = vshrl.u32 %v4237, 7
        %v4239 = vsub.s32 %v4236, %v4238
        %v4240 = vrot.slane %v4226, %v4239
        %v4241 = vcombine.high %v4233, %v4233
        %v4242 = vcombine.high %v4240, %v4240
        %v4244 = vunpack.c.l.s4 1966171168
        %v4245 = vunpack.c.0.s8 %v4244
        %v4246 = vlaneseq
        %v4247 = vshrl.u32 %v4246, 7
        %v4248 = vsub.s32 %v4245, %v4247
        %v4249 = vrot.slane %v4233, %v4248
        %v4251 = vunpack.c.l.s4 1966171168
        %v4252 = vunpack.c.0.s8 %v4251
        %v4253 = vlaneseq
        %v4254 = vshrl.u32 %v4253, 7
        %v4255 = vsub.s32 %v4252, %v4254
        %v4256 = vrot.slane %v4240, %v4255
        %v4258 = vunpack.c.l.s4 1966171168
        %v4259 = vunpack.c.0.s8 %v4258
        %v4260 = vlaneseq
        %v4261 = vshrl.u32 %v4260, 7
        %v4262 = vsub.s32 %v4259, %v4261
        %v4263 = vrot.slane %v4241, %v4262
        %v4265 = vunpack.c.l.s4 1966171168
        %v4266 = vunpack.c.0.s8 %v4265
        %v4267 = vlaneseq
        %v4268 = vshrl.u32 %v4267, 7
        %v4269 = vsub.s32 %v4266, %v4268
        %v4270 = vrot.slane %v4242, %v4269
        %v4271 = vcombine.high %v4249, %v4249
        %v4272 = vcombine.high %v4256, %v4256
        %v4273 = vcombine.high %v4263, %v4263
        %v4274 = vcombine.high %v4270, %v4270
        %v4275 = vcombine.high %v3543, %v3543
        %v4277 = vunpack.c.l.s4 1966171168
        %v4278 = vunpack.c.0.s8 %v4277
        %v4279 = vlaneseq
        %v4280 = vshrl.u32 %v4279, 7
        %v4281 = vsub.s32 %v4278, %v4280
        %v4282 = vrot.slane %v3543, %v4281
        %v4284 = vunpack.c.l.s4 1966171168
        %v4285 = vunpack.c.0.s8 %v4284
        %v4286 = vlaneseq
        %v4287 = vshrl.u32 %v4286, 7
        %v4288 = vsub.s32 %v4285, %v4287
        %v4289 = vrot.slane %v4275, %v4288
        %v4290 = vcombine.high %v4282, %v4282
        %v4291 = vcombine.high %v4289, %v4289
        %v4293 = vunpack.c.l.s4 1966171168
        %v4294 = vunpack.c.0.s8 %v4293
        %v4295 = vlaneseq
        %v4296 = vshrl.u32 %v4295, 7
        %v4297 = vsub.s32 %v4294, %v4296
        %v4298 = vrot.slane %v4282, %v4297
        %v4300 = vunpack.c.l.s4 1966171168
        %v4301 = vunpack.c.0.s8 %v4300
        %v4302 = vlaneseq
        %v4303 = vshrl.u32 %v4302, 7
        %v4304 = vsub.s32 %v4301, %v4303
        %v4305 = vrot.slane %v4289, %v4304
        %v4307 = vunpack.c.l.s4 1966171168
        %v4308 = vunpack.c.0.s8 %v4307
        %v4309 = vlaneseq
        %v4310 = vshrl.u32 %v4309, 7
        %v4311 = vsub.s32 %v4308, %v4310
        %v4312 = vrot.slane %v4290, %v4311
        %v4314 = vunpack.c.l.s4 1966171168
        %v4315 = vunpack.c.0.s8 %v4314
        %v4316 = vlaneseq
        %v4317 = vshrl.u32 %v4316, 7
        %v4318 = vsub.s32 %v4315, %v4317
        %v4319 = vrot.slane %v4291, %v4318
        %v4320 = vcombine.high %v4298, %v4298
        %v4321 = vcombine.high %v4305, %v4305
        %v4322 = vcombine.high %v4312, %v4312
        %v4323 = vcombine.high %v4319, %v4319
        %v4325 = vunpack.c.l.s4 1966171168
        %v4326 = vunpack.c.0.s8 %v4325
        %v4327 = vlaneseq
        %v4328 = vshrl.u32 %v4327, 7
        %v4329 = vsub.s32 %v4326, %v4328
        %v4330 = vrot.slane %v3544, %v4329
        %v4331 = vcombine.high %v4330, %v4330
        %v4333 = vunpack.c.l.s4 1966171168
        %v4334 = vunpack.c.0.s8 %v4333
        %v4335 = vlaneseq
        %v4336 = vshrl.u32 %v4335, 7
        %v4337 = vsub.s32 %v4334, %v4336
        %v4338 = vrot.slane %v4330, %v4337
        %v4340 = vunpack.c.l.s4 1966171168
        %v4341 = vunpack.c.0.s8 %v4340
        %v4342 = vlaneseq
        %v4343 = vshrl.u32 %v4342, 7
        %v4344 = vsub.s32 %v4341, %v4343
        %v4345 = vrot.slane %v4331, %v4344
        %v4346 = vcombine.high %v4338, %v4338
        %v4347 = vcombine.high %v4345, %v4345
        %4392 = vmatprep.subr.bf16.mxu0 0
        %4393 = vmatpush1.bf16.msra.mxu0 %v3728
        %4394 = vmatprep.subr.bf16.mxu0 0
        %4395 = vmatpush1.bf16.msra.mxu0 %v3727
        %4396 = vmatprep.subr.bf16.mxu0 0
        %4397 = vmatpush1.bf16.msra.mxu0 %v3726
        %4398 = vmatprep.subr.bf16.mxu0 0
        %4399 = vmatpush1.bf16.msra.mxu0 %v3725
        %4400 = vmatprep.subr.bf16.mxu0 0
        %4401 = vmatpush1.bf16.msra.mxu0 %v3724
        %4402 = vmatprep.subr.bf16.mxu0 0
        %4403 = vmatpush1.bf16.msra.mxu0 %v3723
        %4404 = vmatprep.subr.bf16.mxu0 0
        %4405 = vmatpush1.bf16.msra.mxu0 %v3722
        %4406 = vmatprep.subr.bf16.mxu0 0
        %4407 = vmatpush1.bf16.msra.mxu0 %v3721
        %4408 = vmatprep.subr.bf16.mxu0 0
        %4409 = vmatpush2.bf16.msra.mxu0 %v3736
        %4410 = vmatprep.subr.bf16.mxu0 0
        %4411 = vmatpush2.bf16.msra.mxu0 %v3735
        %4412 = vmatprep.subr.bf16.mxu0 0
        %4413 = vmatpush2.bf16.msra.mxu0 %v3734
        %4414 = vmatprep.subr.bf16.mxu0 0
        %4415 = vmatpush2.bf16.msra.mxu0 %v3733
        %4416 = vmatprep.subr.bf16.mxu0 0
        %4417 = vmatpush2.bf16.msra.mxu0 %v3732
        %4418 = vmatprep.subr.bf16.mxu0 0
        %4419 = vmatpush2.bf16.msra.mxu0 %v3731
        %4420 = vmatprep.subr.bf16.mxu0 0
        %4421 = vmatpush2.bf16.msra.mxu0 %v3730
        %4422 = vmatprep.subr.bf16.mxu0 0
        %4423 = vmatpush2.bf16.msra.mxu0 %v3729
        %4424 = vmatprep.mubr.bf16.mxu0 %v4116
        %4425 = vmatmul.mubr.bf16.gmra.mxu0 %v4102
        %v4426 = vpop.f32.mrf.mxu0
        %v4427 = vadd.f32 0.0, %v4426
        %v4428 = vpop.f32.mrf.mxu0
        %v4429 = vpop.f32.mrf.mxu0
        %v4430 = vpop.f32.mrf.mxu0
        %4431 = vdwg.mxu0
        %4432 = vmatprep.subr.bf16.mxu0 0
        %4433 = vmatpush1.bf16.msra.mxu0 %v3744
        %4434 = vmatprep.subr.bf16.mxu0 0
        %4435 = vmatpush1.bf16.msra.mxu0 %v3743
        %4436 = vmatprep.subr.bf16.mxu0 0
        %4437 = vmatpush1.bf16.msra.mxu0 %v3742
        %4438 = vmatprep.subr.bf16.mxu0 0
        %4439 = vmatpush1.bf16.msra.mxu0 %v3741
        %4440 = vmatprep.subr.bf16.mxu0 0
        %4441 = vmatpush1.bf16.msra.mxu0 %v3740
        %4442 = vmatprep.subr.bf16.mxu0 0
        %4443 = vmatpush1.bf16.msra.mxu0 %v3739
        %4444 = vmatprep.subr.bf16.mxu0 0
        %4445 = vmatpush1.bf16.msra.mxu0 %v3738
        %4446 = vmatprep.subr.bf16.mxu0 0
        %4447 = vmatpush1.bf16.msra.mxu0 %v3737
        %4448 = vmatprep.subr.bf16.mxu0 0
        %4449 = vmatpush2.bf16.msra.mxu0 %v3752
        %4450 = vmatprep.subr.bf16.mxu0 0
        %4451 = vmatpush2.bf16.msra.mxu0 %v3751
        %4452 = vmatprep.subr.bf16.mxu0 0
        %4453 = vmatpush2.bf16.msra.mxu0 %v3750
        %4454 = vmatprep.subr.bf16.mxu0 0
        %4455 = vmatpush2.bf16.msra.mxu0 %v3749
        %4456 = vmatprep.subr.bf16.mxu0 0
        %4457 = vmatpush2.bf16.msra.mxu0 %v3748
        %4458 = vmatprep.subr.bf16.mxu0 0
        %4459 = vmatpush2.bf16.msra.mxu0 %v3747
        %4460 = vmatprep.subr.bf16.mxu0 0
        %4461 = vmatpush2.bf16.msra.mxu0 %v3746
        %4462 = vmatprep.subr.bf16.mxu0 0
        %4463 = vmatpush2.bf16.msra.mxu0 %v3745
        %4464 = vmatprep.mubr.bf16.mxu0 %v4126
        %4465 = vmatmul.mubr.bf16.gmra.mxu0 %v4124
        %v4466 = vpop.f32.mrf.mxu0
        %v4467 = vadd.f32 %v4427, %v4466
        %v4468 = vpop.f32.mrf.mxu0
        %v4469 = vpop.f32.mrf.mxu0
        %v4470 = vpop.f32.mrf.mxu0
        %4471 = vdwg.mxu0
        %4472 = vmatprep.subr.bf16.mxu0 0
        %4473 = vmatpush1.bf16.msra.mxu0 %v3760
        %4474 = vmatprep.subr.bf16.mxu0 0
        %4475 = vmatpush1.bf16.msra.mxu0 %v3759
        %4476 = vmatprep.subr.bf16.mxu0 0
        %4477 = vmatpush1.bf16.msra.mxu0 %v3758
        %4478 = vmatprep.subr.bf16.mxu0 0
        %4479 = vmatpush1.bf16.msra.mxu0 %v3757
        %4480 = vmatprep.subr.bf16.mxu0 0
        %4481 = vmatpush1.bf16.msra.mxu0 %v3756
        %4482 = vmatprep.subr.bf16.mxu0 0
        %4483 = vmatpush1.bf16.msra.mxu0 %v3755
        %4484 = vmatprep.subr.bf16.mxu0 0
        %4485 = vmatpush1.bf16.msra.mxu0 %v3754
        %4486 = vmatprep.subr.bf16.mxu0 0
        %4487 = vmatpush1.bf16.msra.mxu0 %v3753
        %4488 = vmatprep.subr.bf16.mxu0 0
        %4489 = vmatpush2.bf16.msra.mxu0 %v3768
        %4490 = vmatprep.subr.bf16.mxu0 0
        %4491 = vmatpush2.bf16.msra.mxu0 %v3767
        %4492 = vmatprep.subr.bf16.mxu0 0
        %4493 = vmatpush2.bf16.msra.mxu0 %v3766
        %4494 = vmatprep.subr.bf16.mxu0 0
        %4495 = vmatpush2.bf16.msra.mxu0 %v3765
        %4496 = vmatprep.subr.bf16.mxu0 0
        %4497 = vmatpush2.bf16.msra.mxu0 %v3764
        %4498 = vmatprep.subr.bf16.mxu0 0
        %4499 = vmatpush2.bf16.msra.mxu0 %v3763
        %4500 = vmatprep.subr.bf16.mxu0 0
        %4501 = vmatpush2.bf16.msra.mxu0 %v3762
        %4502 = vmatprep.subr.bf16.mxu0 0
        %4503 = vmatpush2.bf16.msra.mxu0 %v3761
        %4504 = vmatprep.mubr.bf16.mxu0 %v4123
        %4505 = vmatmul.mubr.bf16.gmra.mxu0 %v4109
        %v4506 = vpop.f32.mrf.mxu0
        %v4507 = vadd.f32 %v4467, %v4506
        %v4508 = vpop.f32.mrf.mxu0
        %v4509 = vpop.f32.mrf.mxu0
        %v4510 = vpop.f32.mrf.mxu0
        %4511 = vdwg.mxu0
        %4512 = vmatprep.subr.bf16.mxu0 0
        %4513 = vmatpush1.bf16.msra.mxu0 %v3776
        %4514 = vmatprep.subr.bf16.mxu0 0
        %4515 = vmatpush1.bf16.msra.mxu0 %v3775
        %4516 = vmatprep.subr.bf16.mxu0 0
        %4517 = vmatpush1.bf16.msra.mxu0 %v3774
        %4518 = vmatprep.subr.bf16.mxu0 0
        %4519 = vmatpush1.bf16.msra.mxu0 %v3773
        %4520 = vmatprep.subr.bf16.mxu0 0
        %4521 = vmatpush1.bf16.msra.mxu0 %v3772
        %4522 = vmatprep.subr.bf16.mxu0 0
        %4523 = vmatpush1.bf16.msra.mxu0 %v3771
        %4524 = vmatprep.subr.bf16.mxu0 0
        %4525 = vmatpush1.bf16.msra.mxu0 %v3770
        %4526 = vmatprep.subr.bf16.mxu0 0
        %4527 = vmatpush1.bf16.msra.mxu0 %v3769
        %4528 = vmatprep.subr.bf16.mxu0 0
        %4529 = vmatpush2.bf16.msra.mxu0 %v3784
        %4530 = vmatprep.subr.bf16.mxu0 0
        %4531 = vmatpush2.bf16.msra.mxu0 %v3783
        %4532 = vmatprep.subr.bf16.mxu0 0
        %4533 = vmatpush2.bf16.msra.mxu0 %v3782
        %4534 = vmatprep.subr.bf16.mxu0 0
        %4535 = vmatpush2.bf16.msra.mxu0 %v3781
        %4536 = vmatprep.subr.bf16.mxu0 0
        %4537 = vmatpush2.bf16.msra.mxu0 %v3780
        %4538 = vmatprep.subr.bf16.mxu0 0
        %4539 = vmatpush2.bf16.msra.mxu0 %v3779
        %4540 = vmatprep.subr.bf16.mxu0 0
        %4541 = vmatpush2.bf16.msra.mxu0 %v3778
        %4542 = vmatprep.subr.bf16.mxu0 0
        %4543 = vmatpush2.bf16.msra.mxu0 %v3777
        %4544 = vmatprep.mubr.bf16.mxu0 %v4127
        %4545 = vmatmul.mubr.bf16.gmra.mxu0 %v4125
        %v4546 = vpop.f32.mrf.mxu0
        %v4547 = vadd.f32 %v4507, %v4546
        %v4548 = vpop.f32.mrf.mxu0
        %v4549 = vpop.f32.mrf.mxu0
        %v4550 = vpop.f32.mrf.mxu0
        %4551 = vdwg.mxu0
        %4552 = vmatprep.subr.bf16.mxu0 0
        %4553 = vmatpush1.bf16.msra.mxu0 %v3792
        %4554 = vmatprep.subr.bf16.mxu0 0
        %4555 = vmatpush1.bf16.msra.mxu0 %v3791
        %4556 = vmatprep.subr.bf16.mxu0 0
        %4557 = vmatpush1.bf16.msra.mxu0 %v3790
        %4558 = vmatprep.subr.bf16.mxu0 0
        %4559 = vmatpush1.bf16.msra.mxu0 %v3789
        %4560 = vmatprep.subr.bf16.mxu0 0
        %4561 = vmatpush1.bf16.msra.mxu0 %v3788
        %4562 = vmatprep.subr.bf16.mxu0 0
        %4563 = vmatpush1.bf16.msra.mxu0 %v3787
        %4564 = vmatprep.subr.bf16.mxu0 0
        %4565 = vmatpush1.bf16.msra.mxu0 %v3786
        %4566 = vmatprep.subr.bf16.mxu0 0
        %4567 = vmatpush1.bf16.msra.mxu0 %v3785
        %4568 = vmatprep.subr.bf16.mxu0 0
        %4569 = vmatpush2.bf16.msra.mxu0 %v3800
        %4570 = vmatprep.subr.bf16.mxu0 0
        %4571 = vmatpush2.bf16.msra.mxu0 %v3799
        %4572 = vmatprep.subr.bf16.mxu0 0
        %4573 = vmatpush2.bf16.msra.mxu0 %v3798
        %4574 = vmatprep.subr.bf16.mxu0 0
        %4575 = vmatpush2.bf16.msra.mxu0 %v3797
        %4576 = vmatprep.subr.bf16.mxu0 0
        %4577 = vmatpush2.bf16.msra.mxu0 %v3796
        %4578 = vmatprep.subr.bf16.mxu0 0
        %4579 = vmatpush2.bf16.msra.mxu0 %v3795
        %4580 = vmatprep.subr.bf16.mxu0 0
        %4581 = vmatpush2.bf16.msra.mxu0 %v3794
        %4582 = vmatprep.subr.bf16.mxu0 0
        %4583 = vmatpush2.bf16.msra.mxu0 %v3793
        %4584 = vmatprep.mubr.bf16.mxu0 %v4165
        %4585 = vmatmul.mubr.bf16.gmra.mxu0 %v4151
        %v4586 = vpop.f32.mrf.mxu0
        %v4587 = vadd.f32 %v4547, %v4586
        %v4588 = vpop.f32.mrf.mxu0
        %v4589 = vpop.f32.mrf.mxu0
        %v4590 = vpop.f32.mrf.mxu0
        %4591 = vdwg.mxu0
        %4592 = vmatprep.subr.bf16.mxu0 0
        %4593 = vmatpush1.bf16.msra.mxu0 %v3808
        %4594 = vmatprep.subr.bf16.mxu0 0
        %4595 = vmatpush1.bf16.msra.mxu0 %v3807
        %4596 = vmatprep.subr.bf16.mxu0 0
        %4597 = vmatpush1.bf16.msra.mxu0 %v3806
        %4598 = vmatprep.subr.bf16.mxu0 0
        %4599 = vmatpush1.bf16.msra.mxu0 %v3805
        %4600 = vmatprep.subr.bf16.mxu0 0
        %4601 = vmatpush1.bf16.msra.mxu0 %v3804
        %4602 = vmatprep.subr.bf16.mxu0 0
        %4603 = vmatpush1.bf16.msra.mxu0 %v3803
        %4604 = vmatprep.subr.bf16.mxu0 0
        %4605 = vmatpush1.bf16.msra.mxu0 %v3802
        %4606 = vmatprep.subr.bf16.mxu0 0
        %4607 = vmatpush1.bf16.msra.mxu0 %v3801
        %4608 = vmatprep.subr.bf16.mxu0 0
        %4609 = vmatpush2.bf16.msra.mxu0 %v3816
        %4610 = vmatprep.subr.bf16.mxu0 0
        %4611 = vmatpush2.bf16.msra.mxu0 %v3815
        %4612 = vmatprep.subr.bf16.mxu0 0
        %4613 = vmatpush2.bf16.msra.mxu0 %v3814
        %4614 = vmatprep.subr.bf16.mxu0 0
        %4615 = vmatpush2.bf16.msra.mxu0 %v3813
        %4616 = vmatprep.subr.bf16.mxu0 0
        %4617 = vmatpush2.bf16.msra.mxu0 %v3812
        %4618 = vmatprep.subr.bf16.mxu0 0
        %4619 = vmatpush2.bf16.msra.mxu0 %v3811
        %4620 = vmatprep.subr.bf16.mxu0 0
        %4621 = vmatpush2.bf16.msra.mxu0 %v3810
        %4622 = vmatprep.subr.bf16.mxu0 0
        %4623 = vmatpush2.bf16.msra.mxu0 %v3809
        %4624 = vmatprep.mubr.bf16.mxu0 %v4175
        %4625 = vmatmul.mubr.bf16.gmra.mxu0 %v4173
        %v4626 = vpop.f32.mrf.mxu0
        %v4627 = vadd.f32 %v4587, %v4626
        %v4628 = vpop.f32.mrf.mxu0
        %v4629 = vpop.f32.mrf.mxu0
        %v4630 = vpop.f32.mrf.mxu0
        %4631 = vdwg.mxu0
        %4632 = vmatprep.subr.bf16.mxu0 0
        %4633 = vmatpush1.bf16.msra.mxu0 %v3824
        %4634 = vmatprep.subr.bf16.mxu0 0
        %4635 = vmatpush1.bf16.msra.mxu0 %v3823
        %4636 = vmatprep.subr.bf16.mxu0 0
        %4637 = vmatpush1.bf16.msra.mxu0 %v3822
        %4638 = vmatprep.subr.bf16.mxu0 0
        %4639 = vmatpush1.bf16.msra.mxu0 %v3821
        %4640 = vmatprep.subr.bf16.mxu0 0
        %4641 = vmatpush1.bf16.msra.mxu0 %v3820
        %4642 = vmatprep.subr.bf16.mxu0 0
        %4643 = vmatpush1.bf16.msra.mxu0 %v3819
        %4644 = vmatprep.subr.bf16.mxu0 0
        %4645 = vmatpush1.bf16.msra.mxu0 %v3818
        %4646 = vmatprep.subr.bf16.mxu0 0
        %4647 = vmatpush1.bf16.msra.mxu0 %v3817
        %4648 = vmatprep.subr.bf16.mxu0 0
        %4649 = vmatpush2.bf16.msra.mxu0 %v3832
        %4650 = vmatprep.subr.bf16.mxu0 0
        %4651 = vmatpush2.bf16.msra.mxu0 %v3831
        %4652 = vmatprep.subr.bf16.mxu0 0
        %4653 = vmatpush2.bf16.msra.mxu0 %v3830
        %4654 = vmatprep.subr.bf16.mxu0 0
        %4655 = vmatpush2.bf16.msra.mxu0 %v3829
        %4656 = vmatprep.subr.bf16.mxu0 0
        %4657 = vmatpush2.bf16.msra.mxu0 %v3828
        %4658 = vmatprep.subr.bf16.mxu0 0
        %4659 = vmatpush2.bf16.msra.mxu0 %v3827
        %4660 = vmatprep.subr.bf16.mxu0 0
        %4661 = vmatpush2.bf16.msra.mxu0 %v3826
        %4662 = vmatprep.subr.bf16.mxu0 0
        %4663 = vmatpush2.bf16.msra.mxu0 %v3825
        %4664 = vmatprep.mubr.bf16.mxu0 %v4172
        %4665 = vmatmul.mubr.bf16.gmra.mxu0 %v4158
        %v4666 = vpop.f32.mrf.mxu0
        %v4667 = vadd.f32 %v4627, %v4666
        %v4668 = vpop.f32.mrf.mxu0
        %v4669 = vpop.f32.mrf.mxu0
        %v4670 = vpop.f32.mrf.mxu0
        %4671 = vdwg.mxu0
        %4672 = vmatprep.subr.bf16.mxu0 0
        %4673 = vmatpush1.bf16.msra.mxu0 %v3840
        %4674 = vmatprep.subr.bf16.mxu0 0
        %4675 = vmatpush1.bf16.msra.mxu0 %v3839
        %4676 = vmatprep.subr.bf16.mxu0 0
        %4677 = vmatpush1.bf16.msra.mxu0 %v3838
        %4678 = vmatprep.subr.bf16.mxu0 0
        %4679 = vmatpush1.bf16.msra.mxu0 %v3837
        %4680 = vmatprep.subr.bf16.mxu0 0
        %4681 = vmatpush1.bf16.msra.mxu0 %v3836
        %4682 = vmatprep.subr.bf16.mxu0 0
        %4683 = vmatpush1.bf16.msra.mxu0 %v3835
        %4684 = vmatprep.subr.bf16.mxu0 0
        %4685 = vmatpush1.bf16.msra.mxu0 %v3834
        %4686 = vmatprep.subr.bf16.mxu0 0
        %4687 = vmatpush1.bf16.msra.mxu0 %v3833
        %4688 = vmatprep.subr.bf16.mxu0 0
        %4689 = vmatpush2.bf16.msra.mxu0 %v3848
        %4690 = vmatprep.subr.bf16.mxu0 0
        %4691 = vmatpush2.bf16.msra.mxu0 %v3847
        %4692 = vmatprep.subr.bf16.mxu0 0
        %4693 = vmatpush2.bf16.msra.mxu0 %v3846
        %4694 = vmatprep.subr.bf16.mxu0 0
        %4695 = vmatpush2.bf16.msra.mxu0 %v3845
        %4696 = vmatprep.subr.bf16.mxu0 0
        %4697 = vmatpush2.bf16.msra.mxu0 %v3844
        %4698 = vmatprep.subr.bf16.mxu0 0
        %4699 = vmatpush2.bf16.msra.mxu0 %v3843
        %4700 = vmatprep.subr.bf16.mxu0 0
        %4701 = vmatpush2.bf16.msra.mxu0 %v3842
        %4702 = vmatprep.subr.bf16.mxu0 0
        %4703 = vmatpush2.bf16.msra.mxu0 %v3841
        %4704 = vmatprep.mubr.bf16.mxu0 %v4176
        %4705 = vmatmul.mubr.bf16.gmra.mxu0 %v4174
        %v4706 = vpop.f32.mrf.mxu0
        %v4707 = vadd.f32 %v4667, %v4706
        %v4708 = vpop.f32.mrf.mxu0
        %v4709 = vpop.f32.mrf.mxu0
        %v4710 = vpop.f32.mrf.mxu0
        %4711 = vdwg.mxu0
        %4712 = vmatprep.subr.bf16.mxu0 0
        %4713 = vmatpush1.bf16.msra.mxu0 %v3856
        %4714 = vmatprep.subr.bf16.mxu0 0
        %4715 = vmatpush1.bf16.msra.mxu0 %v3855
        %4716 = vmatprep.subr.bf16.mxu0 0
        %4717 = vmatpush1.bf16.msra.mxu0 %v3854
        %4718 = vmatprep.subr.bf16.mxu0 0
        %4719 = vmatpush1.bf16.msra.mxu0 %v3853
        %4720 = vmatprep.subr.bf16.mxu0 0
        %4721 = vmatpush1.bf16.msra.mxu0 %v3852
        %4722 = vmatprep.subr.bf16.mxu0 0
        %4723 = vmatpush1.bf16.msra.mxu0 %v3851
        %4724 = vmatprep.subr.bf16.mxu0 0
        %4725 = vmatpush1.bf16.msra.mxu0 %v3850
        %4726 = vmatprep.subr.bf16.mxu0 0
        %4727 = vmatpush1.bf16.msra.mxu0 %v3849
        %4728 = vmatprep.subr.bf16.mxu0 0
        %4729 = vmatpush2.bf16.msra.mxu0 %v3864
        %4730 = vmatprep.subr.bf16.mxu0 0
        %4731 = vmatpush2.bf16.msra.mxu0 %v3863
        %4732 = vmatprep.subr.bf16.mxu0 0
        %4733 = vmatpush2.bf16.msra.mxu0 %v3862
        %4734 = vmatprep.subr.bf16.mxu0 0
        %4735 = vmatpush2.bf16.msra.mxu0 %v3861
        %4736 = vmatprep.subr.bf16.mxu0 0
        %4737 = vmatpush2.bf16.msra.mxu0 %v3860
        %4738 = vmatprep.subr.bf16.mxu0 0
        %4739 = vmatpush2.bf16.msra.mxu0 %v3859
        %4740 = vmatprep.subr.bf16.mxu0 0
        %4741 = vmatpush2.bf16.msra.mxu0 %v3858
        %4742 = vmatprep.subr.bf16.mxu0 0
        %4743 = vmatpush2.bf16.msra.mxu0 %v3857
        %4744 = vmatprep.mubr.bf16.mxu0 %v4214
        %4745 = vmatmul.mubr.bf16.gmra.mxu0 %v4200
        %v4746 = vpop.f32.mrf.mxu0
        %v4747 = vadd.f32 %v4707, %v4746
        %v4748 = vpop.f32.mrf.mxu0
        %v4749 = vpop.f32.mrf.mxu0
        %v4750 = vpop.f32.mrf.mxu0
        %4751 = vdwg.mxu0
        %4752 = vmatprep.subr.bf16.mxu0 0
        %4753 = vmatpush1.bf16.msra.mxu0 %v3872
        %4754 = vmatprep.subr.bf16.mxu0 0
        %4755 = vmatpush1.bf16.msra.mxu0 %v3871
        %4756 = vmatprep.subr.bf16.mxu0 0
        %4757 = vmatpush1.bf16.msra.mxu0 %v3870
        %4758 = vmatprep.subr.bf16.mxu0 0
        %4759 = vmatpush1.bf16.msra.mxu0 %v3869
        %4760 = vmatprep.subr.bf16.mxu0 0
        %4761 = vmatpush1.bf16.msra.mxu0 %v3868
        %4762 = vmatprep.subr.bf16.mxu0 0
        %4763 = vmatpush1.bf16.msra.mxu0 %v3867
        %4764 = vmatprep.subr.bf16.mxu0 0
        %4765 = vmatpush1.bf16.msra.mxu0 %v3866
        %4766 = vmatprep.subr.bf16.mxu0 0
        %4767 = vmatpush1.bf16.msra.mxu0 %v3865
        %4768 = vmatprep.subr.bf16.mxu0 0
        %4769 = vmatpush2.bf16.msra.mxu0 %v3880
        %4770 = vmatprep.subr.bf16.mxu0 0
        %4771 = vmatpush2.bf16.msra.mxu0 %v3879
        %4772 = vmatprep.subr.bf16.mxu0 0
        %4773 = vmatpush2.bf16.msra.mxu0 %v3878
        %4774 = vmatprep.subr.bf16.mxu0 0
        %4775 = vmatpush2.bf16.msra.mxu0 %v3877
        %4776 = vmatprep.subr.bf16.mxu0 0
        %4777 = vmatpush2.bf16.msra.mxu0 %v3876
        %4778 = vmatprep.subr.bf16.mxu0 0
        %4779 = vmatpush2.bf16.msra.mxu0 %v3875
        %4780 = vmatprep.subr.bf16.mxu0 0
        %4781 = vmatpush2.bf16.msra.mxu0 %v3874
        %4782 = vmatprep.subr.bf16.mxu0 0
        %4783 = vmatpush2.bf16.msra.mxu0 %v3873
        %4784 = vmatprep.mubr.bf16.mxu0 %v4224
        %4785 = vmatmul.mubr.bf16.gmra.mxu0 %v4222
        %v4786 = vpop.f32.mrf.mxu0
        %v4787 = vadd.f32 %v4747, %v4786
        %v4788 = vpop.f32.mrf.mxu0
        %v4789 = vpop.f32.mrf.mxu0
        %v4790 = vpop.f32.mrf.mxu0
        %4791 = vdwg.mxu0
        %4792 = vmatprep.subr.bf16.mxu0 0
        %4793 = vmatpush1.bf16.msra.mxu0 %v3888
        %4794 = vmatprep.subr.bf16.mxu0 0
        %4795 = vmatpush1.bf16.msra.mxu0 %v3887
        %4796 = vmatprep.subr.bf16.mxu0 0
        %4797 = vmatpush1.bf16.msra.mxu0 %v3886
        %4798 = vmatprep.subr.bf16.mxu0 0
        %4799 = vmatpush1.bf16.msra.mxu0 %v3885
        %4800 = vmatprep.subr.bf16.mxu0 0
        %4801 = vmatpush1.bf16.msra.mxu0 %v3884
        %4802 = vmatprep.subr.bf16.mxu0 0
        %4803 = vmatpush1.bf16.msra.mxu0 %v3883
        %4804 = vmatprep.subr.bf16.mxu0 0
        %4805 = vmatpush1.bf16.msra.mxu0 %v3882
        %4806 = vmatprep.subr.bf16.mxu0 0
        %4807 = vmatpush1.bf16.msra.mxu0 %v3881
        %4808 = vmatprep.subr.bf16.mxu0 0
        %4809 = vmatpush2.bf16.msra.mxu0 %v3896
        %4810 = vmatprep.subr.bf16.mxu0 0
        %4811 = vmatpush2.bf16.msra.mxu0 %v3895
        %4812 = vmatprep.subr.bf16.mxu0 0
        %4813 = vmatpush2.bf16.msra.mxu0 %v3894
        %4814 = vmatprep.subr.bf16.mxu0 0
        %4815 = vmatpush2.bf16.msra.mxu0 %v3893
        %4816 = vmatprep.subr.bf16.mxu0 0
        %4817 = vmatpush2.bf16.msra.mxu0 %v3892
        %4818 = vmatprep.subr.bf16.mxu0 0
        %4819 = vmatpush2.bf16.msra.mxu0 %v3891
        %4820 = vmatprep.subr.bf16.mxu0 0
        %4821 = vmatpush2.bf16.msra.mxu0 %v3890
        %4822 = vmatprep.subr.bf16.mxu0 0
        %4823 = vmatpush2.bf16.msra.mxu0 %v3889
        %4824 = vmatprep.mubr.bf16.mxu0 %v4221
        %4825 = vmatmul.mubr.bf16.gmra.mxu0 %v4207
        %v4826 = vpop.f32.mrf.mxu0
        %v4827 = vadd.f32 %v4787, %v4826
        %v4828 = vpop.f32.mrf.mxu0
        %v4829 = vpop.f32.mrf.mxu0
        %v4830 = vpop.f32.mrf.mxu0
        %4831 = vdwg.mxu0
        %4832 = vmatprep.subr.bf16.mxu0 0
        %4833 = vmatpush1.bf16.msra.mxu0 %v3904
        %4834 = vmatprep.subr.bf16.mxu0 0
        %4835 = vmatpush1.bf16.msra.mxu0 %v3903
        %4836 = vmatprep.subr.bf16.mxu0 0
        %4837 = vmatpush1.bf16.msra.mxu0 %v3902
        %4838 = vmatprep.subr.bf16.mxu0 0
        %4839 = vmatpush1.bf16.msra.mxu0 %v3901
        %4840 = vmatprep.subr.bf16.mxu0 0
        %4841 = vmatpush1.bf16.msra.mxu0 %v3900
        %4842 = vmatprep.subr.bf16.mxu0 0
        %4843 = vmatpush1.bf16.msra.mxu0 %v3899
        %4844 = vmatprep.subr.bf16.mxu0 0
        %4845 = vmatpush1.bf16.msra.mxu0 %v3898
        %4846 = vmatprep.subr.bf16.mxu0 0
        %4847 = vmatpush1.bf16.msra.mxu0 %v3897
        %4848 = vmatprep.subr.bf16.mxu0 0
        %4849 = vmatpush2.bf16.msra.mxu0 %v3912
        %4850 = vmatprep.subr.bf16.mxu0 0
        %4851 = vmatpush2.bf16.msra.mxu0 %v3911
        %4852 = vmatprep.subr.bf16.mxu0 0
        %4853 = vmatpush2.bf16.msra.mxu0 %v3910
        %4854 = vmatprep.subr.bf16.mxu0 0
        %4855 = vmatpush2.bf16.msra.mxu0 %v3909
        %4856 = vmatprep.subr.bf16.mxu0 0
        %4857 = vmatpush2.bf16.msra.mxu0 %v3908
        %4858 = vmatprep.subr.bf16.mxu0 0
        %4859 = vmatpush2.bf16.msra.mxu0 %v3907
        %4860 = vmatprep.subr.bf16.mxu0 0
        %4861 = vmatpush2.bf16.msra.mxu0 %v3906
        %4862 = vmatprep.subr.bf16.mxu0 0
        %4863 = vmatpush2.bf16.msra.mxu0 %v3905
        %4864 = vmatprep.mubr.bf16.mxu0 %v4225
        %4865 = vmatmul.mubr.bf16.gmra.mxu0 %v4223
        %v4866 = vpop.f32.mrf.mxu0
        %v4867 = vadd.f32 %v4827, %v4866
        %v4868 = vpop.f32.mrf.mxu0
        %v4869 = vpop.f32.mrf.mxu0
        %v4870 = vpop.f32.mrf.mxu0
        %4871 = vdwg.mxu0
        %4872 = vmatprep.subr.bf16.mxu0 0
        %4873 = vmatpush1.bf16.msra.mxu0 %v3920
        %4874 = vmatprep.subr.bf16.mxu0 0
        %4875 = vmatpush1.bf16.msra.mxu0 %v3919
        %4876 = vmatprep.subr.bf16.mxu0 0
        %4877 = vmatpush1.bf16.msra.mxu0 %v3918
        %4878 = vmatprep.subr.bf16.mxu0 0
        %4879 = vmatpush1.bf16.msra.mxu0 %v3917
        %4880 = vmatprep.subr.bf16.mxu0 0
        %4881 = vmatpush1.bf16.msra.mxu0 %v3916
        %4882 = vmatprep.subr.bf16.mxu0 0
        %4883 = vmatpush1.bf16.msra.mxu0 %v3915
        %4884 = vmatprep.subr.bf16.mxu0 0
        %4885 = vmatpush1.bf16.msra.mxu0 %v3914
        %4886 = vmatprep.subr.bf16.mxu0 0
        %4887 = vmatpush1.bf16.msra.mxu0 %v3913
        %4888 = vmatprep.subr.bf16.mxu0 0
        %4889 = vmatpush2.bf16.msra.mxu0 %v3928
        %4890 = vmatprep.subr.bf16.mxu0 0
        %4891 = vmatpush2.bf16.msra.mxu0 %v3927
        %4892 = vmatprep.subr.bf16.mxu0 0
        %4893 = vmatpush2.bf16.msra.mxu0 %v3926
        %4894 = vmatprep.subr.bf16.mxu0 0
        %4895 = vmatpush2.bf16.msra.mxu0 %v3925
        %4896 = vmatprep.subr.bf16.mxu0 0
        %4897 = vmatpush2.bf16.msra.mxu0 %v3924
        %4898 = vmatprep.subr.bf16.mxu0 0
        %4899 = vmatpush2.bf16.msra.mxu0 %v3923
        %4900 = vmatprep.subr.bf16.mxu0 0
        %4901 = vmatpush2.bf16.msra.mxu0 %v3922
        %4902 = vmatprep.subr.bf16.mxu0 0
        %4903 = vmatpush2.bf16.msra.mxu0 %v3921
        %4904 = vmatprep.mubr.bf16.mxu0 %v4263
        %4905 = vmatmul.mubr.bf16.gmra.mxu0 %v4249
        %v4906 = vpop.f32.mrf.mxu0
        %v4907 = vadd.f32 %v4867, %v4906
        %v4908 = vpop.f32.mrf.mxu0
        %v4909 = vpop.f32.mrf.mxu0
        %v4910 = vpop.f32.mrf.mxu0
        %4911 = vdwg.mxu0
        %4912 = vmatprep.subr.bf16.mxu0 0
        %4913 = vmatpush1.bf16.msra.mxu0 %v3936
        %4914 = vmatprep.subr.bf16.mxu0 0
        %4915 = vmatpush1.bf16.msra.mxu0 %v3935
        %4916 = vmatprep.subr.bf16.mxu0 0
        %4917 = vmatpush1.bf16.msra.mxu0 %v3934
        %4918 = vmatprep.subr.bf16.mxu0 0
        %4919 = vmatpush1.bf16.msra.mxu0 %v3933
        %4920 = vmatprep.subr.bf16.mxu0 0
        %4921 = vmatpush1.bf16.msra.mxu0 %v3932
        %4922 = vmatprep.subr.bf16.mxu0 0
        %4923 = vmatpush1.bf16.msra.mxu0 %v3931
        %4924 = vmatprep.subr.bf16.mxu0 0
        %4925 = vmatpush1.bf16.msra.mxu0 %v3930
        %4926 = vmatprep.subr.bf16.mxu0 0
        %4927 = vmatpush1.bf16.msra.mxu0 %v3929
        %4928 = vmatprep.subr.bf16.mxu0 0
        %4929 = vmatpush2.bf16.msra.mxu0 %v3944
        %4930 = vmatprep.subr.bf16.mxu0 0
        %4931 = vmatpush2.bf16.msra.mxu0 %v3943
        %4932 = vmatprep.subr.bf16.mxu0 0
        %4933 = vmatpush2.bf16.msra.mxu0 %v3942
        %4934 = vmatprep.subr.bf16.mxu0 0
        %4935 = vmatpush2.bf16.msra.mxu0 %v3941
        %4936 = vmatprep.subr.bf16.mxu0 0
        %4937 = vmatpush2.bf16.msra.mxu0 %v3940
        %4938 = vmatprep.subr.bf16.mxu0 0
        %4939 = vmatpush2.bf16.msra.mxu0 %v3939
        %4940 = vmatprep.subr.bf16.mxu0 0
        %4941 = vmatpush2.bf16.msra.mxu0 %v3938
        %4942 = vmatprep.subr.bf16.mxu0 0
        %4943 = vmatpush2.bf16.msra.mxu0 %v3937
        %4944 = vmatprep.mubr.bf16.mxu0 %v4273
        %4945 = vmatmul.mubr.bf16.gmra.mxu0 %v4271
        %v4946 = vpop.f32.mrf.mxu0
        %v4947 = vadd.f32 %v4907, %v4946
        %v4948 = vpop.f32.mrf.mxu0
        %v4949 = vpop.f32.mrf.mxu0
        %v4950 = vpop.f32.mrf.mxu0
        %4951 = vdwg.mxu0
        %4952 = vmatprep.subr.bf16.mxu0 0
        %4953 = vmatpush1.bf16.msra.mxu0 %v3952
        %4954 = vmatprep.subr.bf16.mxu0 0
        %4955 = vmatpush1.bf16.msra.mxu0 %v3951
        %4956 = vmatprep.subr.bf16.mxu0 0
        %4957 = vmatpush1.bf16.msra.mxu0 %v3950
        %4958 = vmatprep.subr.bf16.mxu0 0
        %4959 = vmatpush1.bf16.msra.mxu0 %v3949
        %4960 = vmatprep.subr.bf16.mxu0 0
        %4961 = vmatpush1.bf16.msra.mxu0 %v3948
        %4962 = vmatprep.subr.bf16.mxu0 0
        %4963 = vmatpush1.bf16.msra.mxu0 %v3947
        %4964 = vmatprep.subr.bf16.mxu0 0
        %4965 = vmatpush1.bf16.msra.mxu0 %v3946
        %4966 = vmatprep.subr.bf16.mxu0 0
        %4967 = vmatpush1.bf16.msra.mxu0 %v3945
        %4968 = vmatprep.subr.bf16.mxu0 0
        %4969 = vmatpush2.bf16.msra.mxu0 %v3960
        %4970 = vmatprep.subr.bf16.mxu0 0
        %4971 = vmatpush2.bf16.msra.mxu0 %v3959
        %4972 = vmatprep.subr.bf16.mxu0 0
        %4973 = vmatpush2.bf16.msra.mxu0 %v3958
        %4974 = vmatprep.subr.bf16.mxu0 0
        %4975 = vmatpush2.bf16.msra.mxu0 %v3957
        %4976 = vmatprep.subr.bf16.mxu0 0
        %4977 = vmatpush2.bf16.msra.mxu0 %v3956
        %4978 = vmatprep.subr.bf16.mxu0 0
        %4979 = vmatpush2.bf16.msra.mxu0 %v3955
        %4980 = vmatprep.subr.bf16.mxu0 0
        %4981 = vmatpush2.bf16.msra.mxu0 %v3954
        %4982 = vmatprep.subr.bf16.mxu0 0
        %4983 = vmatpush2.bf16.msra.mxu0 %v3953
        %4984 = vmatprep.mubr.bf16.mxu0 %v4270
        %4985 = vmatmul.mubr.bf16.gmra.mxu0 %v4256
        %v4986 = vpop.f32.mrf.mxu0
        %v4987 = vadd.f32 %v4947, %v4986
        %v4988 = vpop.f32.mrf.mxu0
        %v4989 = vpop.f32.mrf.mxu0
        %v4990 = vpop.f32.mrf.mxu0
        %4991 = vdwg.mxu0
        %4992 = vmatprep.subr.bf16.mxu0 0
        %4993 = vmatpush1.bf16.msra.mxu0 %v3968
        %4994 = vmatprep.subr.bf16.mxu0 0
        %4995 = vmatpush1.bf16.msra.mxu0 %v3967
        %4996 = vmatprep.subr.bf16.mxu0 0
        %4997 = vmatpush1.bf16.msra.mxu0 %v3966
        %4998 = vmatprep.subr.bf16.mxu0 0
        %4999 = vmatpush1.bf16.msra.mxu0 %v3965
        %5000 = vmatprep.subr.bf16.mxu0 0
        %5001 = vmatpush1.bf16.msra.mxu0 %v3964
        %5002 = vmatprep.subr.bf16.mxu0 0
        %5003 = vmatpush1.bf16.msra.mxu0 %v3963
        %5004 = vmatprep.subr.bf16.mxu0 0
        %5005 = vmatpush1.bf16.msra.mxu0 %v3962
        %5006 = vmatprep.subr.bf16.mxu0 0
        %5007 = vmatpush1.bf16.msra.mxu0 %v3961
        %5008 = vmatprep.subr.bf16.mxu0 0
        %5009 = vmatpush2.bf16.msra.mxu0 %v3976
        %5010 = vmatprep.subr.bf16.mxu0 0
        %5011 = vmatpush2.bf16.msra.mxu0 %v3975
        %5012 = vmatprep.subr.bf16.mxu0 0
        %5013 = vmatpush2.bf16.msra.mxu0 %v3974
        %5014 = vmatprep.subr.bf16.mxu0 0
        %5015 = vmatpush2.bf16.msra.mxu0 %v3973
        %5016 = vmatprep.subr.bf16.mxu0 0
        %5017 = vmatpush2.bf16.msra.mxu0 %v3972
        %5018 = vmatprep.subr.bf16.mxu0 0
        %5019 = vmatpush2.bf16.msra.mxu0 %v3971
        %5020 = vmatprep.subr.bf16.mxu0 0
        %5021 = vmatpush2.bf16.msra.mxu0 %v3970
        %5022 = vmatprep.subr.bf16.mxu0 0
        %5023 = vmatpush2.bf16.msra.mxu0 %v3969
        %5024 = vmatprep.mubr.bf16.mxu0 %v4274
        %5025 = vmatmul.mubr.bf16.gmra.mxu0 %v4272
        %v5026 = vpop.f32.mrf.mxu0
        %v5027 = vadd.f32 %v4987, %v5026
        %v5028 = vpop.f32.mrf.mxu0
        %v5029 = vpop.f32.mrf.mxu0
        %v5030 = vpop.f32.mrf.mxu0
        %5031 = vdwg.mxu0
        %5032 = vmatprep.subr.bf16.mxu0 0
        %5033 = vmatpush1.bf16.msra.mxu0 %v3984
        %5034 = vmatprep.subr.bf16.mxu0 0
        %5035 = vmatpush1.bf16.msra.mxu0 %v3983
        %5036 = vmatprep.subr.bf16.mxu0 0
        %5037 = vmatpush1.bf16.msra.mxu0 %v3982
        %5038 = vmatprep.subr.bf16.mxu0 0
        %5039 = vmatpush1.bf16.msra.mxu0 %v3981
        %5040 = vmatprep.subr.bf16.mxu0 0
        %5041 = vmatpush1.bf16.msra.mxu0 %v3980
        %5042 = vmatprep.subr.bf16.mxu0 0
        %5043 = vmatpush1.bf16.msra.mxu0 %v3979
        %5044 = vmatprep.subr.bf16.mxu0 0
        %5045 = vmatpush1.bf16.msra.mxu0 %v3978
        %5046 = vmatprep.subr.bf16.mxu0 0
        %5047 = vmatpush1.bf16.msra.mxu0 %v3977
        %5048 = vmatprep.subr.bf16.mxu0 0
        %5049 = vmatpush2.bf16.msra.mxu0 %v3992
        %5050 = vmatprep.subr.bf16.mxu0 0
        %5051 = vmatpush2.bf16.msra.mxu0 %v3991
        %5052 = vmatprep.subr.bf16.mxu0 0
        %5053 = vmatpush2.bf16.msra.mxu0 %v3990
        %5054 = vmatprep.subr.bf16.mxu0 0
        %5055 = vmatpush2.bf16.msra.mxu0 %v3989
        %5056 = vmatprep.subr.bf16.mxu0 0
        %5057 = vmatpush2.bf16.msra.mxu0 %v3988
        %5058 = vmatprep.subr.bf16.mxu0 0
        %5059 = vmatpush2.bf16.msra.mxu0 %v3987
        %5060 = vmatprep.subr.bf16.mxu0 0
        %5061 = vmatpush2.bf16.msra.mxu0 %v3986
        %5062 = vmatprep.subr.bf16.mxu0 0
        %5063 = vmatpush2.bf16.msra.mxu0 %v3985
        %5064 = vmatprep.mubr.bf16.mxu0 %v4312
        %5065 = vmatmul.mubr.bf16.gmra.mxu0 %v4298
        %v5066 = vpop.f32.mrf.mxu0
        %v5067 = vadd.f32 %v5027, %v5066
        %v5068 = vpop.f32.mrf.mxu0
        %v5069 = vpop.f32.mrf.mxu0
        %v5070 = vpop.f32.mrf.mxu0
        %5071 = vdwg.mxu0
        %5072 = vmatprep.subr.bf16.mxu0 0
        %5073 = vmatpush1.bf16.msra.mxu0 %v4000
        %5074 = vmatprep.subr.bf16.mxu0 0
        %5075 = vmatpush1.bf16.msra.mxu0 %v3999
        %5076 = vmatprep.subr.bf16.mxu0 0
        %5077 = vmatpush1.bf16.msra.mxu0 %v3998
        %5078 = vmatprep.subr.bf16.mxu0 0
        %5079 = vmatpush1.bf16.msra.mxu0 %v3997
        %5080 = vmatprep.subr.bf16.mxu0 0
        %5081 = vmatpush1.bf16.msra.mxu0 %v3996
        %5082 = vmatprep.subr.bf16.mxu0 0
        %5083 = vmatpush1.bf16.msra.mxu0 %v3995
        %5084 = vmatprep.subr.bf16.mxu0 0
        %5085 = vmatpush1.bf16.msra.mxu0 %v3994
        %5086 = vmatprep.subr.bf16.mxu0 0
        %5087 = vmatpush1.bf16.msra.mxu0 %v3993
        %5088 = vmatprep.subr.bf16.mxu0 0
        %5089 = vmatpush2.bf16.msra.mxu0 %v4008
        %5090 = vmatprep.subr.bf16.mxu0 0
        %5091 = vmatpush2.bf16.msra.mxu0 %v4007
        %5092 = vmatprep.subr.bf16.mxu0 0
        %5093 = vmatpush2.bf16.msra.mxu0 %v4006
        %5094 = vmatprep.subr.bf16.mxu0 0
        %5095 = vmatpush2.bf16.msra.mxu0 %v4005
        %5096 = vmatprep.subr.bf16.mxu0 0
        %5097 = vmatpush2.bf16.msra.mxu0 %v4004
        %5098 = vmatprep.subr.bf16.mxu0 0
        %5099 = vmatpush2.bf16.msra.mxu0 %v4003
        %5100 = vmatprep.subr.bf16.mxu0 0
        %5101 = vmatpush2.bf16.msra.mxu0 %v4002
        %5102 = vmatprep.subr.bf16.mxu0 0
        %5103 = vmatpush2.bf16.msra.mxu0 %v4001
        %5104 = vmatprep.mubr.bf16.mxu0 %v4322
        %5105 = vmatmul.mubr.bf16.gmra.mxu0 %v4320
        %v5106 = vpop.f32.mrf.mxu0
        %v5107 = vadd.f32 %v5067, %v5106
        %v5108 = vpop.f32.mrf.mxu0
        %v5109 = vpop.f32.mrf.mxu0
        %v5110 = vpop.f32.mrf.mxu0
        %5111 = vdwg.mxu0
        %5112 = vmatprep.subr.bf16.mxu0 0
        %5113 = vmatpush1.bf16.msra.mxu0 %v4016
        %5114 = vmatprep.subr.bf16.mxu0 0
        %5115 = vmatpush1.bf16.msra.mxu0 %v4015
        %5116 = vmatprep.subr.bf16.mxu0 0
        %5117 = vmatpush1.bf16.msra.mxu0 %v4014
        %5118 = vmatprep.subr.bf16.mxu0 0
        %5119 = vmatpush1.bf16.msra.mxu0 %v4013
        %5120 = vmatprep.subr.bf16.mxu0 0
        %5121 = vmatpush1.bf16.msra.mxu0 %v4012
        %5122 = vmatprep.subr.bf16.mxu0 0
        %5123 = vmatpush1.bf16.msra.mxu0 %v4011
        %5124 = vmatprep.subr.bf16.mxu0 0
        %5125 = vmatpush1.bf16.msra.mxu0 %v4010
        %5126 = vmatprep.subr.bf16.mxu0 0
        %5127 = vmatpush1.bf16.msra.mxu0 %v4009
        %5128 = vmatprep.subr.bf16.mxu0 0
        %5129 = vmatpush2.bf16.msra.mxu0 %v4024
        %5130 = vmatprep.subr.bf16.mxu0 0
        %5131 = vmatpush2.bf16.msra.mxu0 %v4023
        %5132 = vmatprep.subr.bf16.mxu0 0
        %5133 = vmatpush2.bf16.msra.mxu0 %v4022
        %5134 = vmatprep.subr.bf16.mxu0 0
        %5135 = vmatpush2.bf16.msra.mxu0 %v4021
        %5136 = vmatprep.subr.bf16.mxu0 0
        %5137 = vmatpush2.bf16.msra.mxu0 %v4020
        %5138 = vmatprep.subr.bf16.mxu0 0
        %5139 = vmatpush2.bf16.msra.mxu0 %v4019
        %5140 = vmatprep.subr.bf16.mxu0 0
        %5141 = vmatpush2.bf16.msra.mxu0 %v4018
        %5142 = vmatprep.subr.bf16.mxu0 0
        %5143 = vmatpush2.bf16.msra.mxu0 %v4017
        %5144 = vmatprep.mubr.bf16.mxu0 %v4319
        %5145 = vmatmul.mubr.bf16.gmra.mxu0 %v4305
        %v5146 = vpop.f32.mrf.mxu0
        %v5147 = vadd.f32 %v5107, %v5146
        %v5148 = vpop.f32.mrf.mxu0
        %v5149 = vpop.f32.mrf.mxu0
        %v5150 = vpop.f32.mrf.mxu0
        %5151 = vdwg.mxu0
        %5152 = vmatprep.subr.bf16.mxu0 0
        %5153 = vmatpush1.bf16.msra.mxu0 %v4032
        %5154 = vmatprep.subr.bf16.mxu0 0
        %5155 = vmatpush1.bf16.msra.mxu0 %v4031
        %5156 = vmatprep.subr.bf16.mxu0 0
        %5157 = vmatpush1.bf16.msra.mxu0 %v4030
        %5158 = vmatprep.subr.bf16.mxu0 0
        %5159 = vmatpush1.bf16.msra.mxu0 %v4029
        %5160 = vmatprep.subr.bf16.mxu0 0
        %5161 = vmatpush1.bf16.msra.mxu0 %v4028
        %5162 = vmatprep.subr.bf16.mxu0 0
        %5163 = vmatpush1.bf16.msra.mxu0 %v4027
        %5164 = vmatprep.subr.bf16.mxu0 0
        %5165 = vmatpush1.bf16.msra.mxu0 %v4026
        %5166 = vmatprep.subr.bf16.mxu0 0
        %5167 = vmatpush1.bf16.msra.mxu0 %v4025
        %5168 = vmatprep.subr.bf16.mxu0 0
        %5169 = vmatpush2.bf16.msra.mxu0 %v4040
        %5170 = vmatprep.subr.bf16.mxu0 0
        %5171 = vmatpush2.bf16.msra.mxu0 %v4039
        %5172 = vmatprep.subr.bf16.mxu0 0
        %5173 = vmatpush2.bf16.msra.mxu0 %v4038
        %5174 = vmatprep.subr.bf16.mxu0 0
        %5175 = vmatpush2.bf16.msra.mxu0 %v4037
        %5176 = vmatprep.subr.bf16.mxu0 0
        %5177 = vmatpush2.bf16.msra.mxu0 %v4036
        %5178 = vmatprep.subr.bf16.mxu0 0
        %5179 = vmatpush2.bf16.msra.mxu0 %v4035
        %5180 = vmatprep.subr.bf16.mxu0 0
        %5181 = vmatpush2.bf16.msra.mxu0 %v4034
        %5182 = vmatprep.subr.bf16.mxu0 0
        %5183 = vmatpush2.bf16.msra.mxu0 %v4033
        %5184 = vmatprep.mubr.bf16.mxu0 %v4323
        %5185 = vmatmul.mubr.bf16.gmra.mxu0 %v4321
        %v5186 = vpop.f32.mrf.mxu0
        %v5187 = vadd.f32 %v5147, %v5186
        %v5188 = vpop.f32.mrf.mxu0
        %v5189 = vpop.f32.mrf.mxu0
        %v5190 = vpop.f32.mrf.mxu0
        %5191 = vdwg.mxu0
        %5192 = vmatprep.subr.bf16.mxu0 0
        %5193 = vmatpush1.bf16.msra.mxu0 %v4048
        %5194 = vmatprep.subr.bf16.mxu0 0
        %5195 = vmatpush1.bf16.msra.mxu0 %v4047
        %5196 = vmatprep.subr.bf16.mxu0 0
        %5197 = vmatpush1.bf16.msra.mxu0 %v4046
        %5198 = vmatprep.subr.bf16.mxu0 0
        %5199 = vmatpush1.bf16.msra.mxu0 %v4045
        %5200 = vmatprep.subr.bf16.mxu0 0
        %5201 = vmatpush1.bf16.msra.mxu0 %v4044
        %5202 = vmatprep.subr.bf16.mxu0 0
        %5203 = vmatpush1.bf16.msra.mxu0 %v4043
        %5204 = vmatprep.subr.bf16.mxu0 0
        %5205 = vmatpush1.bf16.msra.mxu0 %v4042
        %5206 = vmatprep.subr.bf16.mxu0 0
        %5207 = vmatpush1.bf16.msra.mxu0 %v4041
        %5208 = vmatprep.subr.bf16.mxu0 0
        %5209 = vmatpush2.bf16.msra.mxu0 %v4056
        %5210 = vmatprep.subr.bf16.mxu0 0
        %5211 = vmatpush2.bf16.msra.mxu0 %v4055
        %5212 = vmatprep.subr.bf16.mxu0 0
        %5213 = vmatpush2.bf16.msra.mxu0 %v4054
        %5214 = vmatprep.subr.bf16.mxu0 0
        %5215 = vmatpush2.bf16.msra.mxu0 %v4053
        %5216 = vmatprep.subr.bf16.mxu0 0
        %5217 = vmatpush2.bf16.msra.mxu0 %v4052
        %5218 = vmatprep.subr.bf16.mxu0 0
        %5219 = vmatpush2.bf16.msra.mxu0 %v4051
        %5220 = vmatprep.subr.bf16.mxu0 0
        %5221 = vmatpush2.bf16.msra.mxu0 %v4050
        %5222 = vmatprep.subr.bf16.mxu0 0
        %5223 = vmatpush2.bf16.msra.mxu0 %v4049
        %5224 = vmatprep.mubr.bf16.mxu0 %v4345
        %5225 = vmatmul.mubr.bf16.gmra.mxu0 %v4338
        %v5226 = vpop.f32.mrf.mxu0
        %v5227 = vadd.f32 %v5187, %v5226
        %v5228 = vpop.f32.mrf.mxu0
        %v5229 = vpop.f32.mrf.mxu0
        %v5230 = vpop.f32.mrf.mxu0
        %5231 = vdwg.mxu0
        %5232 = vmatprep.subr.bf16.mxu0 0
        %5233 = vmatpush1.bf16.msra.mxu0 %v4064
        %5234 = vmatprep.subr.bf16.mxu0 0
        %5235 = vmatpush1.bf16.msra.mxu0 %v4063
        %5236 = vmatprep.subr.bf16.mxu0 0
        %5237 = vmatpush1.bf16.msra.mxu0 %v4062
        %5238 = vmatprep.subr.bf16.mxu0 0
        %5239 = vmatpush1.bf16.msra.mxu0 %v4061
        %5240 = vmatprep.subr.bf16.mxu0 0
        %5241 = vmatpush1.bf16.msra.mxu0 %v4060
        %5242 = vmatprep.subr.bf16.mxu0 0
        %5243 = vmatpush1.bf16.msra.mxu0 %v4059
        %5244 = vmatprep.subr.bf16.mxu0 0
        %5245 = vmatpush1.bf16.msra.mxu0 %v4058
        %5246 = vmatprep.subr.bf16.mxu0 0
        %5247 = vmatpush1.bf16.msra.mxu0 %v4057
        %5248 = vmatprep.subr.bf16.mxu0 0
        %5249 = vmatpush2.bf16.msra.mxu0 %v4072
        %5250 = vmatprep.subr.bf16.mxu0 0
        %5251 = vmatpush2.bf16.msra.mxu0 %v4071
        %5252 = vmatprep.subr.bf16.mxu0 0
        %5253 = vmatpush2.bf16.msra.mxu0 %v4070
        %5254 = vmatprep.subr.bf16.mxu0 0
        %5255 = vmatpush2.bf16.msra.mxu0 %v4069
        %5256 = vmatprep.subr.bf16.mxu0 0
        %5257 = vmatpush2.bf16.msra.mxu0 %v4068
        %5258 = vmatprep.subr.bf16.mxu0 0
        %5259 = vmatpush2.bf16.msra.mxu0 %v4067
        %5260 = vmatprep.subr.bf16.mxu0 0
        %5261 = vmatpush2.bf16.msra.mxu0 %v4066
        %5262 = vmatprep.subr.bf16.mxu0 0
        %5263 = vmatpush2.bf16.msra.mxu0 %v4065
        %5264 = vmatprep.mubr.bf16.mxu0 %v4347
        %5265 = vmatmul.mubr.bf16.gmra.mxu0 %v4346
        %v5266 = vpop.f32.mrf.mxu0
        %v5267 = vadd.f32 %v5227, %v5266
        %v5268 = vpop.f32.mrf.mxu0
        %v5269 = vpop.f32.mrf.mxu0
        %v5270 = vpop.f32.mrf.mxu0
        %5271 = vdwg.mxu0
        %v5272 = vadd.f32 %v3538, %v5267
        %5273 = vst [vmem:[#allocation2] sm:$0x1] %v5272
        // Predicated region
        $region69: #{activation_maximization_forward.1} parent=51 // pred_check
          %p5274 = pneg %p2266
        $region70: #{activation_maximization_forward.1} parent=51 // pred_check_branch
          %5276 = sbr.rel (%p5274) target = $region72
        $region71: #{activation_maximization_forward.1} parent=51 // pred_region
          %s5277 = sld [smem:[#allocation4 + $0x2]]
          %v5278 = vstv %s5277
          %s5279 = sld [smem:[#allocation4 + $0x3]]
          %v5280 = vstv %s5279
          %v5281 = vmul.f32 %v5278, 0.15915494
          %v5282 = vfloor.f32 %v5281
          %v5283 = vsub.f32 %v5281, %v5282
          %v5284 = vld [vmem:[%s5] sm:$0x1]
          %v5285 = vmul.f32 %v5283, %v5284
          %v5286 = vand.u32 2147483647, %v5278
          %vm5287 = vcmp.le.f32.partialorder %v5286, 0.7853982
          %vm5288 = vcmp.lt.s32.totalorder %v5278, 0
          %v5289 = vand.u32 %v5278, 2139095040
          %v5290 = vshrl.u32 %v5289, 23
          %v5291 = vsub.s32 %v5290, 127
          %v5292 = vand.u32 2147483647, %v5278
          %v5293 = vand.u32 %v5292, 8388607
          %v5294 = vor.u32 %v5293, 8388608
          %v5295 = vsub.s32 0, %v5294
          %v5296 = vadd.s32 %v5291, 1
          %vm5297 = vcmp.gt.s32.totalorder %v5296, 0
          %v5298 = vsel %vm5297, %v5296, 0
          %v5299 = vshrl.u32 %v5298, 5
          %v5300 = vand.u32 %v5298, 31
          %v5301 = vsub.s32 32, %v5300
          %v5302 = vshrl.u32 683565275, %v5301
          %v5303 = vshll.u32 683565275, %v5300
          %v5304 = vshrl.u32 2475754826, %v5301
          %v5305 = vor.u32 %v5303, %v5304
          %v5306 = vshll.u32 2475754826, %v5300
          %v5307 = vshrl.u32 2131351028, %v5301
          %v5308 = vor.u32 %v5306, %v5307
          %v5309 = vshll.u32 2131351028, %v5300
          %v5310 = vshrl.u32 2102212464, %v5301
          %v5311 = vor.u32 %v5309, %v5310
          %v5312 = vshll.u32 2102212464, %v5300
          %v5313 = vshrl.u32 920167782, %v5301
          %v5314 = vor.u32 %v5312, %v5313
          %v5315 = vshll.u32 920167782, %v5300
          %v5316 = vshrl.u32 1326507024, %v5301
          %v5317 = vor.u32 %v5315, %v5316
          %vm5318 = vcmp.lt.s32.totalorder %v5299, 1
          %vm5319 = vcmp.lt.s32.totalorder %v5299, 2
          %vm5320 = vcmp.lt.s32.totalorder %v5299, 3
          %vm5321 = vcmp.lt.s32.totalorder %v5299, 4
          %v5322 = vsel %vm5318, %v5302, %v5305
          %v5323 = vsel %vm5321, %v5311, 2102212464
          %v5324 = vsel %vm5320, %v5308, %v5323
          %v5325 = vsel %vm5319, %v5322, %v5324
          %v5326 = vsel %vm5318, %v5305, %v5308
          %v5327 = vsel %vm5321, %v5314, 920167782
          %v5328 = vsel %vm5320, %v5311, %v5327
          %v5329 = vsel %vm5319, %v5326, %v5328
          %v5330 = vsel %vm5318, %v5308, %v5311
          %v5331 = vsel %vm5321, %v5317, 1326507024
          %v5332 = vsel %vm5320, %v5314, %v5331
          %v5333 = vsel %vm5319, %v5330, %v5332
          %v5334 = vshll.u32 %v5294, 8
          %v5335 = vmul.u32.u64.compose %v5334, %v5333
          %v5336 = vextract.low.u32 %v5335
          %v5337 = vextract.high.u32 %v5335
          %v5338 = vmul.u32.u64.compose %v5334, %v5329
          %v5339 = vextract.low.u32 %v5338
          %v5340 = vextract.high.u32 %v5338
          %v5341 = vmul.u32 %v5334, %v5325
          %v5342 = vadd.s32 %v5337, %v5339
          %vm5343 = vc.u32 %v5337, %v5339
          %v5344 = vadd.s32 %v5340, 1
          %v5345 = vsel %vm5343, %v5344, %v5340
          %v5346 = vadd.s32 %v5341, %v5345
          %v5347 = vadd.s32 %v5346, 536870912
          %v5348 = vshrl.u32 %v5347, 30
          %v5349 = vshll.u32 %v5348, 30
          %v5350 = vsub.s32 %v5346, %v5349
          %vm5351 = vcmp.lt.s32.totalorder %v5350, 0
          %v5352 = vsub.s32 0, %v5350
          %v5353 = vsel %vm5351, %v5352, %v5350
          %v5354 = vclz %v5353
          %v5355 = vsub.s32 %v5354, 2
          %vm5356 = vcmp.gt.s32.totalorder 0, %v5355
          %v5357 = vsel %vm5356, 0, %v5355
          %v5358 = vsub.s32 32, %v5357
          %v5359 = vshll.u32 %v5350, %v5357
          %v5360 = vshrl.u32 %v5342, %v5358
          %v5361 = vor.u32 %v5359, %v5360
          %v5362 = vsub.s32 4294967266, %v5357
          %v5363 = vadd.s32 %v5362, 127
          %v5364 = vshll.u32 %v5363, 23
          %v5365 = vor.u32 4788187, %v5364
          %v5366 = vand.u32 2147483647, %v5365
          %v5368 = vcvt.s32.f32 %v5361
          %v5369 = vmul.f32 %v5368, %v5366
          %v5370 = vxor.u32 %v5369, 2147483648
          %v5371 = vsel %vm5288, %v5370, %v5369
          %v5372 = vsub.s32 4, %v5348
          %v5373 = vsel %vm5288, %v5372, %v5348
          %v5374 = vsel %vm5287, %v5278, %v5371
          %v5375 = vsel %vm5287, 0, %v5373
          %v5376 = vcosq.f32.pop %v5374
          %v5377 = vsinq.f32.pop %v5374
          %vm5378 = vweird.f32 %v5278
          %v5379 = vand.u32 %v5375, 3
          %vm5380 = vcmp.lt.s32.totalorder %v5379, 2
          %vm5381 = vcmp.eq.s32.totalorder %v5379, 0
          %v5382 = vxor.u32 %v5377, 2147483648
          %v5383 = vsel %vm5381, %v5376, %v5382
          %vm5384 = vcmp.eq.s32.totalorder %v5379, 2
          %v5385 = vxor.u32 %v5376, 2147483648
          %v5386 = vsel %vm5384, %v5385, %v5377
          %v5387 = vsel %vm5380, %v5383, %v5386
          %v5388 = vsel %vm5378, nan, %v5387
          %v5389 = vld [vmem:[%s5 + $0x1] sm:$0x1]
          %v5390 = vmul.f32 %v5388, %v5389
          %v5391 = vadd.f32 %v5285, %v5390
          %v5392 = vand.u32 2147483647, %v5278
          %vm5393 = vcmp.le.f32.partialorder %v5392, 0.7853982
          %vm5394 = vcmp.lt.s32.totalorder %v5278, 0
          %v5395 = vand.u32 %v5278, 2139095040
          %v5396 = vshrl.u32 %v5395, 23
          %v5397 = vsub.s32 %v5396, 127
          %v5398 = vand.u32 2147483647, %v5278
          %v5399 = vand.u32 %v5398, 8388607
          %v5400 = vor.u32 %v5399, 8388608
          %v5401 = vsub.s32 0, %v5400
          %v5402 = vadd.s32 %v5397, 1
          %vm5403 = vcmp.gt.s32.totalorder %v5402, 0
          %v5404 = vsel %vm5403, %v5402, 0
          %v5405 = vshrl.u32 %v5404, 5
          %v5406 = vand.u32 %v5404, 31
          %v5407 = vsub.s32 32, %v5406
          %v5408 = vshrl.u32 683565275, %v5407
          %v5409 = vshll.u32 683565275, %v5406
          %v5410 = vshrl.u32 2475754826, %v5407
          %v5411 = vor.u32 %v5409, %v5410
          %v5412 = vshll.u32 2475754826, %v5406
          %v5413 = vshrl.u32 2131351028, %v5407
          %v5414 = vor.u32 %v5412, %v5413
          %v5415 = vshll.u32 2131351028, %v5406
          %v5416 = vshrl.u32 2102212464, %v5407
          %v5417 = vor.u32 %v5415, %v5416
          %v5418 = vshll.u32 2102212464, %v5406
          %v5419 = vshrl.u32 920167782, %v5407
          %v5420 = vor.u32 %v5418, %v5419
          %v5421 = vshll.u32 920167782, %v5406
          %v5422 = vshrl.u32 1326507024, %v5407
          %v5423 = vor.u32 %v5421, %v5422
          %vm5424 = vcmp.lt.s32.totalorder %v5405, 1
          %vm5425 = vcmp.lt.s32.totalorder %v5405, 2
          %vm5426 = vcmp.lt.s32.totalorder %v5405, 3
          %vm5427 = vcmp.lt.s32.totalorder %v5405, 4
          %v5428 = vsel %vm5424, %v5408, %v5411
          %v5429 = vsel %vm5427, %v5417, 2102212464
          %v5430 = vsel %vm5426, %v5414, %v5429
          %v5431 = vsel %vm5425, %v5428, %v5430
          %v5432 = vsel %vm5424, %v5411, %v5414
          %v5433 = vsel %vm5427, %v5420, 920167782
          %v5434 = vsel %vm5426, %v5417, %v5433
          %v5435 = vsel %vm5425, %v5432, %v5434
          %v5436 = vsel %vm5424, %v5414, %v5417
          %v5437 = vsel %vm5427, %v5423, 1326507024
          %v5438 = vsel %vm5426, %v5420, %v5437
          %v5439 = vsel %vm5425, %v5436, %v5438
          %v5440 = vshll.u32 %v5400, 8
          %v5441 = vmul.u32.u64.compose %v5440, %v5439
          %v5442 = vextract.low.u32 %v5441
          %v5443 = vextract.high.u32 %v5441
          %v5444 = vmul.u32.u64.compose %v5440, %v5435
          %v5445 = vextract.low.u32 %v5444
          %v5446 = vextract.high.u32 %v5444
          %v5447 = vmul.u32 %v5440, %v5431
          %v5448 = vadd.s32 %v5443, %v5445
          %vm5449 = vc.u32 %v5443, %v5445
          %v5450 = vadd.s32 %v5446, 1
          %v5451 = vsel %vm5449, %v5450, %v5446
          %v5452 = vadd.s32 %v5447, %v5451
          %v5453 = vadd.s32 %v5452, 536870912
          %v5454 = vshrl.u32 %v5453, 30
          %v5455 = vshll.u32 %v5454, 30
          %v5456 = vsub.s32 %v5452, %v5455
          %vm5457 = vcmp.lt.s32.totalorder %v5456, 0
          %v5458 = vsub.s32 0, %v5456
          %v5459 = vsel %vm5457, %v5458, %v5456
          %v5460 = vclz %v5459
          %v5461 = vsub.s32 %v5460, 2
          %vm5462 = vcmp.gt.s32.totalorder 0, %v5461
          %v5463 = vsel %vm5462, 0, %v5461
          %v5464 = vsub.s32 32, %v5463
          %v5465 = vshll.u32 %v5456, %v5463
          %v5466 = vshrl.u32 %v5448, %v5464
          %v5467 = vor.u32 %v5465, %v5466
          %v5468 = vsub.s32 4294967266, %v5463
          %v5469 = vadd.s32 %v5468, 127
          %v5470 = vshll.u32 %v5469, 23
          %v5471 = vor.u32 4788187, %v5470
          %v5472 = vand.u32 2147483647, %v5471
          %v5474 = vcvt.s32.f32 %v5467
          %v5475 = vmul.f32 %v5474, %v5472
          %v5476 = vxor.u32 %v5475, 2147483648
          %v5477 = vsel %vm5394, %v5476, %v5475
          %v5478 = vsub.s32 4, %v5454
          %v5479 = vsel %vm5394, %v5478, %v5454
          %v5480 = vsel %vm5393, %v5278, %v5477
          %v5481 = vsel %vm5393, 0, %v5479
          %v5482 = vcosq.f32.pop %v5480
          %v5483 = vsinq.f32.pop %v5480
          %vm5484 = vweird.f32 %v5278
          %v5485 = vadd.s32 %v5481, 3
          %v5486 = vand.u32 %v5485, 3
          %vm5487 = vcmp.lt.s32.totalorder %v5486, 2
          %vm5488 = vcmp.eq.s32.totalorder %v5486, 0
          %v5489 = vxor.u32 %v5483, 2147483648
          %v5490 = vsel %vm5488, %v5482, %v5489
          %vm5491 = vcmp.eq.s32.totalorder %v5486, 2
          %v5492 = vxor.u32 %v5482, 2147483648
          %v5493 = vsel %vm5491, %v5492, %v5483
          %v5494 = vsel %vm5487, %v5490, %v5493
          %v5495 = vsel %vm5484, nan, %v5494
          %v5496 = vld [vmem:[%s5 + $0x2] sm:$0x1]
          %v5497 = vmul.f32 %v5495, %v5496
          %v5498 = vadd.f32 %v5391, %v5497
          %v5499 = vand.u32 2147483647, %v5280
          %vm5500 = vcmp.le.f32.partialorder %v5499, 0.7853982
          %vm5501 = vcmp.lt.s32.totalorder %v5280, 0
          %v5502 = vand.u32 %v5280, 2139095040
          %v5503 = vshrl.u32 %v5502, 23
          %v5504 = vsub.s32 %v5503, 127
          %v5505 = vand.u32 2147483647, %v5280
          %v5506 = vand.u32 %v5505, 8388607
          %v5507 = vor.u32 %v5506, 8388608
          %v5508 = vsub.s32 0, %v5507
          %v5509 = vadd.s32 %v5504, 1
          %vm5510 = vcmp.gt.s32.totalorder %v5509, 0
          %v5511 = vsel %vm5510, %v5509, 0
          %v5512 = vshrl.u32 %v5511, 5
          %v5513 = vand.u32 %v5511, 31
          %v5514 = vsub.s32 32, %v5513
          %v5515 = vshrl.u32 683565275, %v5514
          %v5516 = vshll.u32 683565275, %v5513
          %v5517 = vshrl.u32 2475754826, %v5514
          %v5518 = vor.u32 %v5516, %v5517
          %v5519 = vshll.u32 2475754826, %v5513
          %v5520 = vshrl.u32 2131351028, %v5514
          %v5521 = vor.u32 %v5519, %v5520
          %v5522 = vshll.u32 2131351028, %v5513
          %v5523 = vshrl.u32 2102212464, %v5514
          %v5524 = vor.u32 %v5522, %v5523
          %v5525 = vshll.u32 2102212464, %v5513
          %v5526 = vshrl.u32 920167782, %v5514
          %v5527 = vor.u32 %v5525, %v5526
          %v5528 = vshll.u32 920167782, %v5513
          %v5529 = vshrl.u32 1326507024, %v5514
          %v5530 = vor.u32 %v5528, %v5529
          %vm5531 = vcmp.lt.s32.totalorder %v5512, 1
          %vm5532 = vcmp.lt.s32.totalorder %v5512, 2
          %vm5533 = vcmp.lt.s32.totalorder %v5512, 3
          %vm5534 = vcmp.lt.s32.totalorder %v5512, 4
          %v5535 = vsel %vm5531, %v5515, %v5518
          %v5536 = vsel %vm5534, %v5524, 2102212464
          %v5537 = vsel %vm5533, %v5521, %v5536
          %v5538 = vsel %vm5532, %v5535, %v5537
          %v5539 = vsel %vm5531, %v5518, %v5521
          %v5540 = vsel %vm5534, %v5527, 920167782
          %v5541 = vsel %vm5533, %v5524, %v5540
          %v5542 = vsel %vm5532, %v5539, %v5541
          %v5543 = vsel %vm5531, %v5521, %v5524
          %v5544 = vsel %vm5534, %v5530, 1326507024
          %v5545 = vsel %vm5533, %v5527, %v5544
          %v5546 = vsel %vm5532, %v5543, %v5545
          %v5547 = vshll.u32 %v5507, 8
          %v5548 = vmul.u32.u64.compose %v5547, %v5546
          %v5549 = vextract.low.u32 %v5548
          %v5550 = vextract.high.u32 %v5548
          %v5551 = vmul.u32.u64.compose %v5547, %v5542
          %v5552 = vextract.low.u32 %v5551
          %v5553 = vextract.high.u32 %v5551
          %v5554 = vmul.u32 %v5547, %v5538
          %v5555 = vadd.s32 %v5550, %v5552
          %vm5556 = vc.u32 %v5550, %v5552
          %v5557 = vadd.s32 %v5553, 1
          %v5558 = vsel %vm5556, %v5557, %v5553
          %v5559 = vadd.s32 %v5554, %v5558
          %v5560 = vadd.s32 %v5559, 536870912
          %v5561 = vshrl.u32 %v5560, 30
          %v5562 = vshll.u32 %v5561, 30
          %v5563 = vsub.s32 %v5559, %v5562
          %vm5564 = vcmp.lt.s32.totalorder %v5563, 0
          %v5565 = vsub.s32 0, %v5563
          %v5566 = vsel %vm5564, %v5565, %v5563
          %v5567 = vclz %v5566
          %v5568 = vsub.s32 %v5567, 2
          %vm5569 = vcmp.gt.s32.totalorder 0, %v5568
          %v5570 = vsel %vm5569, 0, %v5568
          %v5571 = vsub.s32 32, %v5570
          %v5572 = vshll.u32 %v5563, %v5570
          %v5573 = vshrl.u32 %v5555, %v5571
          %v5574 = vor.u32 %v5572, %v5573
          %v5575 = vsub.s32 4294967266, %v5570
          %v5576 = vadd.s32 %v5575, 127
          %v5577 = vshll.u32 %v5576, 23
          %v5578 = vor.u32 4788187, %v5577
          %v5579 = vand.u32 2147483647, %v5578
          %v5581 = vcvt.s32.f32 %v5574
          %v5582 = vmul.f32 %v5581, %v5579
          %v5583 = vxor.u32 %v5582, 2147483648
          %v5584 = vsel %vm5501, %v5583, %v5582
          %v5585 = vsub.s32 4, %v5561
          %v5586 = vsel %vm5501, %v5585, %v5561
          %v5587 = vsel %vm5500, %v5280, %v5584
          %v5588 = vsel %vm5500, 0, %v5586
          %v5589 = vcosq.f32.pop %v5587
          %v5590 = vsinq.f32.pop %v5587
          %vm5591 = vweird.f32 %v5280
          %v5592 = vand.u32 %v5588, 3
          %vm5593 = vcmp.lt.s32.totalorder %v5592, 2
          %vm5594 = vcmp.eq.s32.totalorder %v5592, 0
          %v5595 = vxor.u32 %v5590, 2147483648
          %v5596 = vsel %vm5594, %v5589, %v5595
          %vm5597 = vcmp.eq.s32.totalorder %v5592, 2
          %v5598 = vxor.u32 %v5589, 2147483648
          %v5599 = vsel %vm5597, %v5598, %v5590
          %v5600 = vsel %vm5593, %v5596, %v5599
          %v5601 = vsel %vm5591, nan, %v5600
          %v5602 = vld [vmem:[%s5 + $0x3] sm:$0x1]
          %v5603 = vmul.f32 %v5601, %v5602
          %v5604 = vadd.f32 %v5498, %v5603
          %v5605 = vand.u32 2147483647, %v5280
          %vm5606 = vcmp.le.f32.partialorder %v5605, 0.7853982
          %vm5607 = vcmp.lt.s32.totalorder %v5280, 0
          %v5608 = vand.u32 %v5280, 2139095040
          %v5609 = vshrl.u32 %v5608, 23
          %v5610 = vsub.s32 %v5609, 127
          %v5611 = vand.u32 2147483647, %v5280
          %v5612 = vand.u32 %v5611, 8388607
          %v5613 = vor.u32 %v5612, 8388608
          %v5614 = vsub.s32 0, %v5613
          %v5615 = vadd.s32 %v5610, 1
          %vm5616 = vcmp.gt.s32.totalorder %v5615, 0
          %v5617 = vsel %vm5616, %v5615, 0
          %v5618 = vshrl.u32 %v5617, 5
          %v5619 = vand.u32 %v5617, 31
          %v5620 = vsub.s32 32, %v5619
          %v5621 = vshrl.u32 683565275, %v5620
          %v5622 = vshll.u32 683565275, %v5619
          %v5623 = vshrl.u32 2475754826, %v5620
          %v5624 = vor.u32 %v5622, %v5623
          %v5625 = vshll.u32 2475754826, %v5619
          %v5626 = vshrl.u32 2131351028, %v5620
          %v5627 = vor.u32 %v5625, %v5626
          %v5628 = vshll.u32 2131351028, %v5619
          %v5629 = vshrl.u32 2102212464, %v5620
          %v5630 = vor.u32 %v5628, %v5629
          %v5631 = vshll.u32 2102212464, %v5619
          %v5632 = vshrl.u32 920167782, %v5620
          %v5633 = vor.u32 %v5631, %v5632
          %v5634 = vshll.u32 920167782, %v5619
          %v5635 = vshrl.u32 1326507024, %v5620
          %v5636 = vor.u32 %v5634, %v5635
          %vm5637 = vcmp.lt.s32.totalorder %v5618, 1
          %vm5638 = vcmp.lt.s32.totalorder %v5618, 2
          %vm5639 = vcmp.lt.s32.totalorder %v5618, 3
          %vm5640 = vcmp.lt.s32.totalorder %v5618, 4
          %v5641 = vsel %vm5637, %v5621, %v5624
          %v5642 = vsel %vm5640, %v5630, 2102212464
          %v5643 = vsel %vm5639, %v5627, %v5642
          %v5644 = vsel %vm5638, %v5641, %v5643
          %v5645 = vsel %vm5637, %v5624, %v5627
          %v5646 = vsel %vm5640, %v5633, 920167782
          %v5647 = vsel %vm5639, %v5630, %v5646
          %v5648 = vsel %vm5638, %v5645, %v5647
          %v5649 = vsel %vm5637, %v5627, %v5630
          %v5650 = vsel %vm5640, %v5636, 1326507024
          %v5651 = vsel %vm5639, %v5633, %v5650
          %v5652 = vsel %vm5638, %v5649, %v5651
          %v5653 = vshll.u32 %v5613, 8
          %v5654 = vmul.u32.u64.compose %v5653, %v5652
          %v5655 = vextract.low.u32 %v5654
          %v5656 = vextract.high.u32 %v5654
          %v5657 = vmul.u32.u64.compose %v5653, %v5648
          %v5658 = vextract.low.u32 %v5657
          %v5659 = vextract.high.u32 %v5657
          %v5660 = vmul.u32 %v5653, %v5644
          %v5661 = vadd.s32 %v5656, %v5658
          %vm5662 = vc.u32 %v5656, %v5658
          %v5663 = vadd.s32 %v5659, 1
          %v5664 = vsel %vm5662, %v5663, %v5659
          %v5665 = vadd.s32 %v5660, %v5664
          %v5666 = vadd.s32 %v5665, 536870912
          %v5667 = vshrl.u32 %v5666, 30
          %v5668 = vshll.u32 %v5667, 30
          %v5669 = vsub.s32 %v5665, %v5668
          %vm5670 = vcmp.lt.s32.totalorder %v5669, 0
          %v5671 = vsub.s32 0, %v5669
          %v5672 = vsel %vm5670, %v5671, %v5669
          %v5673 = vclz %v5672
          %v5674 = vsub.s32 %v5673, 2
          %vm5675 = vcmp.gt.s32.totalorder 0, %v5674
          %v5676 = vsel %vm5675, 0, %v5674
          %v5677 = vsub.s32 32, %v5676
          %v5678 = vshll.u32 %v5669, %v5676
          %v5679 = vshrl.u32 %v5661, %v5677
          %v5680 = vor.u32 %v5678, %v5679
          %v5681 = vsub.s32 4294967266, %v5676
          %v5682 = vadd.s32 %v5681, 127
          %v5683 = vshll.u32 %v5682, 23
          %v5684 = vor.u32 4788187, %v5683
          %v5685 = vand.u32 2147483647, %v5684
          %v5687 = vcvt.s32.f32 %v5680
          %v5688 = vmul.f32 %v5687, %v5685
          %v5689 = vxor.u32 %v5688, 2147483648
          %v5690 = vsel %vm5607, %v5689, %v5688
          %v5691 = vsub.s32 4, %v5667
          %v5692 = vsel %vm5607, %v5691, %v5667
          %v5693 = vsel %vm5606, %v5280, %v5690
          %v5694 = vsel %vm5606, 0, %v5692
          %v5695 = vcosq.f32.pop %v5693
          %v5696 = vsinq.f32.pop %v5693
          %vm5697 = vweird.f32 %v5280
          %v5698 = vadd.s32 %v5694, 3
          %v5699 = vand.u32 %v5698, 3
          %vm5700 = vcmp.lt.s32.totalorder %v5699, 2
          %vm5701 = vcmp.eq.s32.totalorder %v5699, 0
          %v5702 = vxor.u32 %v5696, 2147483648
          %v5703 = vsel %vm5701, %v5695, %v5702
          %vm5704 = vcmp.eq.s32.totalorder %v5699, 2
          %v5705 = vxor.u32 %v5695, 2147483648
          %v5706 = vsel %vm5704, %v5705, %v5696
          %v5707 = vsel %vm5700, %v5703, %v5706
          %v5708 = vsel %vm5697, nan, %v5707
          %v5709 = vld [vmem:[%s5 + $0x4] sm:$0x1]
          %v5710 = vmul.f32 %v5708, %v5709
          %v5711 = vadd.f32 %v5604, %v5710
          %v5712 = vld [vmem:[#allocation2] sm:$0x1]
          %v5713 = vld [vmem:[%s4] sm:$0x1]
          %v5714 = vmul.f32 %v5712, %v5713
          %v5715 = vadd.f32 %v5714, %v5711
          %v5716 = vld [vmem:[%s6] sm:$0x1]
          %v5717 = vadd.f32 %v5715, %v5716
          %5718 = vst [vmem:[#allocation7] sm:$0x1] %v5717
          %v5719 = vld [vmem:[%s7] sm:$0x1]
          %v5720 = vmul.f32 %v5717, %v5719
          %vm5721 = vcmask 1040384
          %v5722 = vsel %vm5721, %v5720, 0.0
          %5723 = vadd.xlane.f32.xlu0 %v5722
          %v5724 = vpop.xlane.xlu0 %5723
          %5725 = vst [vmem:[#allocation8] sm:$0x1] %v5724
        $region72: #{activation_maximization_forward.1} parent=51 // pred_fallthru
          _
        // Predicated region
        $region73: #{activation_maximization_forward.1} parent=51 // pred_check
          %p5726 = pneg %p210
        $region74: #{activation_maximization_forward.1} parent=51 // pred_check_branch
          %5728 = sbr.rel (%p5726) target = $region76
        $region75: #{activation_maximization_forward.1} parent=51 // pred_region
          %s5730 = ssub.s32 16, 16
          %5731 = vsyncadd [#allocation5], %s5730
          %s5733 = sshll.u32 [#allocation7], 4
          %s5734 = int_to_ptr.vmem [resolvable:$true] %s5733
          %5736 = dma.vmem_to_hbm [thread:$0]  %s5734, 16, %s8, [#allocation5]
        $region76: #{activation_maximization_forward.1} parent=51 // pred_fallthru
          _
        // Predicated region
        $region77: #{activation_maximization_forward.1} parent=51 // pred_check
          %p5737 = pneg %p231
        $region78: #{activation_maximization_forward.1} parent=51 // pred_check_branch
          %5739 = sbr.rel (%p5737) target = $region80
        $region79: #{activation_maximization_forward.1} parent=51 // pred_region
          %s5741 = ssub.s32 16, 16
          %5742 = vsyncadd [#allocation9], %s5741
          %s5744 = sshll.u32 [#allocation8], 4
          %s5745 = int_to_ptr.vmem [resolvable:$true] %s5744
          %5747 = dma.vmem_to_hbm [thread:$0]  %s5745, 16, %s9, [#allocation9]
        $region80: #{activation_maximization_forward.1} parent=51 // pred_fallthru
          _
        // Predicated region
        $region81: #{activation_maximization_forward.1} parent=51 // pred_check
          %p5748 = pneg %p210
        $region82: #{activation_maximization_forward.1} parent=51 // pred_check_branch
          %5750 = sbr.rel (%p5748) target = $region84
        $region83: #{activation_maximization_forward.1} parent=51 // pred_region
          %5751 = dma.done [#allocation5], 16
        $region84: #{activation_maximization_forward.1} parent=51 // pred_fallthru
          _
        // Predicated region
        $region85: #{activation_maximization_forward.1} parent=51 // pred_check
          %p5752 = pneg %p231
        $region86: #{activation_maximization_forward.1} parent=51 // pred_check_branch
          %5754 = sbr.rel (%p5752) target = $region88
        $region87: #{activation_maximization_forward.1} parent=51 // pred_region
          %5755 = dma.done [#allocation9], 16
        $region88: #{activation_maximization_forward.1} parent=51 // pred_fallthru
          _
      $region52: #{activation_maximization_forward.1} parent=5 // pred_fallthru
        _
      %p5756 = scmp.le.s32.totalorder 2, %s19
      // Predicated region
      $region89: #{activation_maximization_forward.1} parent=5 // pred_check
        %p5757 = pneg %p5756
      $region90: #{activation_maximization_forward.1} parent=5 // pred_check_branch
        %5759 = sbr.rel (%p5757) target = $region92
      $region91: #{activation_maximization_forward.1} parent=5 // pred_region
        %s5760 = ssub.s32 %s19, 2
      $region92: #{activation_maximization_forward.1} parent=5 // pred_fallthru
        _
    $region6: #{activation_maximization_forward.1} parent=1 // loop_footer
      %s23 = sadd.s32 1, %s19
    $region7: #{activation_maximization_forward.1} parent=1 // loop_footer_branch
      %18 = sbr.rel target = $region3
    $region8: #{activation_maximization_forward.1} parent=1 // loop_exit
      _
    %5761 = vsyncpa [#allocation5], 1
    %s5762 = scalar_lea.sflag [#allocation5], 1
    %5763 = vsyncpa %s5762, 1
    %5764 = vsyncpa [#allocation9], 1
    %5765 = vsyncpa [#allocation6], 1
    %s5766 = scalar_lea.sflag [#allocation6], 1
    %5767 = vsyncpa %s5766, 1

</llo_original>
